<compile_context>
chip_gen: v7x
topology: tpu7x:2x2x1
jax: 0.10.0
libtpu: 0.0.40
codegen_flags: <defaults>
</compile_context>

<pallas_src>
import functools

import jax
import jax.numpy as jnp
from jax.experimental import pallas as pl
from jax.experimental.pallas import tpu as pltpu


def _round_up(x, m):
    return ((x + m - 1) // m) * m


# ---------------------------------------------------------------------------
# Fused kernel: one grid step == one batch sample, everything VMEM-resident.
# ---------------------------------------------------------------------------
def _bottleneck_kernel(x_ref, row_ref, col_ref,
                       w1_ref, b1_ref, w2_ref, b2_ref, w3_ref, b3_ref,
                       fc1t_ref, fc2_ref, wsa_ref,
                       o_ref,
                       y1p_ref, poolp_ref,
                       *, h, w, pad):
    f32 = jnp.float32
    hw = h * w

    x = x_ref[0]                                   # (C_in, HW)   residual too
    row = row_ref[...]                             # (1, HW) int32: p // W
    col = col_ref[...]                             # (1, HW) int32: p %  W

    def valid(oy, ox):
        # output position p is valid for tap offset (oy, ox) iff the sampled
        # input position (row+oy, col+ox) lies inside the (implicitly
        # zero-padded) HxW image.
        return ((row >= -oy) & (row < h - oy) &
                (col >= -ox) & (col < w - ox))

    # --- conv1 (1x1) + folded BN + ReLU ------------------------------------
    y1 = jnp.dot(w1_ref[...], x, preferred_element_type=f32) + b1_ref[...]
    y1 = jnp.maximum(y1, 0.0)                      # (planes, HW)

    # --- conv2 (3x3, pad=1, stride=1) + folded BN + ReLU --------------------
    # 9 shifted, masked matmuls on a lane-padded copy of y1 kept in VMEM
    # scratch (no HBM im2col, no wraparound thanks to the validity mask).
    y1p_ref[...] = jnp.zeros(y1p_ref.shape, f32)
    y1p_ref[:, pad:pad + hw] = y1
    acc2 = jnp.zeros_like(y1)
    for dy in range(3):
        for dx in range(3):
            oy, ox = dy - 1, dx - 1
            lo = pad + oy * w + ox
            tap = jnp.where(valid(oy, ox), y1p_ref[:, lo:lo + hw], 0.0)
            acc2 = acc2 + jnp.dot(w2_ref[dy * 3 + dx], tap,
                                  preferred_element_type=f32)
    y2 = jnp.maximum(acc2 + b2_ref[...], 0.0)      # (planes, HW)

    # --- conv3 (1x1) + folded BN --------------------------------------------
    u = jnp.dot(w3_ref[...], y2, preferred_element_type=f32) + b3_ref[...]
    # u: (C4, HW)

    # --- CBAM channel attention ---------------------------------------------
    avg_p = jnp.sum(u, axis=1, keepdims=True) * (1.0 / hw)     # (C4, 1)
    max_p = jnp.max(u, axis=1, keepdims=True)                   # (C4, 1)
    fc1t = fc1t_ref[...]                                        # (C4, Cr) = fc1^T
    fc2w = fc2_ref[...]                                         # (C4, Cr)

    def mlp(p):                                                 # (C4,1) -> (C4,1)
        hid = jnp.maximum(jnp.sum(fc1t * p, axis=0, keepdims=True), 0.0)  # (1, Cr)
        return jnp.sum(fc2w * hid, axis=1, keepdims=True)                  # (C4, 1)

    logits = mlp(avg_p) + mlp(max_p)
    ca = 1.0 / (1.0 + jnp.exp(-logits))                         # sigmoid (C4, 1)
    v = u * ca                                                  # (C4, HW)

    # --- CBAM spatial attention (7x7, pad=3) + gate + residual + ReLU -------
    c4 = v.shape[0]
    ch_mean = jnp.sum(v, axis=0, keepdims=True) * (1.0 / c4)    # (1, HW)
    ch_max = jnp.max(v, axis=0, keepdims=True)                  # (1, HW)
    poolp_ref[...] = jnp.zeros(poolp_ref.shape, f32)
    poolp_ref[0:1, pad:pad + hw] = ch_mean
    poolp_ref[1:2, pad:pad + hw] = ch_max

    wsa = wsa_ref[...]                                          # (2, 49)
    acc_sa = jnp.zeros((2, hw), f32)
    for dy in range(7):
        for dx in range(7):
            oy, ox = dy - 3, dx - 3
            lo = pad + oy * w + ox
            k = dy * 7 + dx
            contrib = wsa[:, k:k + 1] * poolp_ref[:, lo:lo + hw]   # (2, HW)
            acc_sa = acc_sa + jnp.where(valid(oy, ox), contrib, 0.0)
    sa_logit = acc_sa[0:1, :] + acc_sa[1:2, :]                  # (1, HW)
    sa = 1.0 / (1.0 + jnp.exp(-sa_logit))                       # sigmoid

    o_ref[0] = jnp.maximum(v * sa + x, 0.0)                     # (C4, HW)


# ---------------------------------------------------------------------------
# Wrapper: BN folding (tiny weights) + free metadata reshapes only.
# ---------------------------------------------------------------------------
def _fold_bn(gamma, beta, rmean, rvar, eps=1e-5):
    s = gamma / jnp.sqrt(rvar + eps)
    b = beta - rmean * s
    return s.reshape(-1, 1), b.reshape(-1, 1)


def bottleneck_forward(x, params, stride=1):
    """x: (N, C_in, H, W) float32 -> (N, 4*planes, H, W) float32."""
    n, c_in, h, w = x.shape
    w1, w2, w3 = params["conv1"], params["conv2"], params["conv3"]
    planes = w1.shape[0]
    c4 = w3.shape[0]
    c_r = params["fc1"].shape[0]
    hw = h * w

    # downsample=None: residual = x, so shapes must already match.
    assert stride == 1 and c_in == c4, "downsample=None requires matching shapes"

    s1, b1 = _fold_bn(*params["bn1"])
    s2, b2 = _fold_bn(*params["bn2"])
    s3, b3 = _fold_bn(*params["bn3"])

    # Fold BN scale into the conv weights (weights are <= 16x36 elements).
    w1f = w1.reshape(planes, c_in) * s1                                   # (planes, C_in)
    w2f = (w2 * s2[:, :, None, None]).transpose(2, 3, 0, 1)               # (3,3,out,in)
    w2f = w2f.reshape(9, planes, planes)                                  # tap-major
    w3f = w3.reshape(c4, planes) * s3                                     # (C4, planes)

    fc1t = params["fc1"].reshape(c_r, c4).T                               # (C4, Cr)
    fc2w = params["fc2"].reshape(c4, c_r)                                 # (C4, Cr)
    wsa = params["sa"].reshape(2, 49)                                     # (2, 7*7)

    # Precomputed (row, col) of each flattened spatial position (used for the
    # conv validity masks; avoids in-kernel integer div/mod).
    row_ids = (jnp.arange(hw, dtype=jnp.int32) // w).reshape(1, hw)
    col_ids = (jnp.arange(hw, dtype=jnp.int32) % w).reshape(1, hw)

    # Free metadata reshape: x[n] in NCHW is already channel-major (C, H*W).
    x_flat = x.reshape(n, c_in, hw)

    # Lane-aligned halo large enough for the 7x7 conv (3*W + 3).
    pad = _round_up(3 * w + 3, 128)

    kernel = functools.partial(_bottleneck_kernel, h=h, w=w, pad=pad)

    out = pl.pallas_call(
        kernel,
        out_shape=jax.ShapeDtypeStruct((n, c4, hw), jnp.float32),
        grid_spec=pltpu.PrefetchScalarGridSpec(
            num_scalar_prefetch=0,
            grid=(n,),
            in_specs=[
                pl.BlockSpec((1, c_in, hw), lambda i: (i, 0, 0)),        # x
                pl.BlockSpec((1, hw), lambda i: (0, 0)),                 # row ids
                pl.BlockSpec((1, hw), lambda i: (0, 0)),                 # col ids
                pl.BlockSpec((planes, c_in), lambda i: (0, 0)),          # w1 (BN-folded)
                pl.BlockSpec((planes, 1), lambda i: (0, 0)),             # b1
                pl.BlockSpec((9, planes, planes), lambda i: (0, 0, 0)),  # w2 taps
                pl.BlockSpec((planes, 1), lambda i: (0, 0)),             # b2
                pl.BlockSpec((c4, planes), lambda i: (0, 0)),            # w3 (BN-folded)
                pl.BlockSpec((c4, 1), lambda i: (0, 0)),                 # b3
                pl.BlockSpec((c4, c_r), lambda i: (0, 0)),               # fc1^T
                pl.BlockSpec((c4, c_r), lambda i: (0, 0)),               # fc2
                pl.BlockSpec((2, 49), lambda i: (0, 0)),                 # 7x7 sa weight
            ],
            out_specs=pl.BlockSpec((1, c4, hw), lambda i: (i, 0, 0)),
            scratch_shapes=[
                pltpu.VMEM((planes, hw + 2 * pad), jnp.float32),         # padded y1
                pltpu.VMEM((2, hw + 2 * pad), jnp.float32),              # padded [mean;max]
            ],
        ),
        compiler_params=pltpu.CompilerParams(
            dimension_semantics=("parallel",),
        ),
    )(x_flat, row_ids, col_ids, w1f, b1, w2f, b2, w3f, b3, fc1t, fc2w, wsa)

    return out.reshape(n, c4, h, w)


# ---------------------------------------------------------------------------
# Pure-JAX reference (PyTorch eval-mode semantics) for verification
# ---------------------------------------------------------------------------
def _conv_ref(x, w, stride=1, padding=0):
    return jax.lax.conv_general_dilated(
        x, w, (stride, stride), [(padding, padding), (padding, padding)],
        dimension_numbers=("NCHW", "OIHW", "NCHW"),
        precision=jax.lax.Precision.HIGHEST)


def _bn_ref(x, gamma, beta, rmean, rvar, eps=1e-5):
    s = gamma / jnp.sqrt(rvar + eps)
    b = beta - rmean * s
    return x * s[None, :, None, None] + b[None, :, None, None]


def bottleneck_reference(x, params, stride=1):
    out = jax.nn.relu(_bn_ref(_conv_ref(x, params["conv1"]), *params["bn1"]))
    out = jax.nn.relu(_bn_ref(_conv_ref(out, params["conv2"], stride, 1),
                              *params["bn2"]))
    out = _bn_ref(_conv_ref(out, params["conv3"]), *params["bn3"])

    avg = jnp.mean(out, axis=(2, 3), keepdims=True)
    mx = jnp.max(out, axis=(2, 3), keepdims=True)

    def ca_mlp(p):
        return _conv_ref(jax.nn.relu(_conv_ref(p, params["fc1"])), params["fc2"])

    ca = jax.nn.sigmoid(ca_mlp(avg) + ca_mlp(mx))
    out = ca * out

    sa_in = jnp.concatenate([jnp.mean(out, axis=1, keepdims=True),
                             jnp.max(out, axis=1, keepdims=True)], axis=1)
    sa = jax.nn.sigmoid(_conv_ref(sa_in, params["sa"], 1, 3))
    out = sa * out

    out = out + x          # downsample is None
    return jax.nn.relu(out)


# ---------------------------------------------------------------------------
if __name__ == "__main__":
    # Small CBAM Bottleneck: inplanes = planes*4 so downsample=None is valid.
    N, inplanes, H, W = 2, 16, 16, 16
    planes = 4
    c4 = planes * 4          # 16
    c_r = c4 // 16           # 1  (ChannelAttention reduction)

    key = jax.random.PRNGKey(0)
    ks = jax.random.split(key, 10)

    def w_init(k, shape, fan_in):
        return jax.random.normal(k, shape, jnp.float32) * (2.0 / fan_in) ** 0.5

    def bn_init(k, c):
        k1, k2, k3, k4 = jax.random.split(k, 4)
        gamma = 1.0 + 0.1 * jax.random.normal(k1, (c,), jnp.float32)
        beta = 0.1 * jax.random.normal(k2, (c,), jnp.float32)
        rmean = 0.1 * jax.random.normal(k3, (c,), jnp.float32)
        rvar = jax.random.uniform(k4, (c,), jnp.float32, minval=0.5, maxval=1.5)
        return gamma, beta, rmean, rvar

    params = {
        "conv1": w_init(ks[0], (planes, inplanes, 1, 1), inplanes),
        "bn1": bn_init(ks[1], planes),
        "conv2": w_init(ks[2], (planes, planes, 3, 3), planes * 9),
        "bn2": bn_init(ks[3], planes),
        "conv3": w_init(ks[4], (c4, planes, 1, 1), planes),
        "bn3": bn_init(ks[5], c4),
        "fc1": w_init(ks[6], (c_r, c4, 1, 1), c4),
        "fc2": w_init(ks[7], (c4, c_r, 1, 1), c_r),
        "sa": w_init(ks[8], (1, 2, 7, 7), 2 * 49),
    }

    x = jax.random.normal(ks[9], (N, inplanes, H, W), jnp.float32)

    fwd = jax.jit(functools.partial(bottleneck_forward, stride=1))
    out = jax.block_until_ready(fwd(x, params))

    ref = bottleneck_reference(x, params, stride=1)
    assert out.shape == (N, c4, H, W)
    max_err = float(jnp.max(jnp.abs(out - ref)))
    assert jnp.allclose(out, ref, atol=1e-3, rtol=1e-3), max_err

    print("KERNEL_OK")
</pallas_src>

<mosaic_0001>
module attributes {stable_mosaic.version = 11 : i64} {
  func.func @_bottleneck_kernel(%arg0: i32, %arg1: memref<1x16x256xf32, #tpu.memory_space<vmem>>, %arg2: memref<1x256xi32, #tpu.memory_space<vmem>>, %arg3: memref<1x256xi32, #tpu.memory_space<vmem>>, %arg4: memref<4x16xf32, #tpu.memory_space<vmem>>, %arg5: memref<4x1xf32, #tpu.memory_space<vmem>>, %arg6: memref<9x4x4xf32, #tpu.memory_space<vmem>>, %arg7: memref<4x1xf32, #tpu.memory_space<vmem>>, %arg8: memref<16x4xf32, #tpu.memory_space<vmem>>, %arg9: memref<16x1xf32, #tpu.memory_space<vmem>>, %arg10: memref<16x1xf32, #tpu.memory_space<vmem>>, %arg11: memref<16x1xf32, #tpu.memory_space<vmem>>, %arg12: memref<2x49xf32, #tpu.memory_space<vmem>>, %arg13: memref<1x16x256xf32, #tpu.memory_space<vmem>>, %arg14: memref<4x512xf32, #tpu.memory_space<vmem>>, %arg15: memref<2x512xf32, #tpu.memory_space<vmem>>) attributes {dimension_semantics = [#tpu.dimension_semantics<parallel>], iteration_bounds = array<i64: 2>, scalar_prefetch = 0 : i64, scratch_operands = 2 : i64, tpu.core_type = #tpu.core_type<tc>, window_params = [{transform_indices = @transform_0, window_bounds = array<i64: 1, 16, 256>}, {pipeline_mode = #tpu.pipeline_mode<synchronous>, transform_indices = @transform_1, window_bounds = array<i64: 1, 256>}, {pipeline_mode = #tpu.pipeline_mode<synchronous>, transform_indices = @transform_2, window_bounds = array<i64: 1, 256>}, {pipeline_mode = #tpu.pipeline_mode<synchronous>, transform_indices = @transform_3, window_bounds = array<i64: 4, 16>}, {pipeline_mode = #tpu.pipeline_mode<synchronous>, transform_indices = @transform_4, window_bounds = array<i64: 4, 1>}, {pipeline_mode = #tpu.pipeline_mode<synchronous>, transform_indices = @transform_5, window_bounds = array<i64: 9, 4, 4>}, {pipeline_mode = #tpu.pipeline_mode<synchronous>, transform_indices = @transform_6, window_bounds = array<i64: 4, 1>}, {pipeline_mode = #tpu.pipeline_mode<synchronous>, transform_indices = @transform_7, window_bounds = array<i64: 16, 4>}, {pipeline_mode = #tpu.pipeline_mode<synchronous>, transform_indices = @transform_8, window_bounds = array<i64: 16, 1>}, {pipeline_mode = #tpu.pipeline_mode<synchronous>, transform_indices = @transform_9, window_bounds = array<i64: 16, 1>}, {pipeline_mode = #tpu.pipeline_mode<synchronous>, transform_indices = @transform_10, window_bounds = array<i64: 16, 1>}, {pipeline_mode = #tpu.pipeline_mode<synchronous>, transform_indices = @transform_11, window_bounds = array<i64: 2, 49>}, {transform_indices = @transform_12, window_bounds = array<i64: 1, 16, 256>}]} {
    %c0 = arith.constant 0 : index
    %c0_0 = arith.constant 0 : index
    %c0_1 = arith.constant 0 : index
    %0 = vector.load %arg1[%c0, %c0_0, %c0_1] : memref<1x16x256xf32, #tpu.memory_space<vmem>>, vector<1x16x256xf32>
    %1 = vector.shape_cast %0 : vector<1x16x256xf32> to vector<16x256xf32>
    %c0_2 = arith.constant 0 : index
    %c0_3 = arith.constant 0 : index
    %2 = vector.load %arg2[%c0_2, %c0_3] : memref<1x256xi32, #tpu.memory_space<vmem>>, vector<1x256xi32>
    %c0_4 = arith.constant 0 : index
    %c0_5 = arith.constant 0 : index
    %3 = vector.load %arg3[%c0_4, %c0_5] : memref<1x256xi32, #tpu.memory_space<vmem>>, vector<1x256xi32>
    %c0_6 = arith.constant 0 : index
    %c0_7 = arith.constant 0 : index
    %4 = vector.load %arg4[%c0_6, %c0_7] : memref<4x16xf32, #tpu.memory_space<vmem>>, vector<4x16xf32>
    %cst = arith.constant dense<0.000000e+00> : vector<4x256xf32>
    %5 = tpu.matmul %4, %1, %cst {dimension_numbers = #tpu.dot_dimension_numbers<[1], [0], [0], [1], [0, 0, 1, 1], [], []>} : vector<4x16xf32>, vector<16x256xf32>, vector<4x256xf32> -> vector<4x256xf32>
    %c0_8 = arith.constant 0 : index
    %c0_9 = arith.constant 0 : index
    %6 = vector.load %arg5[%c0_8, %c0_9] : memref<4x1xf32, #tpu.memory_space<vmem>>, vector<4x1xf32>
    %7 = vector.broadcast %6 : vector<4x1xf32> to vector<4x256xf32>
    %8 = arith.addf %5, %7 : vector<4x256xf32>
    %cst_10 = arith.constant 0.000000e+00 : f32
    %9 = vector.broadcast %cst_10 : f32 to vector<4x256xf32>
    %10 = arith.maximumf %8, %9 : vector<4x256xf32>
    %cst_11 = arith.constant 0.000000e+00 : f32
    %11 = vector.broadcast %cst_11 : f32 to vector<4x512xf32>
    %c0_12 = arith.constant 0 : index
    %c0_13 = arith.constant 0 : index
    %12 = vector.load %arg14[%c0_12, %c0_13] : memref<4x512xf32, #tpu.memory_space<vmem>>, vector<4x512xf32>
    tpu.vector_store %arg14[%c0_12, %c0_13], %11 {strides = array<i32>} : memref<4x512xf32, #tpu.memory_space<vmem>>, vector<4x512xf32>,
    %c0_14 = arith.constant 0 : index
    %c128 = arith.constant 128 : index
    %13 = vector.load %arg14[%c0_14, %c128] : memref<4x512xf32, #tpu.memory_space<vmem>>, vector<4x256xf32>
    tpu.vector_store %arg14[%c0_14, %c128], %10 {strides = array<i32>} : memref<4x512xf32, #tpu.memory_space<vmem>>, vector<4x256xf32>,
    %cst_15 = arith.constant 0.000000e+00 : f32
    %14 = vector.broadcast %cst_15 : f32 to vector<4x256xf32>
    %c1_i32 = arith.constant 1 : i32
    %15 = vector.broadcast %c1_i32 : i32 to vector<1x256xi32>
    %16 = arith.cmpi sge, %2, %15 : vector<1x256xi32>
    %c17_i32 = arith.constant 17 : i32
    %17 = vector.broadcast %c17_i32 : i32 to vector<1x256xi32>
    %18 = arith.cmpi slt, %2, %17 : vector<1x256xi32>
    %19 = arith.andi %16, %18 : vector<1x256xi1>
    %c1_i32_16 = arith.constant 1 : i32
    %20 = vector.broadcast %c1_i32_16 : i32 to vector<1x256xi32>
    %21 = arith.cmpi sge, %3, %20 : vector<1x256xi32>
    %22 = arith.andi %19, %21 : vector<1x256xi1>
    %c17_i32_17 = arith.constant 17 : i32
    %23 = vector.broadcast %c17_i32_17 : i32 to vector<1x256xi32>
    %24 = arith.cmpi slt, %3, %23 : vector<1x256xi32>
    %25 = arith.andi %22, %24 : vector<1x256xi1>
    %c0_18 = arith.constant 0 : index
    %c111 = arith.constant 111 : index
    %26 = vector.load %arg14[%c0_18, %c111] : memref<4x512xf32, #tpu.memory_space<vmem>>, vector<4x256xf32>
    %cst_19 = arith.constant 0.000000e+00 : f32
    %27 = vector.shape_cast %25 : vector<1x256xi1> to vector<1x256xi1>
    %28 = vector.broadcast %27 : vector<1x256xi1> to vector<4x256xi1>
    %29 = vector.broadcast %cst_19 : f32 to vector<4x256xf32>
    %30 = arith.select %28, %26, %29 : vector<4x256xi1>, vector<4x256xf32>
    %c0_20 = arith.constant 0 : index
    %c0_21 = arith.constant 0 : index
    %c0_22 = arith.constant 0 : index
    %31 = vector.load %arg6[%c0_20, %c0_21, %c0_22] : memref<9x4x4xf32, #tpu.memory_space<vmem>>, vector<1x4x4xf32>
    %32 = vector.shape_cast %31 : vector<1x4x4xf32> to vector<4x4xf32>
    %cst_23 = arith.constant dense<0.000000e+00> : vector<4x256xf32>
    %33 = tpu.matmul %32, %30, %cst_23 {dimension_numbers = #tpu.dot_dimension_numbers<[1], [0], [0], [1], [0, 0, 1, 1], [], []>} : vector<4x4xf32>, vector<4x256xf32>, vector<4x256xf32> -> vector<4x256xf32>
    %34 = arith.addf %14, %33 : vector<4x256xf32>
    %c1_i32_24 = arith.constant 1 : i32
    %35 = vector.broadcast %c1_i32_24 : i32 to vector<1x256xi32>
    %36 = arith.cmpi sge, %2, %35 : vector<1x256xi32>
    %c17_i32_25 = arith.constant 17 : i32
    %37 = vector.broadcast %c17_i32_25 : i32 to vector<1x256xi32>
    %38 = arith.cmpi slt, %2, %37 : vector<1x256xi32>
    %39 = arith.andi %36, %38 : vector<1x256xi1>
    %c0_i32 = arith.constant 0 : i32
    %40 = vector.broadcast %c0_i32 : i32 to vector<1x256xi32>
    %41 = arith.cmpi sge, %3, %40 : vector<1x256xi32>
    %42 = arith.andi %39, %41 : vector<1x256xi1>
    %c16_i32 = arith.constant 16 : i32
    %43 = vector.broadcast %c16_i32 : i32 to vector<1x256xi32>
    %44 = arith.cmpi slt, %3, %43 : vector<1x256xi32>
    %45 = arith.andi %42, %44 : vector<1x256xi1>
    %c0_26 = arith.constant 0 : index
    %c112 = arith.constant 112 : index
    %46 = vector.load %arg14[%c0_26, %c112] : memref<4x512xf32, #tpu.memory_space<vmem>>, vector<4x256xf32>
    %cst_27 = arith.constant 0.000000e+00 : f32
    %47 = vector.shape_cast %45 : vector<1x256xi1> to vector<1x256xi1>
    %48 = vector.broadcast %47 : vector<1x256xi1> to vector<4x256xi1>
    %49 = vector.broadcast %cst_27 : f32 to vector<4x256xf32>
    %50 = arith.select %48, %46, %49 : vector<4x256xi1>, vector<4x256xf32>
    %c1 = arith.constant 1 : index
    %c0_28 = arith.constant 0 : index
    %c0_29 = arith.constant 0 : index
    %51 = vector.load %arg6[%c1, %c0_28, %c0_29] : memref<9x4x4xf32, #tpu.memory_space<vmem>>, vector<1x4x4xf32>
    %52 = vector.shape_cast %51 : vector<1x4x4xf32> to vector<4x4xf32>
    %cst_30 = arith.constant dense<0.000000e+00> : vector<4x256xf32>
    %53 = tpu.matmul %52, %50, %cst_30 {dimension_numbers = #tpu.dot_dimension_numbers<[1], [0], [0], [1], [0, 0, 1, 1], [], []>} : vector<4x4xf32>, vector<4x256xf32>, vector<4x256xf32> -> vector<4x256xf32>
    %54 = arith.addf %34, %53 : vector<4x256xf32>
    %c1_i32_31 = arith.constant 1 : i32
    %55 = vector.broadcast %c1_i32_31 : i32 to vector<1x256xi32>
    %56 = arith.cmpi sge, %2, %55 : vector<1x256xi32>
    %c17_i32_32 = arith.constant 17 : i32
    %57 = vector.broadcast %c17_i32_32 : i32 to vector<1x256xi32>
    %58 = arith.cmpi slt, %2, %57 : vector<1x256xi32>
    %59 = arith.andi %56, %58 : vector<1x256xi1>
    %c-1_i32 = arith.constant -1 : i32
    %60 = vector.broadcast %c-1_i32 : i32 to vector<1x256xi32>
    %61 = arith.cmpi sge, %3, %60 : vector<1x256xi32>
    %62 = arith.andi %59, %61 : vector<1x256xi1>
    %c15_i32 = arith.constant 15 : i32
    %63 = vector.broadcast %c15_i32 : i32 to vector<1x256xi32>
    %64 = arith.cmpi slt, %3, %63 : vector<1x256xi32>
    %65 = arith.andi %62, %64 : vector<1x256xi1>
    %c0_33 = arith.constant 0 : index
    %c113 = arith.constant 113 : index
    %66 = vector.load %arg14[%c0_33, %c113] : memref<4x512xf32, #tpu.memory_space<vmem>>, vector<4x256xf32>
    %cst_34 = arith.constant 0.000000e+00 : f32
    %67 = vector.shape_cast %65 : vector<1x256xi1> to vector<1x256xi1>
    %68 = vector.broadcast %67 : vector<1x256xi1> to vector<4x256xi1>
    %69 = vector.broadcast %cst_34 : f32 to vector<4x256xf32>
    %70 = arith.select %68, %66, %69 : vector<4x256xi1>, vector<4x256xf32>
    %c2 = arith.constant 2 : index
    %c0_35 = arith.constant 0 : index
    %c0_36 = arith.constant 0 : index
    %71 = vector.load %arg6[%c2, %c0_35, %c0_36] : memref<9x4x4xf32, #tpu.memory_space<vmem>>, vector<1x4x4xf32>
    %72 = vector.shape_cast %71 : vector<1x4x4xf32> to vector<4x4xf32>
    %cst_37 = arith.constant dense<0.000000e+00> : vector<4x256xf32>
    %73 = tpu.matmul %72, %70, %cst_37 {dimension_numbers = #tpu.dot_dimension_numbers<[1], [0], [0], [1], [0, 0, 1, 1], [], []>} : vector<4x4xf32>, vector<4x256xf32>, vector<4x256xf32> -> vector<4x256xf32>
    %74 = arith.addf %54, %73 : vector<4x256xf32>
    %c0_i32_38 = arith.constant 0 : i32
    %75 = vector.broadcast %c0_i32_38 : i32 to vector<1x256xi32>
    %76 = arith.cmpi sge, %2, %75 : vector<1x256xi32>
    %c16_i32_39 = arith.constant 16 : i32
    %77 = vector.broadcast %c16_i32_39 : i32 to vector<1x256xi32>
    %78 = arith.cmpi slt, %2, %77 : vector<1x256xi32>
    %79 = arith.andi %76, %78 : vector<1x256xi1>
    %c1_i32_40 = arith.constant 1 : i32
    %80 = vector.broadcast %c1_i32_40 : i32 to vector<1x256xi32>
    %81 = arith.cmpi sge, %3, %80 : vector<1x256xi32>
    %82 = arith.andi %79, %81 : vector<1x256xi1>
    %c17_i32_41 = arith.constant 17 : i32
    %83 = vector.broadcast %c17_i32_41 : i32 to vector<1x256xi32>
    %84 = arith.cmpi slt, %3, %83 : vector<1x256xi32>
    %85 = arith.andi %82, %84 : vector<1x256xi1>
    %c0_42 = arith.constant 0 : index
    %c127 = arith.constant 127 : index
    %86 = vector.load %arg14[%c0_42, %c127] : memref<4x512xf32, #tpu.memory_space<vmem>>, vector<4x256xf32>
    %cst_43 = arith.constant 0.000000e+00 : f32
    %87 = vector.shape_cast %85 : vector<1x256xi1> to vector<1x256xi1>
    %88 = vector.broadcast %87 : vector<1x256xi1> to vector<4x256xi1>
    %89 = vector.broadcast %cst_43 : f32 to vector<4x256xf32>
    %90 = arith.select %88, %86, %89 : vector<4x256xi1>, vector<4x256xf32>
    %c3 = arith.constant 3 : index
    %c0_44 = arith.constant 0 : index
    %c0_45 = arith.constant 0 : index
    %91 = vector.load %arg6[%c3, %c0_44, %c0_45] : memref<9x4x4xf32, #tpu.memory_space<vmem>>, vector<1x4x4xf32>
    %92 = vector.shape_cast %91 : vector<1x4x4xf32> to vector<4x4xf32>
    %cst_46 = arith.constant dense<0.000000e+00> : vector<4x256xf32>
    %93 = tpu.matmul %92, %90, %cst_46 {dimension_numbers = #tpu.dot_dimension_numbers<[1], [0], [0], [1], [0, 0, 1, 1], [], []>} : vector<4x4xf32>, vector<4x256xf32>, vector<4x256xf32> -> vector<4x256xf32>
    %94 = arith.addf %74, %93 : vector<4x256xf32>
    %c0_i32_47 = arith.constant 0 : i32
    %95 = vector.broadcast %c0_i32_47 : i32 to vector<1x256xi32>
    %96 = arith.cmpi sge, %2, %95 : vector<1x256xi32>
    %c16_i32_48 = arith.constant 16 : i32
    %97 = vector.broadcast %c16_i32_48 : i32 to vector<1x256xi32>
    %98 = arith.cmpi slt, %2, %97 : vector<1x256xi32>
    %99 = arith.andi %96, %98 : vector<1x256xi1>
    %c0_i32_49 = arith.constant 0 : i32
    %100 = vector.broadcast %c0_i32_49 : i32 to vector<1x256xi32>
    %101 = arith.cmpi sge, %3, %100 : vector<1x256xi32>
    %102 = arith.andi %99, %101 : vector<1x256xi1>
    %c16_i32_50 = arith.constant 16 : i32
    %103 = vector.broadcast %c16_i32_50 : i32 to vector<1x256xi32>
    %104 = arith.cmpi slt, %3, %103 : vector<1x256xi32>
    %105 = arith.andi %102, %104 : vector<1x256xi1>
    %c0_51 = arith.constant 0 : index
    %c128_52 = arith.constant 128 : index
    %106 = vector.load %arg14[%c0_51, %c128_52] : memref<4x512xf32, #tpu.memory_space<vmem>>, vector<4x256xf32>
    %cst_53 = arith.constant 0.000000e+00 : f32
    %107 = vector.shape_cast %105 : vector<1x256xi1> to vector<1x256xi1>
    %108 = vector.broadcast %107 : vector<1x256xi1> to vector<4x256xi1>
    %109 = vector.broadcast %cst_53 : f32 to vector<4x256xf32>
    %110 = arith.select %108, %106, %109 : vector<4x256xi1>, vector<4x256xf32>
    %c4 = arith.constant 4 : index
    %c0_54 = arith.constant 0 : index
    %c0_55 = arith.constant 0 : index
    %111 = vector.load %arg6[%c4, %c0_54, %c0_55] : memref<9x4x4xf32, #tpu.memory_space<vmem>>, vector<1x4x4xf32>
    %112 = vector.shape_cast %111 : vector<1x4x4xf32> to vector<4x4xf32>
    %cst_56 = arith.constant dense<0.000000e+00> : vector<4x256xf32>
    %113 = tpu.matmul %112, %110, %cst_56 {dimension_numbers = #tpu.dot_dimension_numbers<[1], [0], [0], [1], [0, 0, 1, 1], [], []>} : vector<4x4xf32>, vector<4x256xf32>, vector<4x256xf32> -> vector<4x256xf32>
    %114 = arith.addf %94, %113 : vector<4x256xf32>
    %c0_i32_57 = arith.constant 0 : i32
    %115 = vector.broadcast %c0_i32_57 : i32 to vector<1x256xi32>
    %116 = arith.cmpi sge, %2, %115 : vector<1x256xi32>
    %c16_i32_58 = arith.constant 16 : i32
    %117 = vector.broadcast %c16_i32_58 : i32 to vector<1x256xi32>
    %118 = arith.cmpi slt, %2, %117 : vector<1x256xi32>
    %119 = arith.andi %116, %118 : vector<1x256xi1>
    %c-1_i32_59 = arith.constant -1 : i32
    %120 = vector.broadcast %c-1_i32_59 : i32 to vector<1x256xi32>
    %121 = arith.cmpi sge, %3, %120 : vector<1x256xi32>
    %122 = arith.andi %119, %121 : vector<1x256xi1>
    %c15_i32_60 = arith.constant 15 : i32
    %123 = vector.broadcast %c15_i32_60 : i32 to vector<1x256xi32>
    %124 = arith.cmpi slt, %3, %123 : vector<1x256xi32>
    %125 = arith.andi %122, %124 : vector<1x256xi1>
    %c0_61 = arith.constant 0 : index
    %c129 = arith.constant 129 : index
    %126 = vector.load %arg14[%c0_61, %c129] : memref<4x512xf32, #tpu.memory_space<vmem>>, vector<4x256xf32>
    %cst_62 = arith.constant 0.000000e+00 : f32
    %127 = vector.shape_cast %125 : vector<1x256xi1> to vector<1x256xi1>
    %128 = vector.broadcast %127 : vector<1x256xi1> to vector<4x256xi1>
    %129 = vector.broadcast %cst_62 : f32 to vector<4x256xf32>
    %130 = arith.select %128, %126, %129 : vector<4x256xi1>, vector<4x256xf32>
    %c5 = arith.constant 5 : index
    %c0_63 = arith.constant 0 : index
    %c0_64 = arith.constant 0 : index
    %131 = vector.load %arg6[%c5, %c0_63, %c0_64] : memref<9x4x4xf32, #tpu.memory_space<vmem>>, vector<1x4x4xf32>
    %132 = vector.shape_cast %131 : vector<1x4x4xf32> to vector<4x4xf32>
    %cst_65 = arith.constant dense<0.000000e+00> : vector<4x256xf32>
    %133 = tpu.matmul %132, %130, %cst_65 {dimension_numbers = #tpu.dot_dimension_numbers<[1], [0], [0], [1], [0, 0, 1, 1], [], []>} : vector<4x4xf32>, vector<4x256xf32>, vector<4x256xf32> -> vector<4x256xf32>
    %134 = arith.addf %114, %133 : vector<4x256xf32>
    %c-1_i32_66 = arith.constant -1 : i32
    %135 = vector.broadcast %c-1_i32_66 : i32 to vector<1x256xi32>
    %136 = arith.cmpi sge, %2, %135 : vector<1x256xi32>
    %c15_i32_67 = arith.constant 15 : i32
    %137 = vector.broadcast %c15_i32_67 : i32 to vector<1x256xi32>
    %138 = arith.cmpi slt, %2, %137 : vector<1x256xi32>
    %139 = arith.andi %136, %138 : vector<1x256xi1>
    %c1_i32_68 = arith.constant 1 : i32
    %140 = vector.broadcast %c1_i32_68 : i32 to vector<1x256xi32>
    %141 = arith.cmpi sge, %3, %140 : vector<1x256xi32>
    %142 = arith.andi %139, %141 : vector<1x256xi1>
    %c17_i32_69 = arith.constant 17 : i32
    %143 = vector.broadcast %c17_i32_69 : i32 to vector<1x256xi32>
    %144 = arith.cmpi slt, %3, %143 : vector<1x256xi32>
    %145 = arith.andi %142, %144 : vector<1x256xi1>
    %c0_70 = arith.constant 0 : index
    %c143 = arith.constant 143 : index
    %146 = vector.load %arg14[%c0_70, %c143] : memref<4x512xf32, #tpu.memory_space<vmem>>, vector<4x256xf32>
    %cst_71 = arith.constant 0.000000e+00 : f32
    %147 = vector.shape_cast %145 : vector<1x256xi1> to vector<1x256xi1>
    %148 = vector.broadcast %147 : vector<1x256xi1> to vector<4x256xi1>
    %149 = vector.broadcast %cst_71 : f32 to vector<4x256xf32>
    %150 = arith.select %148, %146, %149 : vector<4x256xi1>, vector<4x256xf32>
    %c6 = arith.constant 6 : index
    %c0_72 = arith.constant 0 : index
    %c0_73 = arith.constant 0 : index
    %151 = vector.load %arg6[%c6, %c0_72, %c0_73] : memref<9x4x4xf32, #tpu.memory_space<vmem>>, vector<1x4x4xf32>
    %152 = vector.shape_cast %151 : vector<1x4x4xf32> to vector<4x4xf32>
    %cst_74 = arith.constant dense<0.000000e+00> : vector<4x256xf32>
    %153 = tpu.matmul %152, %150, %cst_74 {dimension_numbers = #tpu.dot_dimension_numbers<[1], [0], [0], [1], [0, 0, 1, 1], [], []>} : vector<4x4xf32>, vector<4x256xf32>, vector<4x256xf32> -> vector<4x256xf32>
    %154 = arith.addf %134, %153 : vector<4x256xf32>
    %c-1_i32_75 = arith.constant -1 : i32
    %155 = vector.broadcast %c-1_i32_75 : i32 to vector<1x256xi32>
    %156 = arith.cmpi sge, %2, %155 : vector<1x256xi32>
    %c15_i32_76 = arith.constant 15 : i32
    %157 = vector.broadcast %c15_i32_76 : i32 to vector<1x256xi32>
    %158 = arith.cmpi slt, %2, %157 : vector<1x256xi32>
    %159 = arith.andi %156, %158 : vector<1x256xi1>
    %c0_i32_77 = arith.constant 0 : i32
    %160 = vector.broadcast %c0_i32_77 : i32 to vector<1x256xi32>
    %161 = arith.cmpi sge, %3, %160 : vector<1x256xi32>
    %162 = arith.andi %159, %161 : vector<1x256xi1>
    %c16_i32_78 = arith.constant 16 : i32
    %163 = vector.broadcast %c16_i32_78 : i32 to vector<1x256xi32>
    %164 = arith.cmpi slt, %3, %163 : vector<1x256xi32>
    %165 = arith.andi %162, %164 : vector<1x256xi1>
    %c0_79 = arith.constant 0 : index
    %c144 = arith.constant 144 : index
    %166 = vector.load %arg14[%c0_79, %c144] : memref<4x512xf32, #tpu.memory_space<vmem>>, vector<4x256xf32>
    %cst_80 = arith.constant 0.000000e+00 : f32
    %167 = vector.shape_cast %165 : vector<1x256xi1> to vector<1x256xi1>
    %168 = vector.broadcast %167 : vector<1x256xi1> to vector<4x256xi1>
    %169 = vector.broadcast %cst_80 : f32 to vector<4x256xf32>
    %170 = arith.select %168, %166, %169 : vector<4x256xi1>, vector<4x256xf32>
    %c7 = arith.constant 7 : index
    %c0_81 = arith.constant 0 : index
    %c0_82 = arith.constant 0 : index
    %171 = vector.load %arg6[%c7, %c0_81, %c0_82] : memref<9x4x4xf32, #tpu.memory_space<vmem>>, vector<1x4x4xf32>
    %172 = vector.shape_cast %171 : vector<1x4x4xf32> to vector<4x4xf32>
    %cst_83 = arith.constant dense<0.000000e+00> : vector<4x256xf32>
    %173 = tpu.matmul %172, %170, %cst_83 {dimension_numbers = #tpu.dot_dimension_numbers<[1], [0], [0], [1], [0, 0, 1, 1], [], []>} : vector<4x4xf32>, vector<4x256xf32>, vector<4x256xf32> -> vector<4x256xf32>
    %174 = arith.addf %154, %173 : vector<4x256xf32>
    %c-1_i32_84 = arith.constant -1 : i32
    %175 = vector.broadcast %c-1_i32_84 : i32 to vector<1x256xi32>
    %176 = arith.cmpi sge, %2, %175 : vector<1x256xi32>
    %c15_i32_85 = arith.constant 15 : i32
    %177 = vector.broadcast %c15_i32_85 : i32 to vector<1x256xi32>
    %178 = arith.cmpi slt, %2, %177 : vector<1x256xi32>
    %179 = arith.andi %176, %178 : vector<1x256xi1>
    %c-1_i32_86 = arith.constant -1 : i32
    %180 = vector.broadcast %c-1_i32_86 : i32 to vector<1x256xi32>
    %181 = arith.cmpi sge, %3, %180 : vector<1x256xi32>
    %182 = arith.andi %179, %181 : vector<1x256xi1>
    %c15_i32_87 = arith.constant 15 : i32
    %183 = vector.broadcast %c15_i32_87 : i32 to vector<1x256xi32>
    %184 = arith.cmpi slt, %3, %183 : vector<1x256xi32>
    %185 = arith.andi %182, %184 : vector<1x256xi1>
    %c0_88 = arith.constant 0 : index
    %c145 = arith.constant 145 : index
    %186 = vector.load %arg14[%c0_88, %c145] : memref<4x512xf32, #tpu.memory_space<vmem>>, vector<4x256xf32>
    %cst_89 = arith.constant 0.000000e+00 : f32
    %187 = vector.shape_cast %185 : vector<1x256xi1> to vector<1x256xi1>
    %188 = vector.broadcast %187 : vector<1x256xi1> to vector<4x256xi1>
    %189 = vector.broadcast %cst_89 : f32 to vector<4x256xf32>
    %190 = arith.select %188, %186, %189 : vector<4x256xi1>, vector<4x256xf32>
    %c8 = arith.constant 8 : index
    %c0_90 = arith.constant 0 : index
    %c0_91 = arith.constant 0 : index
    %191 = vector.load %arg6[%c8, %c0_90, %c0_91] : memref<9x4x4xf32, #tpu.memory_space<vmem>>, vector<1x4x4xf32>
    %192 = vector.shape_cast %191 : vector<1x4x4xf32> to vector<4x4xf32>
    %cst_92 = arith.constant dense<0.000000e+00> : vector<4x256xf32>
    %193 = tpu.matmul %192, %190, %cst_92 {dimension_numbers = #tpu.dot_dimension_numbers<[1], [0], [0], [1], [0, 0, 1, 1], [], []>} : vector<4x4xf32>, vector<4x256xf32>, vector<4x256xf32> -> vector<4x256xf32>
    %194 = arith.addf %174, %193 : vector<4x256xf32>
    %c0_93 = arith.constant 0 : index
    %c0_94 = arith.constant 0 : index
    %195 = vector.load %arg7[%c0_93, %c0_94] : memref<4x1xf32, #tpu.memory_space<vmem>>, vector<4x1xf32>
    %196 = vector.broadcast %195 : vector<4x1xf32> to vector<4x256xf32>
    %197 = arith.addf %194, %196 : vector<4x256xf32>
    %cst_95 = arith.constant 0.000000e+00 : f32
    %198 = vector.broadcast %cst_95 : f32 to vector<4x256xf32>
    %199 = arith.maximumf %197, %198 : vector<4x256xf32>
    %c0_96 = arith.constant 0 : index
    %c0_97 = arith.constant 0 : index
    %200 = vector.load %arg8[%c0_96, %c0_97] : memref<16x4xf32, #tpu.memory_space<vmem>>, vector<16x4xf32>
    %cst_98 = arith.constant dense<0.000000e+00> : vector<16x256xf32>
    %201 = tpu.matmul %200, %199, %cst_98 {dimension_numbers = #tpu.dot_dimension_numbers<[1], [0], [0], [1], [0, 0, 1, 1], [], []>} : vector<16x4xf32>, vector<4x256xf32>, vector<16x256xf32> -> vector<16x256xf32>
    %c0_99 = arith.constant 0 : index
    %c0_100 = arith.constant 0 : index
    %202 = vector.load %arg9[%c0_99, %c0_100] : memref<16x1xf32, #tpu.memory_space<vmem>>, vector<16x1xf32>
    %203 = vector.broadcast %202 : vector<16x1xf32> to vector<16x256xf32>
    %204 = arith.addf %201, %203 : vector<16x256xf32>
    %cst_101 = arith.constant dense<0.000000e+00> : vector<16xf32>
    %205 = vector.multi_reduction <add>, %204, %cst_101 [1] : vector<16x256xf32> to vector<16xf32>
    %206 = vector.shape_cast %205 : vector<16xf32> to vector<16x1xf32>
    %cst_102 = arith.constant 3.906250e-03 : f32
    %207 = vector.broadcast %cst_102 : f32 to vector<16x1xf32>
    %208 = arith.mulf %206, %207 : vector<16x1xf32>
    %cst_103 = arith.constant dense<0xFF800000> : vector<16xf32>
    %209 = vector.multi_reduction <maximumf>, %204, %cst_103 [1] : vector<16x256xf32> to vector<16xf32>
    %210 = vector.shape_cast %209 : vector<16xf32> to vector<16x1xf32>
    %c0_104 = arith.constant 0 : index
    %c0_105 = arith.constant 0 : index
    %211 = vector.load %arg10[%c0_104, %c0_105] : memref<16x1xf32, #tpu.memory_space<vmem>>, vector<16x1xf32>
    %c0_106 = arith.constant 0 : index
    %c0_107 = arith.constant 0 : index
    %212 = vector.load %arg11[%c0_106, %c0_107] : memref<16x1xf32, #tpu.memory_space<vmem>>, vector<16x1xf32>
    %213 = arith.mulf %211, %208 : vector<16x1xf32>
    %cst_108 = arith.constant dense<0.000000e+00> : vector<1xf32>
    %214 = vector.multi_reduction <add>, %213, %cst_108 [0] : vector<16x1xf32> to vector<1xf32>
    %215 = vector.shape_cast %214 : vector<1xf32> to vector<1x1xf32>
    %cst_109 = arith.constant 0.000000e+00 : f32
    %216 = vector.broadcast %cst_109 : f32 to vector<1x1xf32>
    %217 = arith.maximumf %215, %216 : vector<1x1xf32>
    %218 = vector.broadcast %217 : vector<1x1xf32> to vector<16x1xf32>
    %219 = arith.mulf %212, %218 : vector<16x1xf32>
    %cst_110 = arith.constant dense<0.000000e+00> : vector<16xf32>
    %220 = vector.multi_reduction <add>, %219, %cst_110 [1] : vector<16x1xf32> to vector<16xf32>
    %221 = vector.shape_cast %220 : vector<16xf32> to vector<16x1xf32>
    %222 = arith.mulf %211, %210 : vector<16x1xf32>
    %cst_111 = arith.constant dense<0.000000e+00> : vector<1xf32>
    %223 = vector.multi_reduction <add>, %222, %cst_111 [0] : vector<16x1xf32> to vector<1xf32>
    %224 = vector.shape_cast %223 : vector<1xf32> to vector<1x1xf32>
    %cst_112 = arith.constant 0.000000e+00 : f32
    %225 = vector.broadcast %cst_112 : f32 to vector<1x1xf32>
    %226 = arith.maximumf %224, %225 : vector<1x1xf32>
    %227 = vector.broadcast %226 : vector<1x1xf32> to vector<16x1xf32>
    %228 = arith.mulf %212, %227 : vector<16x1xf32>
    %cst_113 = arith.constant dense<0.000000e+00> : vector<16xf32>
    %229 = vector.multi_reduction <add>, %228, %cst_113 [1] : vector<16x1xf32> to vector<16xf32>
    %230 = vector.shape_cast %229 : vector<16xf32> to vector<16x1xf32>
    %231 = arith.addf %221, %230 : vector<16x1xf32>
    %cst_114 = arith.constant 0.000000e+00 : f32
    %232 = vector.broadcast %cst_114 : f32 to vector<16x1xf32>
    %233 = arith.subf %232, %231 : vector<16x1xf32>
    %234 = math.exp %233 : vector<16x1xf32>
    %cst_115 = arith.constant 1.000000e+00 : f32
    %235 = vector.broadcast %cst_115 : f32 to vector<16x1xf32>
    %236 = arith.addf %235, %234 : vector<16x1xf32>
    %cst_116 = arith.constant 1.000000e+00 : f32
    %237 = vector.broadcast %cst_116 : f32 to vector<16x1xf32>
    %238 = arith.divf %237, %236 : vector<16x1xf32>
    %239 = vector.broadcast %238 : vector<16x1xf32> to vector<16x256xf32>
    %240 = arith.mulf %204, %239 : vector<16x256xf32>
    %cst_117 = arith.constant dense<0.000000e+00> : vector<256xf32>
    %241 = vector.multi_reduction <add>, %240, %cst_117 [0] : vector<16x256xf32> to vector<256xf32>
    %242 = vector.shape_cast %241 : vector<256xf32> to vector<1x256xf32>
    %cst_118 = arith.constant 6.250000e-02 : f32
    %243 = vector.broadcast %cst_118 : f32 to vector<1x256xf32>
    %244 = arith.mulf %242, %243 : vector<1x256xf32>
    %cst_119 = arith.constant dense<0xFF800000> : vector<256xf32>
    %245 = vector.multi_reduction <maximumf>, %240, %cst_119 [0] : vector<16x256xf32> to vector<256xf32>
    %246 = vector.shape_cast %245 : vector<256xf32> to vector<1x256xf32>
    %cst_120 = arith.constant 0.000000e+00 : f32
    %247 = vector.broadcast %cst_120 : f32 to vector<2x512xf32>
    %c0_121 = arith.constant 0 : index
    %c0_122 = arith.constant 0 : index
    %248 = vector.load %arg15[%c0_121, %c0_122] : memref<2x512xf32, #tpu.memory_space<vmem>>, vector<2x512xf32>
    tpu.vector_store %arg15[%c0_121, %c0_122], %247 {strides = array<i32>} : memref<2x512xf32, #tpu.memory_space<vmem>>, vector<2x512xf32>,
    %c0_123 = arith.constant 0 : index
    %c128_124 = arith.constant 128 : index
    %249 = vector.load %arg15[%c0_123, %c128_124] : memref<2x512xf32, #tpu.memory_space<vmem>>, vector<1x256xf32>
    tpu.vector_store %arg15[%c0_123, %c128_124], %244 {strides = array<i32>} : memref<2x512xf32, #tpu.memory_space<vmem>>, vector<1x256xf32>,
    %c1_125 = arith.constant 1 : index
    %c128_126 = arith.constant 128 : index
    %250 = vector.load %arg15[%c1_125, %c128_126] : memref<2x512xf32, #tpu.memory_space<vmem>>, vector<1x256xf32>
    tpu.vector_store %arg15[%c1_125, %c128_126], %246 {strides = array<i32>} : memref<2x512xf32, #tpu.memory_space<vmem>>, vector<1x256xf32>,
    %c0_127 = arith.constant 0 : index
    %c0_128 = arith.constant 0 : index
    %251 = vector.load %arg12[%c0_127, %c0_128] : memref<2x49xf32, #tpu.memory_space<vmem>>, vector<2x49xf32>
    %cst_129 = arith.constant 0.000000e+00 : f32
    %252 = vector.broadcast %cst_129 : f32 to vector<2x256xf32>
    %253 = vector.extract_strided_slice %251 {offsets = [0, 0], sizes = [2, 1], strides = [1, 1]} : vector<2x49xf32> to vector<2x1xf32>
    %c0_130 = arith.constant 0 : index
    %c77 = arith.constant 77 : index
    %254 = vector.load %arg15[%c0_130, %c77] : memref<2x512xf32, #tpu.memory_space<vmem>>, vector<2x256xf32>
    %255 = vector.broadcast %253 : vector<2x1xf32> to vector<2x256xf32>
    %256 = arith.mulf %255, %254 : vector<2x256xf32>
    %c3_i32 = arith.constant 3 : i32
    %257 = vector.broadcast %c3_i32 : i32 to vector<1x256xi32>
    %258 = arith.cmpi sge, %2, %257 : vector<1x256xi32>
    %c19_i32 = arith.constant 19 : i32
    %259 = vector.broadcast %c19_i32 : i32 to vector<1x256xi32>
    %260 = arith.cmpi slt, %2, %259 : vector<1x256xi32>
    %261 = arith.andi %258, %260 : vector<1x256xi1>
    %c3_i32_131 = arith.constant 3 : i32
    %262 = vector.broadcast %c3_i32_131 : i32 to vector<1x256xi32>
    %263 = arith.cmpi sge, %3, %262 : vector<1x256xi32>
    %264 = arith.andi %261, %263 : vector<1x256xi1>
    %c19_i32_132 = arith.constant 19 : i32
    %265 = vector.broadcast %c19_i32_132 : i32 to vector<1x256xi32>
    %266 = arith.cmpi slt, %3, %265 : vector<1x256xi32>
    %267 = arith.andi %264, %266 : vector<1x256xi1>
    %cst_133 = arith.constant 0.000000e+00 : f32
    %268 = vector.shape_cast %267 : vector<1x256xi1> to vector<1x256xi1>
    %269 = vector.broadcast %268 : vector<1x256xi1> to vector<2x256xi1>
    %270 = vector.broadcast %cst_133 : f32 to vector<2x256xf32>
    %271 = arith.select %269, %256, %270 : vector<2x256xi1>, vector<2x256xf32>
    %272 = arith.addf %252, %271 : vector<2x256xf32>
    %273 = vector.extract_strided_slice %251 {offsets = [0, 1], sizes = [2, 1], strides = [1, 1]} : vector<2x49xf32> to vector<2x1xf32>
    %c0_134 = arith.constant 0 : index
    %c78 = arith.constant 78 : index
    %274 = vector.load %arg15[%c0_134, %c78] : memref<2x512xf32, #tpu.memory_space<vmem>>, vector<2x256xf32>
    %275 = vector.broadcast %273 : vector<2x1xf32> to vector<2x256xf32>
    %276 = arith.mulf %275, %274 : vector<2x256xf32>
    %c3_i32_135 = arith.constant 3 : i32
    %277 = vector.broadcast %c3_i32_135 : i32 to vector<1x256xi32>
    %278 = arith.cmpi sge, %2, %277 : vector<1x256xi32>
    %c19_i32_136 = arith.constant 19 : i32
    %279 = vector.broadcast %c19_i32_136 : i32 to vector<1x256xi32>
    %280 = arith.cmpi slt, %2, %279 : vector<1x256xi32>
    %281 = arith.andi %278, %280 : vector<1x256xi1>
    %c2_i32 = arith.constant 2 : i32
    %282 = vector.broadcast %c2_i32 : i32 to vector<1x256xi32>
    %283 = arith.cmpi sge, %3, %282 : vector<1x256xi32>
    %284 = arith.andi %281, %283 : vector<1x256xi1>
    %c18_i32 = arith.constant 18 : i32
    %285 = vector.broadcast %c18_i32 : i32 to vector<1x256xi32>
    %286 = arith.cmpi slt, %3, %285 : vector<1x256xi32>
    %287 = arith.andi %284, %286 : vector<1x256xi1>
    %cst_137 = arith.constant 0.000000e+00 : f32
    %288 = vector.shape_cast %287 : vector<1x256xi1> to vector<1x256xi1>
    %289 = vector.broadcast %288 : vector<1x256xi1> to vector<2x256xi1>
    %290 = vector.broadcast %cst_137 : f32 to vector<2x256xf32>
    %291 = arith.select %289, %276, %290 : vector<2x256xi1>, vector<2x256xf32>
    %292 = arith.addf %272, %291 : vector<2x256xf32>
    %293 = vector.extract_strided_slice %251 {offsets = [0, 2], sizes = [2, 1], strides = [1, 1]} : vector<2x49xf32> to vector<2x1xf32>
    %c0_138 = arith.constant 0 : index
    %c79 = arith.constant 79 : index
    %294 = vector.load %arg15[%c0_138, %c79] : memref<2x512xf32, #tpu.memory_space<vmem>>, vector<2x256xf32>
    %295 = vector.broadcast %293 : vector<2x1xf32> to vector<2x256xf32>
    %296 = arith.mulf %295, %294 : vector<2x256xf32>
    %c3_i32_139 = arith.constant 3 : i32
    %297 = vector.broadcast %c3_i32_139 : i32 to vector<1x256xi32>
    %298 = arith.cmpi sge, %2, %297 : vector<1x256xi32>
    %c19_i32_140 = arith.constant 19 : i32
    %299 = vector.broadcast %c19_i32_140 : i32 to vector<1x256xi32>
    %300 = arith.cmpi slt, %2, %299 : vector<1x256xi32>
    %301 = arith.andi %298, %300 : vector<1x256xi1>
    %c1_i32_141 = arith.constant 1 : i32
    %302 = vector.broadcast %c1_i32_141 : i32 to vector<1x256xi32>
    %303 = arith.cmpi sge, %3, %302 : vector<1x256xi32>
    %304 = arith.andi %301, %303 : vector<1x256xi1>
    %c17_i32_142 = arith.constant 17 : i32
    %305 = vector.broadcast %c17_i32_142 : i32 to vector<1x256xi32>
    %306 = arith.cmpi slt, %3, %305 : vector<1x256xi32>
    %307 = arith.andi %304, %306 : vector<1x256xi1>
    %cst_143 = arith.constant 0.000000e+00 : f32
    %308 = vector.shape_cast %307 : vector<1x256xi1> to vector<1x256xi1>
    %309 = vector.broadcast %308 : vector<1x256xi1> to vector<2x256xi1>
    %310 = vector.broadcast %cst_143 : f32 to vector<2x256xf32>
    %311 = arith.select %309, %296, %310 : vector<2x256xi1>, vector<2x256xf32>
    %312 = arith.addf %292, %311 : vector<2x256xf32>
    %313 = vector.extract_strided_slice %251 {offsets = [0, 3], sizes = [2, 1], strides = [1, 1]} : vector<2x49xf32> to vector<2x1xf32>
    %c0_144 = arith.constant 0 : index
    %c80 = arith.constant 80 : index
    %314 = vector.load %arg15[%c0_144, %c80] : memref<2x512xf32, #tpu.memory_space<vmem>>, vector<2x256xf32>
    %315 = vector.broadcast %313 : vector<2x1xf32> to vector<2x256xf32>
    %316 = arith.mulf %315, %314 : vector<2x256xf32>
    %c3_i32_145 = arith.constant 3 : i32
    %317 = vector.broadcast %c3_i32_145 : i32 to vector<1x256xi32>
    %318 = arith.cmpi sge, %2, %317 : vector<1x256xi32>
    %c19_i32_146 = arith.constant 19 : i32
    %319 = vector.broadcast %c19_i32_146 : i32 to vector<1x256xi32>
    %320 = arith.cmpi slt, %2, %319 : vector<1x256xi32>
    %321 = arith.andi %318, %320 : vector<1x256xi1>
    %c0_i32_147 = arith.constant 0 : i32
    %322 = vector.broadcast %c0_i32_147 : i32 to vector<1x256xi32>
    %323 = arith.cmpi sge, %3, %322 : vector<1x256xi32>
    %324 = arith.andi %321, %323 : vector<1x256xi1>
    %c16_i32_148 = arith.constant 16 : i32
    %325 = vector.broadcast %c16_i32_148 : i32 to vector<1x256xi32>
    %326 = arith.cmpi slt, %3, %325 : vector<1x256xi32>
    %327 = arith.andi %324, %326 : vector<1x256xi1>
    %cst_149 = arith.constant 0.000000e+00 : f32
    %328 = vector.shape_cast %327 : vector<1x256xi1> to vector<1x256xi1>
    %329 = vector.broadcast %328 : vector<1x256xi1> to vector<2x256xi1>
    %330 = vector.broadcast %cst_149 : f32 to vector<2x256xf32>
    %331 = arith.select %329, %316, %330 : vector<2x256xi1>, vector<2x256xf32>
    %332 = arith.addf %312, %331 : vector<2x256xf32>
    %333 = vector.extract_strided_slice %251 {offsets = [0, 4], sizes = [2, 1], strides = [1, 1]} : vector<2x49xf32> to vector<2x1xf32>
    %c0_150 = arith.constant 0 : index
    %c81 = arith.constant 81 : index
    %334 = vector.load %arg15[%c0_150, %c81] : memref<2x512xf32, #tpu.memory_space<vmem>>, vector<2x256xf32>
    %335 = vector.broadcast %333 : vector<2x1xf32> to vector<2x256xf32>
    %336 = arith.mulf %335, %334 : vector<2x256xf32>
    %c3_i32_151 = arith.constant 3 : i32
    %337 = vector.broadcast %c3_i32_151 : i32 to vector<1x256xi32>
    %338 = arith.cmpi sge, %2, %337 : vector<1x256xi32>
    %c19_i32_152 = arith.constant 19 : i32
    %339 = vector.broadcast %c19_i32_152 : i32 to vector<1x256xi32>
    %340 = arith.cmpi slt, %2, %339 : vector<1x256xi32>
    %341 = arith.andi %338, %340 : vector<1x256xi1>
    %c-1_i32_153 = arith.constant -1 : i32
    %342 = vector.broadcast %c-1_i32_153 : i32 to vector<1x256xi32>
    %343 = arith.cmpi sge, %3, %342 : vector<1x256xi32>
    %344 = arith.andi %341, %343 : vector<1x256xi1>
    %c15_i32_154 = arith.constant 15 : i32
    %345 = vector.broadcast %c15_i32_154 : i32 to vector<1x256xi32>
    %346 = arith.cmpi slt, %3, %345 : vector<1x256xi32>
    %347 = arith.andi %344, %346 : vector<1x256xi1>
    %cst_155 = arith.constant 0.000000e+00 : f32
    %348 = vector.shape_cast %347 : vector<1x256xi1> to vector<1x256xi1>
    %349 = vector.broadcast %348 : vector<1x256xi1> to vector<2x256xi1>
    %350 = vector.broadcast %cst_155 : f32 to vector<2x256xf32>
    %351 = arith.select %349, %336, %350 : vector<2x256xi1>, vector<2x256xf32>
    %352 = arith.addf %332, %351 : vector<2x256xf32>
    %353 = vector.extract_strided_slice %251 {offsets = [0, 5], sizes = [2, 1], strides = [1, 1]} : vector<2x49xf32> to vector<2x1xf32>
    %c0_156 = arith.constant 0 : index
    %c82 = arith.constant 82 : index
    %354 = vector.load %arg15[%c0_156, %c82] : memref<2x512xf32, #tpu.memory_space<vmem>>, vector<2x256xf32>
    %355 = vector.broadcast %353 : vector<2x1xf32> to vector<2x256xf32>
    %356 = arith.mulf %355, %354 : vector<2x256xf32>
    %c3_i32_157 = arith.constant 3 : i32
    %357 = vector.broadcast %c3_i32_157 : i32 to vector<1x256xi32>
    %358 = arith.cmpi sge, %2, %357 : vector<1x256xi32>
    %c19_i32_158 = arith.constant 19 : i32
    %359 = vector.broadcast %c19_i32_158 : i32 to vector<1x256xi32>
    %360 = arith.cmpi slt, %2, %359 : vector<1x256xi32>
    %361 = arith.andi %358, %360 : vector<1x256xi1>
    %c-2_i32 = arith.constant -2 : i32
    %362 = vector.broadcast %c-2_i32 : i32 to vector<1x256xi32>
    %363 = arith.cmpi sge, %3, %362 : vector<1x256xi32>
    %364 = arith.andi %361, %363 : vector<1x256xi1>
    %c14_i32 = arith.constant 14 : i32
    %365 = vector.broadcast %c14_i32 : i32 to vector<1x256xi32>
    %366 = arith.cmpi slt, %3, %365 : vector<1x256xi32>
    %367 = arith.andi %364, %366 : vector<1x256xi1>
    %cst_159 = arith.constant 0.000000e+00 : f32
    %368 = vector.shape_cast %367 : vector<1x256xi1> to vector<1x256xi1>
    %369 = vector.broadcast %368 : vector<1x256xi1> to vector<2x256xi1>
    %370 = vector.broadcast %cst_159 : f32 to vector<2x256xf32>
    %371 = arith.select %369, %356, %370 : vector<2x256xi1>, vector<2x256xf32>
    %372 = arith.addf %352, %371 : vector<2x256xf32>
    %373 = vector.extract_strided_slice %251 {offsets = [0, 6], sizes = [2, 1], strides = [1, 1]} : vector<2x49xf32> to vector<2x1xf32>
    %c0_160 = arith.constant 0 : index
    %c83 = arith.constant 83 : index
    %374 = vector.load %arg15[%c0_160, %c83] : memref<2x512xf32, #tpu.memory_space<vmem>>, vector<2x256xf32>
    %375 = vector.broadcast %373 : vector<2x1xf32> to vector<2x256xf32>
    %376 = arith.mulf %375, %374 : vector<2x256xf32>
    %c3_i32_161 = arith.constant 3 : i32
    %377 = vector.broadcast %c3_i32_161 : i32 to vector<1x256xi32>
    %378 = arith.cmpi sge, %2, %377 : vector<1x256xi32>
    %c19_i32_162 = arith.constant 19 : i32
    %379 = vector.broadcast %c19_i32_162 : i32 to vector<1x256xi32>
    %380 = arith.cmpi slt, %2, %379 : vector<1x256xi32>
    %381 = arith.andi %378, %380 : vector<1x256xi1>
    %c-3_i32 = arith.constant -3 : i32
    %382 = vector.broadcast %c-3_i32 : i32 to vector<1x256xi32>
    %383 = arith.cmpi sge, %3, %382 : vector<1x256xi32>
    %384 = arith.andi %381, %383 : vector<1x256xi1>
    %c13_i32 = arith.constant 13 : i32
    %385 = vector.broadcast %c13_i32 : i32 to vector<1x256xi32>
    %386 = arith.cmpi slt, %3, %385 : vector<1x256xi32>
    %387 = arith.andi %384, %386 : vector<1x256xi1>
    %cst_163 = arith.constant 0.000000e+00 : f32
    %388 = vector.shape_cast %387 : vector<1x256xi1> to vector<1x256xi1>
    %389 = vector.broadcast %388 : vector<1x256xi1> to vector<2x256xi1>
    %390 = vector.broadcast %cst_163 : f32 to vector<2x256xf32>
    %391 = arith.select %389, %376, %390 : vector<2x256xi1>, vector<2x256xf32>
    %392 = arith.addf %372, %391 : vector<2x256xf32>
    %393 = vector.extract_strided_slice %251 {offsets = [0, 7], sizes = [2, 1], strides = [1, 1]} : vector<2x49xf32> to vector<2x1xf32>
    %c0_164 = arith.constant 0 : index
    %c93 = arith.constant 93 : index
    %394 = vector.load %arg15[%c0_164, %c93] : memref<2x512xf32, #tpu.memory_space<vmem>>, vector<2x256xf32>
    %395 = vector.broadcast %393 : vector<2x1xf32> to vector<2x256xf32>
    %396 = arith.mulf %395, %394 : vector<2x256xf32>
    %c2_i32_165 = arith.constant 2 : i32
    %397 = vector.broadcast %c2_i32_165 : i32 to vector<1x256xi32>
    %398 = arith.cmpi sge, %2, %397 : vector<1x256xi32>
    %c18_i32_166 = arith.constant 18 : i32
    %399 = vector.broadcast %c18_i32_166 : i32 to vector<1x256xi32>
    %400 = arith.cmpi slt, %2, %399 : vector<1x256xi32>
    %401 = arith.andi %398, %400 : vector<1x256xi1>
    %c3_i32_167 = arith.constant 3 : i32
    %402 = vector.broadcast %c3_i32_167 : i32 to vector<1x256xi32>
    %403 = arith.cmpi sge, %3, %402 : vector<1x256xi32>
    %404 = arith.andi %401, %403 : vector<1x256xi1>
    %c19_i32_168 = arith.constant 19 : i32
    %405 = vector.broadcast %c19_i32_168 : i32 to vector<1x256xi32>
    %406 = arith.cmpi slt, %3, %405 : vector<1x256xi32>
    %407 = arith.andi %404, %406 : vector<1x256xi1>
    %cst_169 = arith.constant 0.000000e+00 : f32
    %408 = vector.shape_cast %407 : vector<1x256xi1> to vector<1x256xi1>
    %409 = vector.broadcast %408 : vector<1x256xi1> to vector<2x256xi1>
    %410 = vector.broadcast %cst_169 : f32 to vector<2x256xf32>
    %411 = arith.select %409, %396, %410 : vector<2x256xi1>, vector<2x256xf32>
    %412 = arith.addf %392, %411 : vector<2x256xf32>
    %413 = vector.extract_strided_slice %251 {offsets = [0, 8], sizes = [2, 1], strides = [1, 1]} : vector<2x49xf32> to vector<2x1xf32>
    %c0_170 = arith.constant 0 : index
    %c94 = arith.constant 94 : index
    %414 = vector.load %arg15[%c0_170, %c94] : memref<2x512xf32, #tpu.memory_space<vmem>>, vector<2x256xf32>
    %415 = vector.broadcast %413 : vector<2x1xf32> to vector<2x256xf32>
    %416 = arith.mulf %415, %414 : vector<2x256xf32>
    %c2_i32_171 = arith.constant 2 : i32
    %417 = vector.broadcast %c2_i32_171 : i32 to vector<1x256xi32>
    %418 = arith.cmpi sge, %2, %417 : vector<1x256xi32>
    %c18_i32_172 = arith.constant 18 : i32
    %419 = vector.broadcast %c18_i32_172 : i32 to vector<1x256xi32>
    %420 = arith.cmpi slt, %2, %419 : vector<1x256xi32>
    %421 = arith.andi %418, %420 : vector<1x256xi1>
    %c2_i32_173 = arith.constant 2 : i32
    %422 = vector.broadcast %c2_i32_173 : i32 to vector<1x256xi32>
    %423 = arith.cmpi sge, %3, %422 : vector<1x256xi32>
    %424 = arith.andi %421, %423 : vector<1x256xi1>
    %c18_i32_174 = arith.constant 18 : i32
    %425 = vector.broadcast %c18_i32_174 : i32 to vector<1x256xi32>
    %426 = arith.cmpi slt, %3, %425 : vector<1x256xi32>
    %427 = arith.andi %424, %426 : vector<1x256xi1>
    %cst_175 = arith.constant 0.000000e+00 : f32
    %428 = vector.shape_cast %427 : vector<1x256xi1> to vector<1x256xi1>
    %429 = vector.broadcast %428 : vector<1x256xi1> to vector<2x256xi1>
    %430 = vector.broadcast %cst_175 : f32 to vector<2x256xf32>
    %431 = arith.select %429, %416, %430 : vector<2x256xi1>, vector<2x256xf32>
    %432 = arith.addf %412, %431 : vector<2x256xf32>
    %433 = vector.extract_strided_slice %251 {offsets = [0, 9], sizes = [2, 1], strides = [1, 1]} : vector<2x49xf32> to vector<2x1xf32>
    %c0_176 = arith.constant 0 : index
    %c95 = arith.constant 95 : index
    %434 = vector.load %arg15[%c0_176, %c95] : memref<2x512xf32, #tpu.memory_space<vmem>>, vector<2x256xf32>
    %435 = vector.broadcast %433 : vector<2x1xf32> to vector<2x256xf32>
    %436 = arith.mulf %435, %434 : vector<2x256xf32>
    %c2_i32_177 = arith.constant 2 : i32
    %437 = vector.broadcast %c2_i32_177 : i32 to vector<1x256xi32>
    %438 = arith.cmpi sge, %2, %437 : vector<1x256xi32>
    %c18_i32_178 = arith.constant 18 : i32
    %439 = vector.broadcast %c18_i32_178 : i32 to vector<1x256xi32>
    %440 = arith.cmpi slt, %2, %439 : vector<1x256xi32>
    %441 = arith.andi %438, %440 : vector<1x256xi1>
    %c1_i32_179 = arith.constant 1 : i32
    %442 = vector.broadcast %c1_i32_179 : i32 to vector<1x256xi32>
    %443 = arith.cmpi sge, %3, %442 : vector<1x256xi32>
    %444 = arith.andi %441, %443 : vector<1x256xi1>
    %c17_i32_180 = arith.constant 17 : i32
    %445 = vector.broadcast %c17_i32_180 : i32 to vector<1x256xi32>
    %446 = arith.cmpi slt, %3, %445 : vector<1x256xi32>
    %447 = arith.andi %444, %446 : vector<1x256xi1>
    %cst_181 = arith.constant 0.000000e+00 : f32
    %448 = vector.shape_cast %447 : vector<1x256xi1> to vector<1x256xi1>
    %449 = vector.broadcast %448 : vector<1x256xi1> to vector<2x256xi1>
    %450 = vector.broadcast %cst_181 : f32 to vector<2x256xf32>
    %451 = arith.select %449, %436, %450 : vector<2x256xi1>, vector<2x256xf32>
    %452 = arith.addf %432, %451 : vector<2x256xf32>
    %453 = vector.extract_strided_slice %251 {offsets = [0, 10], sizes = [2, 1], strides = [1, 1]} : vector<2x49xf32> to vector<2x1xf32>
    %c0_182 = arith.constant 0 : index
    %c96 = arith.constant 96 : index
    %454 = vector.load %arg15[%c0_182, %c96] : memref<2x512xf32, #tpu.memory_space<vmem>>, vector<2x256xf32>
    %455 = vector.broadcast %453 : vector<2x1xf32> to vector<2x256xf32>
    %456 = arith.mulf %455, %454 : vector<2x256xf32>
    %c2_i32_183 = arith.constant 2 : i32
    %457 = vector.broadcast %c2_i32_183 : i32 to vector<1x256xi32>
    %458 = arith.cmpi sge, %2, %457 : vector<1x256xi32>
    %c18_i32_184 = arith.constant 18 : i32
    %459 = vector.broadcast %c18_i32_184 : i32 to vector<1x256xi32>
    %460 = arith.cmpi slt, %2, %459 : vector<1x256xi32>
    %461 = arith.andi %458, %460 : vector<1x256xi1>
    %c0_i32_185 = arith.constant 0 : i32
    %462 = vector.broadcast %c0_i32_185 : i32 to vector<1x256xi32>
    %463 = arith.cmpi sge, %3, %462 : vector<1x256xi32>
    %464 = arith.andi %461, %463 : vector<1x256xi1>
    %c16_i32_186 = arith.constant 16 : i32
    %465 = vector.broadcast %c16_i32_186 : i32 to vector<1x256xi32>
    %466 = arith.cmpi slt, %3, %465 : vector<1x256xi32>
    %467 = arith.andi %464, %466 : vector<1x256xi1>
    %cst_187 = arith.constant 0.000000e+00 : f32
    %468 = vector.shape_cast %467 : vector<1x256xi1> to vector<1x256xi1>
    %469 = vector.broadcast %468 : vector<1x256xi1> to vector<2x256xi1>
    %470 = vector.broadcast %cst_187 : f32 to vector<2x256xf32>
    %471 = arith.select %469, %456, %470 : vector<2x256xi1>, vector<2x256xf32>
    %472 = arith.addf %452, %471 : vector<2x256xf32>
    %473 = vector.extract_strided_slice %251 {offsets = [0, 11], sizes = [2, 1], strides = [1, 1]} : vector<2x49xf32> to vector<2x1xf32>
    %c0_188 = arith.constant 0 : index
    %c97 = arith.constant 97 : index
    %474 = vector.load %arg15[%c0_188, %c97] : memref<2x512xf32, #tpu.memory_space<vmem>>, vector<2x256xf32>
    %475 = vector.broadcast %473 : vector<2x1xf32> to vector<2x256xf32>
    %476 = arith.mulf %475, %474 : vector<2x256xf32>
    %c2_i32_189 = arith.constant 2 : i32
    %477 = vector.broadcast %c2_i32_189 : i32 to vector<1x256xi32>
    %478 = arith.cmpi sge, %2, %477 : vector<1x256xi32>
    %c18_i32_190 = arith.constant 18 : i32
    %479 = vector.broadcast %c18_i32_190 : i32 to vector<1x256xi32>
    %480 = arith.cmpi slt, %2, %479 : vector<1x256xi32>
    %481 = arith.andi %478, %480 : vector<1x256xi1>
    %c-1_i32_191 = arith.constant -1 : i32
    %482 = vector.broadcast %c-1_i32_191 : i32 to vector<1x256xi32>
    %483 = arith.cmpi sge, %3, %482 : vector<1x256xi32>
    %484 = arith.andi %481, %483 : vector<1x256xi1>
    %c15_i32_192 = arith.constant 15 : i32
    %485 = vector.broadcast %c15_i32_192 : i32 to vector<1x256xi32>
    %486 = arith.cmpi slt, %3, %485 : vector<1x256xi32>
    %487 = arith.andi %484, %486 : vector<1x256xi1>
    %cst_193 = arith.constant 0.000000e+00 : f32
    %488 = vector.shape_cast %487 : vector<1x256xi1> to vector<1x256xi1>
    %489 = vector.broadcast %488 : vector<1x256xi1> to vector<2x256xi1>
    %490 = vector.broadcast %cst_193 : f32 to vector<2x256xf32>
    %491 = arith.select %489, %476, %490 : vector<2x256xi1>, vector<2x256xf32>
    %492 = arith.addf %472, %491 : vector<2x256xf32>
    %493 = vector.extract_strided_slice %251 {offsets = [0, 12], sizes = [2, 1], strides = [1, 1]} : vector<2x49xf32> to vector<2x1xf32>
    %c0_194 = arith.constant 0 : index
    %c98 = arith.constant 98 : index
    %494 = vector.load %arg15[%c0_194, %c98] : memref<2x512xf32, #tpu.memory_space<vmem>>, vector<2x256xf32>
    %495 = vector.broadcast %493 : vector<2x1xf32> to vector<2x256xf32>
    %496 = arith.mulf %495, %494 : vector<2x256xf32>
    %c2_i32_195 = arith.constant 2 : i32
    %497 = vector.broadcast %c2_i32_195 : i32 to vector<1x256xi32>
    %498 = arith.cmpi sge, %2, %497 : vector<1x256xi32>
    %c18_i32_196 = arith.constant 18 : i32
    %499 = vector.broadcast %c18_i32_196 : i32 to vector<1x256xi32>
    %500 = arith.cmpi slt, %2, %499 : vector<1x256xi32>
    %501 = arith.andi %498, %500 : vector<1x256xi1>
    %c-2_i32_197 = arith.constant -2 : i32
    %502 = vector.broadcast %c-2_i32_197 : i32 to vector<1x256xi32>
    %503 = arith.cmpi sge, %3, %502 : vector<1x256xi32>
    %504 = arith.andi %501, %503 : vector<1x256xi1>
    %c14_i32_198 = arith.constant 14 : i32
    %505 = vector.broadcast %c14_i32_198 : i32 to vector<1x256xi32>
    %506 = arith.cmpi slt, %3, %505 : vector<1x256xi32>
    %507 = arith.andi %504, %506 : vector<1x256xi1>
    %cst_199 = arith.constant 0.000000e+00 : f32
    %508 = vector.shape_cast %507 : vector<1x256xi1> to vector<1x256xi1>
    %509 = vector.broadcast %508 : vector<1x256xi1> to vector<2x256xi1>
    %510 = vector.broadcast %cst_199 : f32 to vector<2x256xf32>
    %511 = arith.select %509, %496, %510 : vector<2x256xi1>, vector<2x256xf32>
    %512 = arith.addf %492, %511 : vector<2x256xf32>
    %513 = vector.extract_strided_slice %251 {offsets = [0, 13], sizes = [2, 1], strides = [1, 1]} : vector<2x49xf32> to vector<2x1xf32>
    %c0_200 = arith.constant 0 : index
    %c99 = arith.constant 99 : index
    %514 = vector.load %arg15[%c0_200, %c99] : memref<2x512xf32, #tpu.memory_space<vmem>>, vector<2x256xf32>
    %515 = vector.broadcast %513 : vector<2x1xf32> to vector<2x256xf32>
    %516 = arith.mulf %515, %514 : vector<2x256xf32>
    %c2_i32_201 = arith.constant 2 : i32
    %517 = vector.broadcast %c2_i32_201 : i32 to vector<1x256xi32>
    %518 = arith.cmpi sge, %2, %517 : vector<1x256xi32>
    %c18_i32_202 = arith.constant 18 : i32
    %519 = vector.broadcast %c18_i32_202 : i32 to vector<1x256xi32>
    %520 = arith.cmpi slt, %2, %519 : vector<1x256xi32>
    %521 = arith.andi %518, %520 : vector<1x256xi1>
    %c-3_i32_203 = arith.constant -3 : i32
    %522 = vector.broadcast %c-3_i32_203 : i32 to vector<1x256xi32>
    %523 = arith.cmpi sge, %3, %522 : vector<1x256xi32>
    %524 = arith.andi %521, %523 : vector<1x256xi1>
    %c13_i32_204 = arith.constant 13 : i32
    %525 = vector.broadcast %c13_i32_204 : i32 to vector<1x256xi32>
    %526 = arith.cmpi slt, %3, %525 : vector<1x256xi32>
    %527 = arith.andi %524, %526 : vector<1x256xi1>
    %cst_205 = arith.constant 0.000000e+00 : f32
    %528 = vector.shape_cast %527 : vector<1x256xi1> to vector<1x256xi1>
    %529 = vector.broadcast %528 : vector<1x256xi1> to vector<2x256xi1>
    %530 = vector.broadcast %cst_205 : f32 to vector<2x256xf32>
    %531 = arith.select %529, %516, %530 : vector<2x256xi1>, vector<2x256xf32>
    %532 = arith.addf %512, %531 : vector<2x256xf32>
    %533 = vector.extract_strided_slice %251 {offsets = [0, 14], sizes = [2, 1], strides = [1, 1]} : vector<2x49xf32> to vector<2x1xf32>
    %c0_206 = arith.constant 0 : index
    %c109 = arith.constant 109 : index
    %534 = vector.load %arg15[%c0_206, %c109] : memref<2x512xf32, #tpu.memory_space<vmem>>, vector<2x256xf32>
    %535 = vector.broadcast %533 : vector<2x1xf32> to vector<2x256xf32>
    %536 = arith.mulf %535, %534 : vector<2x256xf32>
    %c1_i32_207 = arith.constant 1 : i32
    %537 = vector.broadcast %c1_i32_207 : i32 to vector<1x256xi32>
    %538 = arith.cmpi sge, %2, %537 : vector<1x256xi32>
    %c17_i32_208 = arith.constant 17 : i32
    %539 = vector.broadcast %c17_i32_208 : i32 to vector<1x256xi32>
    %540 = arith.cmpi slt, %2, %539 : vector<1x256xi32>
    %541 = arith.andi %538, %540 : vector<1x256xi1>
    %c3_i32_209 = arith.constant 3 : i32
    %542 = vector.broadcast %c3_i32_209 : i32 to vector<1x256xi32>
    %543 = arith.cmpi sge, %3, %542 : vector<1x256xi32>
    %544 = arith.andi %541, %543 : vector<1x256xi1>
    %c19_i32_210 = arith.constant 19 : i32
    %545 = vector.broadcast %c19_i32_210 : i32 to vector<1x256xi32>
    %546 = arith.cmpi slt, %3, %545 : vector<1x256xi32>
    %547 = arith.andi %544, %546 : vector<1x256xi1>
    %cst_211 = arith.constant 0.000000e+00 : f32
    %548 = vector.shape_cast %547 : vector<1x256xi1> to vector<1x256xi1>
    %549 = vector.broadcast %548 : vector<1x256xi1> to vector<2x256xi1>
    %550 = vector.broadcast %cst_211 : f32 to vector<2x256xf32>
    %551 = arith.select %549, %536, %550 : vector<2x256xi1>, vector<2x256xf32>
    %552 = arith.addf %532, %551 : vector<2x256xf32>
    %553 = vector.extract_strided_slice %251 {offsets = [0, 15], sizes = [2, 1], strides = [1, 1]} : vector<2x49xf32> to vector<2x1xf32>
    %c0_212 = arith.constant 0 : index
    %c110 = arith.constant 110 : index
    %554 = vector.load %arg15[%c0_212, %c110] : memref<2x512xf32, #tpu.memory_space<vmem>>, vector<2x256xf32>
    %555 = vector.broadcast %553 : vector<2x1xf32> to vector<2x256xf32>
    %556 = arith.mulf %555, %554 : vector<2x256xf32>
    %c1_i32_213 = arith.constant 1 : i32
    %557 = vector.broadcast %c1_i32_213 : i32 to vector<1x256xi32>
    %558 = arith.cmpi sge, %2, %557 : vector<1x256xi32>
    %c17_i32_214 = arith.constant 17 : i32
    %559 = vector.broadcast %c17_i32_214 : i32 to vector<1x256xi32>
    %560 = arith.cmpi slt, %2, %559 : vector<1x256xi32>
    %561 = arith.andi %558, %560 : vector<1x256xi1>
    %c2_i32_215 = arith.constant 2 : i32
    %562 = vector.broadcast %c2_i32_215 : i32 to vector<1x256xi32>
    %563 = arith.cmpi sge, %3, %562 : vector<1x256xi32>
    %564 = arith.andi %561, %563 : vector<1x256xi1>
    %c18_i32_216 = arith.constant 18 : i32
    %565 = vector.broadcast %c18_i32_216 : i32 to vector<1x256xi32>
    %566 = arith.cmpi slt, %3, %565 : vector<1x256xi32>
    %567 = arith.andi %564, %566 : vector<1x256xi1>
    %cst_217 = arith.constant 0.000000e+00 : f32
    %568 = vector.shape_cast %567 : vector<1x256xi1> to vector<1x256xi1>
    %569 = vector.broadcast %568 : vector<1x256xi1> to vector<2x256xi1>
    %570 = vector.broadcast %cst_217 : f32 to vector<2x256xf32>
    %571 = arith.select %569, %556, %570 : vector<2x256xi1>, vector<2x256xf32>
    %572 = arith.addf %552, %571 : vector<2x256xf32>
    %573 = vector.extract_strided_slice %251 {offsets = [0, 16], sizes = [2, 1], strides = [1, 1]} : vector<2x49xf32> to vector<2x1xf32>
    %c0_218 = arith.constant 0 : index
    %c111_219 = arith.constant 111 : index
    %574 = vector.load %arg15[%c0_218, %c111_219] : memref<2x512xf32, #tpu.memory_space<vmem>>, vector<2x256xf32>
    %575 = vector.broadcast %573 : vector<2x1xf32> to vector<2x256xf32>
    %576 = arith.mulf %575, %574 : vector<2x256xf32>
    %c1_i32_220 = arith.constant 1 : i32
    %577 = vector.broadcast %c1_i32_220 : i32 to vector<1x256xi32>
    %578 = arith.cmpi sge, %2, %577 : vector<1x256xi32>
    %c17_i32_221 = arith.constant 17 : i32
    %579 = vector.broadcast %c17_i32_221 : i32 to vector<1x256xi32>
    %580 = arith.cmpi slt, %2, %579 : vector<1x256xi32>
    %581 = arith.andi %578, %580 : vector<1x256xi1>
    %c1_i32_222 = arith.constant 1 : i32
    %582 = vector.broadcast %c1_i32_222 : i32 to vector<1x256xi32>
    %583 = arith.cmpi sge, %3, %582 : vector<1x256xi32>
    %584 = arith.andi %581, %583 : vector<1x256xi1>
    %c17_i32_223 = arith.constant 17 : i32
    %585 = vector.broadcast %c17_i32_223 : i32 to vector<1x256xi32>
    %586 = arith.cmpi slt, %3, %585 : vector<1x256xi32>
    %587 = arith.andi %584, %586 : vector<1x256xi1>
    %cst_224 = arith.constant 0.000000e+00 : f32
    %588 = vector.shape_cast %587 : vector<1x256xi1> to vector<1x256xi1>
    %589 = vector.broadcast %588 : vector<1x256xi1> to vector<2x256xi1>
    %590 = vector.broadcast %cst_224 : f32 to vector<2x256xf32>
    %591 = arith.select %589, %576, %590 : vector<2x256xi1>, vector<2x256xf32>
    %592 = arith.addf %572, %591 : vector<2x256xf32>
    %593 = vector.extract_strided_slice %251 {offsets = [0, 17], sizes = [2, 1], strides = [1, 1]} : vector<2x49xf32> to vector<2x1xf32>
    %c0_225 = arith.constant 0 : index
    %c112_226 = arith.constant 112 : index
    %594 = vector.load %arg15[%c0_225, %c112_226] : memref<2x512xf32, #tpu.memory_space<vmem>>, vector<2x256xf32>
    %595 = vector.broadcast %593 : vector<2x1xf32> to vector<2x256xf32>
    %596 = arith.mulf %595, %594 : vector<2x256xf32>
    %c1_i32_227 = arith.constant 1 : i32
    %597 = vector.broadcast %c1_i32_227 : i32 to vector<1x256xi32>
    %598 = arith.cmpi sge, %2, %597 : vector<1x256xi32>
    %c17_i32_228 = arith.constant 17 : i32
    %599 = vector.broadcast %c17_i32_228 : i32 to vector<1x256xi32>
    %600 = arith.cmpi slt, %2, %599 : vector<1x256xi32>
    %601 = arith.andi %598, %600 : vector<1x256xi1>
    %c0_i32_229 = arith.constant 0 : i32
    %602 = vector.broadcast %c0_i32_229 : i32 to vector<1x256xi32>
    %603 = arith.cmpi sge, %3, %602 : vector<1x256xi32>
    %604 = arith.andi %601, %603 : vector<1x256xi1>
    %c16_i32_230 = arith.constant 16 : i32
    %605 = vector.broadcast %c16_i32_230 : i32 to vector<1x256xi32>
    %606 = arith.cmpi slt, %3, %605 : vector<1x256xi32>
    %607 = arith.andi %604, %606 : vector<1x256xi1>
    %cst_231 = arith.constant 0.000000e+00 : f32
    %608 = vector.shape_cast %607 : vector<1x256xi1> to vector<1x256xi1>
    %609 = vector.broadcast %608 : vector<1x256xi1> to vector<2x256xi1>
    %610 = vector.broadcast %cst_231 : f32 to vector<2x256xf32>
    %611 = arith.select %609, %596, %610 : vector<2x256xi1>, vector<2x256xf32>
    %612 = arith.addf %592, %611 : vector<2x256xf32>
    %613 = vector.extract_strided_slice %251 {offsets = [0, 18], sizes = [2, 1], strides = [1, 1]} : vector<2x49xf32> to vector<2x1xf32>
    %c0_232 = arith.constant 0 : index
    %c113_233 = arith.constant 113 : index
    %614 = vector.load %arg15[%c0_232, %c113_233] : memref<2x512xf32, #tpu.memory_space<vmem>>, vector<2x256xf32>
    %615 = vector.broadcast %613 : vector<2x1xf32> to vector<2x256xf32>
    %616 = arith.mulf %615, %614 : vector<2x256xf32>
    %c1_i32_234 = arith.constant 1 : i32
    %617 = vector.broadcast %c1_i32_234 : i32 to vector<1x256xi32>
    %618 = arith.cmpi sge, %2, %617 : vector<1x256xi32>
    %c17_i32_235 = arith.constant 17 : i32
    %619 = vector.broadcast %c17_i32_235 : i32 to vector<1x256xi32>
    %620 = arith.cmpi slt, %2, %619 : vector<1x256xi32>
    %621 = arith.andi %618, %620 : vector<1x256xi1>
    %c-1_i32_236 = arith.constant -1 : i32
    %622 = vector.broadcast %c-1_i32_236 : i32 to vector<1x256xi32>
    %623 = arith.cmpi sge, %3, %622 : vector<1x256xi32>
    %624 = arith.andi %621, %623 : vector<1x256xi1>
    %c15_i32_237 = arith.constant 15 : i32
    %625 = vector.broadcast %c15_i32_237 : i32 to vector<1x256xi32>
    %626 = arith.cmpi slt, %3, %625 : vector<1x256xi32>
    %627 = arith.andi %624, %626 : vector<1x256xi1>
    %cst_238 = arith.constant 0.000000e+00 : f32
    %628 = vector.shape_cast %627 : vector<1x256xi1> to vector<1x256xi1>
    %629 = vector.broadcast %628 : vector<1x256xi1> to vector<2x256xi1>
    %630 = vector.broadcast %cst_238 : f32 to vector<2x256xf32>
    %631 = arith.select %629, %616, %630 : vector<2x256xi1>, vector<2x256xf32>
    %632 = arith.addf %612, %631 : vector<2x256xf32>
    %633 = vector.extract_strided_slice %251 {offsets = [0, 19], sizes = [2, 1], strides = [1, 1]} : vector<2x49xf32> to vector<2x1xf32>
    %c0_239 = arith.constant 0 : index
    %c114 = arith.constant 114 : index
    %634 = vector.load %arg15[%c0_239, %c114] : memref<2x512xf32, #tpu.memory_space<vmem>>, vector<2x256xf32>
    %635 = vector.broadcast %633 : vector<2x1xf32> to vector<2x256xf32>
    %636 = arith.mulf %635, %634 : vector<2x256xf32>
    %c1_i32_240 = arith.constant 1 : i32
    %637 = vector.broadcast %c1_i32_240 : i32 to vector<1x256xi32>
    %638 = arith.cmpi sge, %2, %637 : vector<1x256xi32>
    %c17_i32_241 = arith.constant 17 : i32
    %639 = vector.broadcast %c17_i32_241 : i32 to vector<1x256xi32>
    %640 = arith.cmpi slt, %2, %639 : vector<1x256xi32>
    %641 = arith.andi %638, %640 : vector<1x256xi1>
    %c-2_i32_242 = arith.constant -2 : i32
    %642 = vector.broadcast %c-2_i32_242 : i32 to vector<1x256xi32>
    %643 = arith.cmpi sge, %3, %642 : vector<1x256xi32>
    %644 = arith.andi %641, %643 : vector<1x256xi1>
    %c14_i32_243 = arith.constant 14 : i32
    %645 = vector.broadcast %c14_i32_243 : i32 to vector<1x256xi32>
    %646 = arith.cmpi slt, %3, %645 : vector<1x256xi32>
    %647 = arith.andi %644, %646 : vector<1x256xi1>
    %cst_244 = arith.constant 0.000000e+00 : f32
    %648 = vector.shape_cast %647 : vector<1x256xi1> to vector<1x256xi1>
    %649 = vector.broadcast %648 : vector<1x256xi1> to vector<2x256xi1>
    %650 = vector.broadcast %cst_244 : f32 to vector<2x256xf32>
    %651 = arith.select %649, %636, %650 : vector<2x256xi1>, vector<2x256xf32>
    %652 = arith.addf %632, %651 : vector<2x256xf32>
    %653 = vector.extract_strided_slice %251 {offsets = [0, 20], sizes = [2, 1], strides = [1, 1]} : vector<2x49xf32> to vector<2x1xf32>
    %c0_245 = arith.constant 0 : index
    %c115 = arith.constant 115 : index
    %654 = vector.load %arg15[%c0_245, %c115] : memref<2x512xf32, #tpu.memory_space<vmem>>, vector<2x256xf32>
    %655 = vector.broadcast %653 : vector<2x1xf32> to vector<2x256xf32>
    %656 = arith.mulf %655, %654 : vector<2x256xf32>
    %c1_i32_246 = arith.constant 1 : i32
    %657 = vector.broadcast %c1_i32_246 : i32 to vector<1x256xi32>
    %658 = arith.cmpi sge, %2, %657 : vector<1x256xi32>
    %c17_i32_247 = arith.constant 17 : i32
    %659 = vector.broadcast %c17_i32_247 : i32 to vector<1x256xi32>
    %660 = arith.cmpi slt, %2, %659 : vector<1x256xi32>
    %661 = arith.andi %658, %660 : vector<1x256xi1>
    %c-3_i32_248 = arith.constant -3 : i32
    %662 = vector.broadcast %c-3_i32_248 : i32 to vector<1x256xi32>
    %663 = arith.cmpi sge, %3, %662 : vector<1x256xi32>
    %664 = arith.andi %661, %663 : vector<1x256xi1>
    %c13_i32_249 = arith.constant 13 : i32
    %665 = vector.broadcast %c13_i32_249 : i32 to vector<1x256xi32>
    %666 = arith.cmpi slt, %3, %665 : vector<1x256xi32>
    %667 = arith.andi %664, %666 : vector<1x256xi1>
    %cst_250 = arith.constant 0.000000e+00 : f32
    %668 = vector.shape_cast %667 : vector<1x256xi1> to vector<1x256xi1>
    %669 = vector.broadcast %668 : vector<1x256xi1> to vector<2x256xi1>
    %670 = vector.broadcast %cst_250 : f32 to vector<2x256xf32>
    %671 = arith.select %669, %656, %670 : vector<2x256xi1>, vector<2x256xf32>
    %672 = arith.addf %652, %671 : vector<2x256xf32>
    %673 = vector.extract_strided_slice %251 {offsets = [0, 21], sizes = [2, 1], strides = [1, 1]} : vector<2x49xf32> to vector<2x1xf32>
    %c0_251 = arith.constant 0 : index
    %c125 = arith.constant 125 : index
    %674 = vector.load %arg15[%c0_251, %c125] : memref<2x512xf32, #tpu.memory_space<vmem>>, vector<2x256xf32>
    %675 = vector.broadcast %673 : vector<2x1xf32> to vector<2x256xf32>
    %676 = arith.mulf %675, %674 : vector<2x256xf32>
    %c0_i32_252 = arith.constant 0 : i32
    %677 = vector.broadcast %c0_i32_252 : i32 to vector<1x256xi32>
    %678 = arith.cmpi sge, %2, %677 : vector<1x256xi32>
    %c16_i32_253 = arith.constant 16 : i32
    %679 = vector.broadcast %c16_i32_253 : i32 to vector<1x256xi32>
    %680 = arith.cmpi slt, %2, %679 : vector<1x256xi32>
    %681 = arith.andi %678, %680 : vector<1x256xi1>
    %c3_i32_254 = arith.constant 3 : i32
    %682 = vector.broadcast %c3_i32_254 : i32 to vector<1x256xi32>
    %683 = arith.cmpi sge, %3, %682 : vector<1x256xi32>
    %684 = arith.andi %681, %683 : vector<1x256xi1>
    %c19_i32_255 = arith.constant 19 : i32
    %685 = vector.broadcast %c19_i32_255 : i32 to vector<1x256xi32>
    %686 = arith.cmpi slt, %3, %685 : vector<1x256xi32>
    %687 = arith.andi %684, %686 : vector<1x256xi1>
    %cst_256 = arith.constant 0.000000e+00 : f32
    %688 = vector.shape_cast %687 : vector<1x256xi1> to vector<1x256xi1>
    %689 = vector.broadcast %688 : vector<1x256xi1> to vector<2x256xi1>
    %690 = vector.broadcast %cst_256 : f32 to vector<2x256xf32>
    %691 = arith.select %689, %676, %690 : vector<2x256xi1>, vector<2x256xf32>
    %692 = arith.addf %672, %691 : vector<2x256xf32>
    %693 = vector.extract_strided_slice %251 {offsets = [0, 22], sizes = [2, 1], strides = [1, 1]} : vector<2x49xf32> to vector<2x1xf32>
    %c0_257 = arith.constant 0 : index
    %c126 = arith.constant 126 : index
    %694 = vector.load %arg15[%c0_257, %c126] : memref<2x512xf32, #tpu.memory_space<vmem>>, vector<2x256xf32>
    %695 = vector.broadcast %693 : vector<2x1xf32> to vector<2x256xf32>
    %696 = arith.mulf %695, %694 : vector<2x256xf32>
    %c0_i32_258 = arith.constant 0 : i32
    %697 = vector.broadcast %c0_i32_258 : i32 to vector<1x256xi32>
    %698 = arith.cmpi sge, %2, %697 : vector<1x256xi32>
    %c16_i32_259 = arith.constant 16 : i32
    %699 = vector.broadcast %c16_i32_259 : i32 to vector<1x256xi32>
    %700 = arith.cmpi slt, %2, %699 : vector<1x256xi32>
    %701 = arith.andi %698, %700 : vector<1x256xi1>
    %c2_i32_260 = arith.constant 2 : i32
    %702 = vector.broadcast %c2_i32_260 : i32 to vector<1x256xi32>
    %703 = arith.cmpi sge, %3, %702 : vector<1x256xi32>
    %704 = arith.andi %701, %703 : vector<1x256xi1>
    %c18_i32_261 = arith.constant 18 : i32
    %705 = vector.broadcast %c18_i32_261 : i32 to vector<1x256xi32>
    %706 = arith.cmpi slt, %3, %705 : vector<1x256xi32>
    %707 = arith.andi %704, %706 : vector<1x256xi1>
    %cst_262 = arith.constant 0.000000e+00 : f32
    %708 = vector.shape_cast %707 : vector<1x256xi1> to vector<1x256xi1>
    %709 = vector.broadcast %708 : vector<1x256xi1> to vector<2x256xi1>
    %710 = vector.broadcast %cst_262 : f32 to vector<2x256xf32>
    %711 = arith.select %709, %696, %710 : vector<2x256xi1>, vector<2x256xf32>
    %712 = arith.addf %692, %711 : vector<2x256xf32>
    %713 = vector.extract_strided_slice %251 {offsets = [0, 23], sizes = [2, 1], strides = [1, 1]} : vector<2x49xf32> to vector<2x1xf32>
    %c0_263 = arith.constant 0 : index
    %c127_264 = arith.constant 127 : index
    %714 = vector.load %arg15[%c0_263, %c127_264] : memref<2x512xf32, #tpu.memory_space<vmem>>, vector<2x256xf32>
    %715 = vector.broadcast %713 : vector<2x1xf32> to vector<2x256xf32>
    %716 = arith.mulf %715, %714 : vector<2x256xf32>
    %c0_i32_265 = arith.constant 0 : i32
    %717 = vector.broadcast %c0_i32_265 : i32 to vector<1x256xi32>
    %718 = arith.cmpi sge, %2, %717 : vector<1x256xi32>
    %c16_i32_266 = arith.constant 16 : i32
    %719 = vector.broadcast %c16_i32_266 : i32 to vector<1x256xi32>
    %720 = arith.cmpi slt, %2, %719 : vector<1x256xi32>
    %721 = arith.andi %718, %720 : vector<1x256xi1>
    %c1_i32_267 = arith.constant 1 : i32
    %722 = vector.broadcast %c1_i32_267 : i32 to vector<1x256xi32>
    %723 = arith.cmpi sge, %3, %722 : vector<1x256xi32>
    %724 = arith.andi %721, %723 : vector<1x256xi1>
    %c17_i32_268 = arith.constant 17 : i32
    %725 = vector.broadcast %c17_i32_268 : i32 to vector<1x256xi32>
    %726 = arith.cmpi slt, %3, %725 : vector<1x256xi32>
    %727 = arith.andi %724, %726 : vector<1x256xi1>
    %cst_269 = arith.constant 0.000000e+00 : f32
    %728 = vector.shape_cast %727 : vector<1x256xi1> to vector<1x256xi1>
    %729 = vector.broadcast %728 : vector<1x256xi1> to vector<2x256xi1>
    %730 = vector.broadcast %cst_269 : f32 to vector<2x256xf32>
    %731 = arith.select %729, %716, %730 : vector<2x256xi1>, vector<2x256xf32>
    %732 = arith.addf %712, %731 : vector<2x256xf32>
    %733 = vector.extract_strided_slice %251 {offsets = [0, 24], sizes = [2, 1], strides = [1, 1]} : vector<2x49xf32> to vector<2x1xf32>
    %c0_270 = arith.constant 0 : index
    %c128_271 = arith.constant 128 : index
    %734 = vector.load %arg15[%c0_270, %c128_271] : memref<2x512xf32, #tpu.memory_space<vmem>>, vector<2x256xf32>
    %735 = vector.broadcast %733 : vector<2x1xf32> to vector<2x256xf32>
    %736 = arith.mulf %735, %734 : vector<2x256xf32>
    %c0_i32_272 = arith.constant 0 : i32
    %737 = vector.broadcast %c0_i32_272 : i32 to vector<1x256xi32>
    %738 = arith.cmpi sge, %2, %737 : vector<1x256xi32>
    %c16_i32_273 = arith.constant 16 : i32
    %739 = vector.broadcast %c16_i32_273 : i32 to vector<1x256xi32>
    %740 = arith.cmpi slt, %2, %739 : vector<1x256xi32>
    %741 = arith.andi %738, %740 : vector<1x256xi1>
    %c0_i32_274 = arith.constant 0 : i32
    %742 = vector.broadcast %c0_i32_274 : i32 to vector<1x256xi32>
    %743 = arith.cmpi sge, %3, %742 : vector<1x256xi32>
    %744 = arith.andi %741, %743 : vector<1x256xi1>
    %c16_i32_275 = arith.constant 16 : i32
    %745 = vector.broadcast %c16_i32_275 : i32 to vector<1x256xi32>
    %746 = arith.cmpi slt, %3, %745 : vector<1x256xi32>
    %747 = arith.andi %744, %746 : vector<1x256xi1>
    %cst_276 = arith.constant 0.000000e+00 : f32
    %748 = vector.shape_cast %747 : vector<1x256xi1> to vector<1x256xi1>
    %749 = vector.broadcast %748 : vector<1x256xi1> to vector<2x256xi1>
    %750 = vector.broadcast %cst_276 : f32 to vector<2x256xf32>
    %751 = arith.select %749, %736, %750 : vector<2x256xi1>, vector<2x256xf32>
    %752 = arith.addf %732, %751 : vector<2x256xf32>
    %753 = vector.extract_strided_slice %251 {offsets = [0, 25], sizes = [2, 1], strides = [1, 1]} : vector<2x49xf32> to vector<2x1xf32>
    %c0_277 = arith.constant 0 : index
    %c129_278 = arith.constant 129 : index
    %754 = vector.load %arg15[%c0_277, %c129_278] : memref<2x512xf32, #tpu.memory_space<vmem>>, vector<2x256xf32>
    %755 = vector.broadcast %753 : vector<2x1xf32> to vector<2x256xf32>
    %756 = arith.mulf %755, %754 : vector<2x256xf32>
    %c0_i32_279 = arith.constant 0 : i32
    %757 = vector.broadcast %c0_i32_279 : i32 to vector<1x256xi32>
    %758 = arith.cmpi sge, %2, %757 : vector<1x256xi32>
    %c16_i32_280 = arith.constant 16 : i32
    %759 = vector.broadcast %c16_i32_280 : i32 to vector<1x256xi32>
    %760 = arith.cmpi slt, %2, %759 : vector<1x256xi32>
    %761 = arith.andi %758, %760 : vector<1x256xi1>
    %c-1_i32_281 = arith.constant -1 : i32
    %762 = vector.broadcast %c-1_i32_281 : i32 to vector<1x256xi32>
    %763 = arith.cmpi sge, %3, %762 : vector<1x256xi32>
    %764 = arith.andi %761, %763 : vector<1x256xi1>
    %c15_i32_282 = arith.constant 15 : i32
    %765 = vector.broadcast %c15_i32_282 : i32 to vector<1x256xi32>
    %766 = arith.cmpi slt, %3, %765 : vector<1x256xi32>
    %767 = arith.andi %764, %766 : vector<1x256xi1>
    %cst_283 = arith.constant 0.000000e+00 : f32
    %768 = vector.shape_cast %767 : vector<1x256xi1> to vector<1x256xi1>
    %769 = vector.broadcast %768 : vector<1x256xi1> to vector<2x256xi1>
    %770 = vector.broadcast %cst_283 : f32 to vector<2x256xf32>
    %771 = arith.select %769, %756, %770 : vector<2x256xi1>, vector<2x256xf32>
    %772 = arith.addf %752, %771 : vector<2x256xf32>
    %773 = vector.extract_strided_slice %251 {offsets = [0, 26], sizes = [2, 1], strides = [1, 1]} : vector<2x49xf32> to vector<2x1xf32>
    %c0_284 = arith.constant 0 : index
    %c130 = arith.constant 130 : index
    %774 = vector.load %arg15[%c0_284, %c130] : memref<2x512xf32, #tpu.memory_space<vmem>>, vector<2x256xf32>
    %775 = vector.broadcast %773 : vector<2x1xf32> to vector<2x256xf32>
    %776 = arith.mulf %775, %774 : vector<2x256xf32>
    %c0_i32_285 = arith.constant 0 : i32
    %777 = vector.broadcast %c0_i32_285 : i32 to vector<1x256xi32>
    %778 = arith.cmpi sge, %2, %777 : vector<1x256xi32>
    %c16_i32_286 = arith.constant 16 : i32
    %779 = vector.broadcast %c16_i32_286 : i32 to vector<1x256xi32>
    %780 = arith.cmpi slt, %2, %779 : vector<1x256xi32>
    %781 = arith.andi %778, %780 : vector<1x256xi1>
    %c-2_i32_287 = arith.constant -2 : i32
    %782 = vector.broadcast %c-2_i32_287 : i32 to vector<1x256xi32>
    %783 = arith.cmpi sge, %3, %782 : vector<1x256xi32>
    %784 = arith.andi %781, %783 : vector<1x256xi1>
    %c14_i32_288 = arith.constant 14 : i32
    %785 = vector.broadcast %c14_i32_288 : i32 to vector<1x256xi32>
    %786 = arith.cmpi slt, %3, %785 : vector<1x256xi32>
    %787 = arith.andi %784, %786 : vector<1x256xi1>
    %cst_289 = arith.constant 0.000000e+00 : f32
    %788 = vector.shape_cast %787 : vector<1x256xi1> to vector<1x256xi1>
    %789 = vector.broadcast %788 : vector<1x256xi1> to vector<2x256xi1>
    %790 = vector.broadcast %cst_289 : f32 to vector<2x256xf32>
    %791 = arith.select %789, %776, %790 : vector<2x256xi1>, vector<2x256xf32>
    %792 = arith.addf %772, %791 : vector<2x256xf32>
    %793 = vector.extract_strided_slice %251 {offsets = [0, 27], sizes = [2, 1], strides = [1, 1]} : vector<2x49xf32> to vector<2x1xf32>
    %c0_290 = arith.constant 0 : index
    %c131 = arith.constant 131 : index
    %794 = vector.load %arg15[%c0_290, %c131] : memref<2x512xf32, #tpu.memory_space<vmem>>, vector<2x256xf32>
    %795 = vector.broadcast %793 : vector<2x1xf32> to vector<2x256xf32>
    %796 = arith.mulf %795, %794 : vector<2x256xf32>
    %c0_i32_291 = arith.constant 0 : i32
    %797 = vector.broadcast %c0_i32_291 : i32 to vector<1x256xi32>
    %798 = arith.cmpi sge, %2, %797 : vector<1x256xi32>
    %c16_i32_292 = arith.constant 16 : i32
    %799 = vector.broadcast %c16_i32_292 : i32 to vector<1x256xi32>
    %800 = arith.cmpi slt, %2, %799 : vector<1x256xi32>
    %801 = arith.andi %798, %800 : vector<1x256xi1>
    %c-3_i32_293 = arith.constant -3 : i32
    %802 = vector.broadcast %c-3_i32_293 : i32 to vector<1x256xi32>
    %803 = arith.cmpi sge, %3, %802 : vector<1x256xi32>
    %804 = arith.andi %801, %803 : vector<1x256xi1>
    %c13_i32_294 = arith.constant 13 : i32
    %805 = vector.broadcast %c13_i32_294 : i32 to vector<1x256xi32>
    %806 = arith.cmpi slt, %3, %805 : vector<1x256xi32>
    %807 = arith.andi %804, %806 : vector<1x256xi1>
    %cst_295 = arith.constant 0.000000e+00 : f32
    %808 = vector.shape_cast %807 : vector<1x256xi1> to vector<1x256xi1>
    %809 = vector.broadcast %808 : vector<1x256xi1> to vector<2x256xi1>
    %810 = vector.broadcast %cst_295 : f32 to vector<2x256xf32>
    %811 = arith.select %809, %796, %810 : vector<2x256xi1>, vector<2x256xf32>
    %812 = arith.addf %792, %811 : vector<2x256xf32>
    %813 = vector.extract_strided_slice %251 {offsets = [0, 28], sizes = [2, 1], strides = [1, 1]} : vector<2x49xf32> to vector<2x1xf32>
    %c0_296 = arith.constant 0 : index
    %c141 = arith.constant 141 : index
    %814 = vector.load %arg15[%c0_296, %c141] : memref<2x512xf32, #tpu.memory_space<vmem>>, vector<2x256xf32>
    %815 = vector.broadcast %813 : vector<2x1xf32> to vector<2x256xf32>
    %816 = arith.mulf %815, %814 : vector<2x256xf32>
    %c-1_i32_297 = arith.constant -1 : i32
    %817 = vector.broadcast %c-1_i32_297 : i32 to vector<1x256xi32>
    %818 = arith.cmpi sge, %2, %817 : vector<1x256xi32>
    %c15_i32_298 = arith.constant 15 : i32
    %819 = vector.broadcast %c15_i32_298 : i32 to vector<1x256xi32>
    %820 = arith.cmpi slt, %2, %819 : vector<1x256xi32>
    %821 = arith.andi %818, %820 : vector<1x256xi1>
    %c3_i32_299 = arith.constant 3 : i32
    %822 = vector.broadcast %c3_i32_299 : i32 to vector<1x256xi32>
    %823 = arith.cmpi sge, %3, %822 : vector<1x256xi32>
    %824 = arith.andi %821, %823 : vector<1x256xi1>
    %c19_i32_300 = arith.constant 19 : i32
    %825 = vector.broadcast %c19_i32_300 : i32 to vector<1x256xi32>
    %826 = arith.cmpi slt, %3, %825 : vector<1x256xi32>
    %827 = arith.andi %824, %826 : vector<1x256xi1>
    %cst_301 = arith.constant 0.000000e+00 : f32
    %828 = vector.shape_cast %827 : vector<1x256xi1> to vector<1x256xi1>
    %829 = vector.broadcast %828 : vector<1x256xi1> to vector<2x256xi1>
    %830 = vector.broadcast %cst_301 : f32 to vector<2x256xf32>
    %831 = arith.select %829, %816, %830 : vector<2x256xi1>, vector<2x256xf32>
    %832 = arith.addf %812, %831 : vector<2x256xf32>
    %833 = vector.extract_strided_slice %251 {offsets = [0, 29], sizes = [2, 1], strides = [1, 1]} : vector<2x49xf32> to vector<2x1xf32>
    %c0_302 = arith.constant 0 : index
    %c142 = arith.constant 142 : index
    %834 = vector.load %arg15[%c0_302, %c142] : memref<2x512xf32, #tpu.memory_space<vmem>>, vector<2x256xf32>
    %835 = vector.broadcast %833 : vector<2x1xf32> to vector<2x256xf32>
    %836 = arith.mulf %835, %834 : vector<2x256xf32>
    %c-1_i32_303 = arith.constant -1 : i32
    %837 = vector.broadcast %c-1_i32_303 : i32 to vector<1x256xi32>
    %838 = arith.cmpi sge, %2, %837 : vector<1x256xi32>
    %c15_i32_304 = arith.constant 15 : i32
    %839 = vector.broadcast %c15_i32_304 : i32 to vector<1x256xi32>
    %840 = arith.cmpi slt, %2, %839 : vector<1x256xi32>
    %841 = arith.andi %838, %840 : vector<1x256xi1>
    %c2_i32_305 = arith.constant 2 : i32
    %842 = vector.broadcast %c2_i32_305 : i32 to vector<1x256xi32>
    %843 = arith.cmpi sge, %3, %842 : vector<1x256xi32>
    %844 = arith.andi %841, %843 : vector<1x256xi1>
    %c18_i32_306 = arith.constant 18 : i32
    %845 = vector.broadcast %c18_i32_306 : i32 to vector<1x256xi32>
    %846 = arith.cmpi slt, %3, %845 : vector<1x256xi32>
    %847 = arith.andi %844, %846 : vector<1x256xi1>
    %cst_307 = arith.constant 0.000000e+00 : f32
    %848 = vector.shape_cast %847 : vector<1x256xi1> to vector<1x256xi1>
    %849 = vector.broadcast %848 : vector<1x256xi1> to vector<2x256xi1>
    %850 = vector.broadcast %cst_307 : f32 to vector<2x256xf32>
    %851 = arith.select %849, %836, %850 : vector<2x256xi1>, vector<2x256xf32>
    %852 = arith.addf %832, %851 : vector<2x256xf32>
    %853 = vector.extract_strided_slice %251 {offsets = [0, 30], sizes = [2, 1], strides = [1, 1]} : vector<2x49xf32> to vector<2x1xf32>
    %c0_308 = arith.constant 0 : index
    %c143_309 = arith.constant 143 : index
    %854 = vector.load %arg15[%c0_308, %c143_309] : memref<2x512xf32, #tpu.memory_space<vmem>>, vector<2x256xf32>
    %855 = vector.broadcast %853 : vector<2x1xf32> to vector<2x256xf32>
    %856 = arith.mulf %855, %854 : vector<2x256xf32>
    %c-1_i32_310 = arith.constant -1 : i32
    %857 = vector.broadcast %c-1_i32_310 : i32 to vector<1x256xi32>
    %858 = arith.cmpi sge, %2, %857 : vector<1x256xi32>
    %c15_i32_311 = arith.constant 15 : i32
    %859 = vector.broadcast %c15_i32_311 : i32 to vector<1x256xi32>
    %860 = arith.cmpi slt, %2, %859 : vector<1x256xi32>
    %861 = arith.andi %858, %860 : vector<1x256xi1>
    %c1_i32_312 = arith.constant 1 : i32
    %862 = vector.broadcast %c1_i32_312 : i32 to vector<1x256xi32>
    %863 = arith.cmpi sge, %3, %862 : vector<1x256xi32>
    %864 = arith.andi %861, %863 : vector<1x256xi1>
    %c17_i32_313 = arith.constant 17 : i32
    %865 = vector.broadcast %c17_i32_313 : i32 to vector<1x256xi32>
    %866 = arith.cmpi slt, %3, %865 : vector<1x256xi32>
    %867 = arith.andi %864, %866 : vector<1x256xi1>
    %cst_314 = arith.constant 0.000000e+00 : f32
    %868 = vector.shape_cast %867 : vector<1x256xi1> to vector<1x256xi1>
    %869 = vector.broadcast %868 : vector<1x256xi1> to vector<2x256xi1>
    %870 = vector.broadcast %cst_314 : f32 to vector<2x256xf32>
    %871 = arith.select %869, %856, %870 : vector<2x256xi1>, vector<2x256xf32>
    %872 = arith.addf %852, %871 : vector<2x256xf32>
    %873 = vector.extract_strided_slice %251 {offsets = [0, 31], sizes = [2, 1], strides = [1, 1]} : vector<2x49xf32> to vector<2x1xf32>
    %c0_315 = arith.constant 0 : index
    %c144_316 = arith.constant 144 : index
    %874 = vector.load %arg15[%c0_315, %c144_316] : memref<2x512xf32, #tpu.memory_space<vmem>>, vector<2x256xf32>
    %875 = vector.broadcast %873 : vector<2x1xf32> to vector<2x256xf32>
    %876 = arith.mulf %875, %874 : vector<2x256xf32>
    %c-1_i32_317 = arith.constant -1 : i32
    %877 = vector.broadcast %c-1_i32_317 : i32 to vector<1x256xi32>
    %878 = arith.cmpi sge, %2, %877 : vector<1x256xi32>
    %c15_i32_318 = arith.constant 15 : i32
    %879 = vector.broadcast %c15_i32_318 : i32 to vector<1x256xi32>
    %880 = arith.cmpi slt, %2, %879 : vector<1x256xi32>
    %881 = arith.andi %878, %880 : vector<1x256xi1>
    %c0_i32_319 = arith.constant 0 : i32
    %882 = vector.broadcast %c0_i32_319 : i32 to vector<1x256xi32>
    %883 = arith.cmpi sge, %3, %882 : vector<1x256xi32>
    %884 = arith.andi %881, %883 : vector<1x256xi1>
    %c16_i32_320 = arith.constant 16 : i32
    %885 = vector.broadcast %c16_i32_320 : i32 to vector<1x256xi32>
    %886 = arith.cmpi slt, %3, %885 : vector<1x256xi32>
    %887 = arith.andi %884, %886 : vector<1x256xi1>
    %cst_321 = arith.constant 0.000000e+00 : f32
    %888 = vector.shape_cast %887 : vector<1x256xi1> to vector<1x256xi1>
    %889 = vector.broadcast %888 : vector<1x256xi1> to vector<2x256xi1>
    %890 = vector.broadcast %cst_321 : f32 to vector<2x256xf32>
    %891 = arith.select %889, %876, %890 : vector<2x256xi1>, vector<2x256xf32>
    %892 = arith.addf %872, %891 : vector<2x256xf32>
    %893 = vector.extract_strided_slice %251 {offsets = [0, 32], sizes = [2, 1], strides = [1, 1]} : vector<2x49xf32> to vector<2x1xf32>
    %c0_322 = arith.constant 0 : index
    %c145_323 = arith.constant 145 : index
    %894 = vector.load %arg15[%c0_322, %c145_323] : memref<2x512xf32, #tpu.memory_space<vmem>>, vector<2x256xf32>
    %895 = vector.broadcast %893 : vector<2x1xf32> to vector<2x256xf32>
    %896 = arith.mulf %895, %894 : vector<2x256xf32>
    %c-1_i32_324 = arith.constant -1 : i32
    %897 = vector.broadcast %c-1_i32_324 : i32 to vector<1x256xi32>
    %898 = arith.cmpi sge, %2, %897 : vector<1x256xi32>
    %c15_i32_325 = arith.constant 15 : i32
    %899 = vector.broadcast %c15_i32_325 : i32 to vector<1x256xi32>
    %900 = arith.cmpi slt, %2, %899 : vector<1x256xi32>
    %901 = arith.andi %898, %900 : vector<1x256xi1>
    %c-1_i32_326 = arith.constant -1 : i32
    %902 = vector.broadcast %c-1_i32_326 : i32 to vector<1x256xi32>
    %903 = arith.cmpi sge, %3, %902 : vector<1x256xi32>
    %904 = arith.andi %901, %903 : vector<1x256xi1>
    %c15_i32_327 = arith.constant 15 : i32
    %905 = vector.broadcast %c15_i32_327 : i32 to vector<1x256xi32>
    %906 = arith.cmpi slt, %3, %905 : vector<1x256xi32>
    %907 = arith.andi %904, %906 : vector<1x256xi1>
    %cst_328 = arith.constant 0.000000e+00 : f32
    %908 = vector.shape_cast %907 : vector<1x256xi1> to vector<1x256xi1>
    %909 = vector.broadcast %908 : vector<1x256xi1> to vector<2x256xi1>
    %910 = vector.broadcast %cst_328 : f32 to vector<2x256xf32>
    %911 = arith.select %909, %896, %910 : vector<2x256xi1>, vector<2x256xf32>
    %912 = arith.addf %892, %911 : vector<2x256xf32>
    %913 = vector.extract_strided_slice %251 {offsets = [0, 33], sizes = [2, 1], strides = [1, 1]} : vector<2x49xf32> to vector<2x1xf32>
    %c0_329 = arith.constant 0 : index
    %c146 = arith.constant 146 : index
    %914 = vector.load %arg15[%c0_329, %c146] : memref<2x512xf32, #tpu.memory_space<vmem>>, vector<2x256xf32>
    %915 = vector.broadcast %913 : vector<2x1xf32> to vector<2x256xf32>
    %916 = arith.mulf %915, %914 : vector<2x256xf32>
    %c-1_i32_330 = arith.constant -1 : i32
    %917 = vector.broadcast %c-1_i32_330 : i32 to vector<1x256xi32>
    %918 = arith.cmpi sge, %2, %917 : vector<1x256xi32>
    %c15_i32_331 = arith.constant 15 : i32
    %919 = vector.broadcast %c15_i32_331 : i32 to vector<1x256xi32>
    %920 = arith.cmpi slt, %2, %919 : vector<1x256xi32>
    %921 = arith.andi %918, %920 : vector<1x256xi1>
    %c-2_i32_332 = arith.constant -2 : i32
    %922 = vector.broadcast %c-2_i32_332 : i32 to vector<1x256xi32>
    %923 = arith.cmpi sge, %3, %922 : vector<1x256xi32>
    %924 = arith.andi %921, %923 : vector<1x256xi1>
    %c14_i32_333 = arith.constant 14 : i32
    %925 = vector.broadcast %c14_i32_333 : i32 to vector<1x256xi32>
    %926 = arith.cmpi slt, %3, %925 : vector<1x256xi32>
    %927 = arith.andi %924, %926 : vector<1x256xi1>
    %cst_334 = arith.constant 0.000000e+00 : f32
    %928 = vector.shape_cast %927 : vector<1x256xi1> to vector<1x256xi1>
    %929 = vector.broadcast %928 : vector<1x256xi1> to vector<2x256xi1>
    %930 = vector.broadcast %cst_334 : f32 to vector<2x256xf32>
    %931 = arith.select %929, %916, %930 : vector<2x256xi1>, vector<2x256xf32>
    %932 = arith.addf %912, %931 : vector<2x256xf32>
    %933 = vector.extract_strided_slice %251 {offsets = [0, 34], sizes = [2, 1], strides = [1, 1]} : vector<2x49xf32> to vector<2x1xf32>
    %c0_335 = arith.constant 0 : index
    %c147 = arith.constant 147 : index
    %934 = vector.load %arg15[%c0_335, %c147] : memref<2x512xf32, #tpu.memory_space<vmem>>, vector<2x256xf32>
    %935 = vector.broadcast %933 : vector<2x1xf32> to vector<2x256xf32>
    %936 = arith.mulf %935, %934 : vector<2x256xf32>
    %c-1_i32_336 = arith.constant -1 : i32
    %937 = vector.broadcast %c-1_i32_336 : i32 to vector<1x256xi32>
    %938 = arith.cmpi sge, %2, %937 : vector<1x256xi32>
    %c15_i32_337 = arith.constant 15 : i32
    %939 = vector.broadcast %c15_i32_337 : i32 to vector<1x256xi32>
    %940 = arith.cmpi slt, %2, %939 : vector<1x256xi32>
    %941 = arith.andi %938, %940 : vector<1x256xi1>
    %c-3_i32_338 = arith.constant -3 : i32
    %942 = vector.broadcast %c-3_i32_338 : i32 to vector<1x256xi32>
    %943 = arith.cmpi sge, %3, %942 : vector<1x256xi32>
    %944 = arith.andi %941, %943 : vector<1x256xi1>
    %c13_i32_339 = arith.constant 13 : i32
    %945 = vector.broadcast %c13_i32_339 : i32 to vector<1x256xi32>
    %946 = arith.cmpi slt, %3, %945 : vector<1x256xi32>
    %947 = arith.andi %944, %946 : vector<1x256xi1>
    %cst_340 = arith.constant 0.000000e+00 : f32
    %948 = vector.shape_cast %947 : vector<1x256xi1> to vector<1x256xi1>
    %949 = vector.broadcast %948 : vector<1x256xi1> to vector<2x256xi1>
    %950 = vector.broadcast %cst_340 : f32 to vector<2x256xf32>
    %951 = arith.select %949, %936, %950 : vector<2x256xi1>, vector<2x256xf32>
    %952 = arith.addf %932, %951 : vector<2x256xf32>
    %953 = vector.extract_strided_slice %251 {offsets = [0, 35], sizes = [2, 1], strides = [1, 1]} : vector<2x49xf32> to vector<2x1xf32>
    %c0_341 = arith.constant 0 : index
    %c157 = arith.constant 157 : index
    %954 = vector.load %arg15[%c0_341, %c157] : memref<2x512xf32, #tpu.memory_space<vmem>>, vector<2x256xf32>
    %955 = vector.broadcast %953 : vector<2x1xf32> to vector<2x256xf32>
    %956 = arith.mulf %955, %954 : vector<2x256xf32>
    %c-2_i32_342 = arith.constant -2 : i32
    %957 = vector.broadcast %c-2_i32_342 : i32 to vector<1x256xi32>
    %958 = arith.cmpi sge, %2, %957 : vector<1x256xi32>
    %c14_i32_343 = arith.constant 14 : i32
    %959 = vector.broadcast %c14_i32_343 : i32 to vector<1x256xi32>
    %960 = arith.cmpi slt, %2, %959 : vector<1x256xi32>
    %961 = arith.andi %958, %960 : vector<1x256xi1>
    %c3_i32_344 = arith.constant 3 : i32
    %962 = vector.broadcast %c3_i32_344 : i32 to vector<1x256xi32>
    %963 = arith.cmpi sge, %3, %962 : vector<1x256xi32>
    %964 = arith.andi %961, %963 : vector<1x256xi1>
    %c19_i32_345 = arith.constant 19 : i32
    %965 = vector.broadcast %c19_i32_345 : i32 to vector<1x256xi32>
    %966 = arith.cmpi slt, %3, %965 : vector<1x256xi32>
    %967 = arith.andi %964, %966 : vector<1x256xi1>
    %cst_346 = arith.constant 0.000000e+00 : f32
    %968 = vector.shape_cast %967 : vector<1x256xi1> to vector<1x256xi1>
    %969 = vector.broadcast %968 : vector<1x256xi1> to vector<2x256xi1>
    %970 = vector.broadcast %cst_346 : f32 to vector<2x256xf32>
    %971 = arith.select %969, %956, %970 : vector<2x256xi1>, vector<2x256xf32>
    %972 = arith.addf %952, %971 : vector<2x256xf32>
    %973 = vector.extract_strided_slice %251 {offsets = [0, 36], sizes = [2, 1], strides = [1, 1]} : vector<2x49xf32> to vector<2x1xf32>
    %c0_347 = arith.constant 0 : index
    %c158 = arith.constant 158 : index
    %974 = vector.load %arg15[%c0_347, %c158] : memref<2x512xf32, #tpu.memory_space<vmem>>, vector<2x256xf32>
    %975 = vector.broadcast %973 : vector<2x1xf32> to vector<2x256xf32>
    %976 = arith.mulf %975, %974 : vector<2x256xf32>
    %c-2_i32_348 = arith.constant -2 : i32
    %977 = vector.broadcast %c-2_i32_348 : i32 to vector<1x256xi32>
    %978 = arith.cmpi sge, %2, %977 : vector<1x256xi32>
    %c14_i32_349 = arith.constant 14 : i32
    %979 = vector.broadcast %c14_i32_349 : i32 to vector<1x256xi32>
    %980 = arith.cmpi slt, %2, %979 : vector<1x256xi32>
    %981 = arith.andi %978, %980 : vector<1x256xi1>
    %c2_i32_350 = arith.constant 2 : i32
    %982 = vector.broadcast %c2_i32_350 : i32 to vector<1x256xi32>
    %983 = arith.cmpi sge, %3, %982 : vector<1x256xi32>
    %984 = arith.andi %981, %983 : vector<1x256xi1>
    %c18_i32_351 = arith.constant 18 : i32
    %985 = vector.broadcast %c18_i32_351 : i32 to vector<1x256xi32>
    %986 = arith.cmpi slt, %3, %985 : vector<1x256xi32>
    %987 = arith.andi %984, %986 : vector<1x256xi1>
    %cst_352 = arith.constant 0.000000e+00 : f32
    %988 = vector.shape_cast %987 : vector<1x256xi1> to vector<1x256xi1>
    %989 = vector.broadcast %988 : vector<1x256xi1> to vector<2x256xi1>
    %990 = vector.broadcast %cst_352 : f32 to vector<2x256xf32>
    %991 = arith.select %989, %976, %990 : vector<2x256xi1>, vector<2x256xf32>
    %992 = arith.addf %972, %991 : vector<2x256xf32>
    %993 = vector.extract_strided_slice %251 {offsets = [0, 37], sizes = [2, 1], strides = [1, 1]} : vector<2x49xf32> to vector<2x1xf32>
    %c0_353 = arith.constant 0 : index
    %c159 = arith.constant 159 : index
    %994 = vector.load %arg15[%c0_353, %c159] : memref<2x512xf32, #tpu.memory_space<vmem>>, vector<2x256xf32>
    %995 = vector.broadcast %993 : vector<2x1xf32> to vector<2x256xf32>
    %996 = arith.mulf %995, %994 : vector<2x256xf32>
    %c-2_i32_354 = arith.constant -2 : i32
    %997 = vector.broadcast %c-2_i32_354 : i32 to vector<1x256xi32>
    %998 = arith.cmpi sge, %2, %997 : vector<1x256xi32>
    %c14_i32_355 = arith.constant 14 : i32
    %999 = vector.broadcast %c14_i32_355 : i32 to vector<1x256xi32>
    %1000 = arith.cmpi slt, %2, %999 : vector<1x256xi32>
    %1001 = arith.andi %998, %1000 : vector<1x256xi1>
    %c1_i32_356 = arith.constant 1 : i32
    %1002 = vector.broadcast %c1_i32_356 : i32 to vector<1x256xi32>
    %1003 = arith.cmpi sge, %3, %1002 : vector<1x256xi32>
    %1004 = arith.andi %1001, %1003 : vector<1x256xi1>
    %c17_i32_357 = arith.constant 17 : i32
    %1005 = vector.broadcast %c17_i32_357 : i32 to vector<1x256xi32>
    %1006 = arith.cmpi slt, %3, %1005 : vector<1x256xi32>
    %1007 = arith.andi %1004, %1006 : vector<1x256xi1>
    %cst_358 = arith.constant 0.000000e+00 : f32
    %1008 = vector.shape_cast %1007 : vector<1x256xi1> to vector<1x256xi1>
    %1009 = vector.broadcast %1008 : vector<1x256xi1> to vector<2x256xi1>
    %1010 = vector.broadcast %cst_358 : f32 to vector<2x256xf32>
    %1011 = arith.select %1009, %996, %1010 : vector<2x256xi1>, vector<2x256xf32>
    %1012 = arith.addf %992, %1011 : vector<2x256xf32>
    %1013 = vector.extract_strided_slice %251 {offsets = [0, 38], sizes = [2, 1], strides = [1, 1]} : vector<2x49xf32> to vector<2x1xf32>
    %c0_359 = arith.constant 0 : index
    %c160 = arith.constant 160 : index
    %1014 = vector.load %arg15[%c0_359, %c160] : memref<2x512xf32, #tpu.memory_space<vmem>>, vector<2x256xf32>
    %1015 = vector.broadcast %1013 : vector<2x1xf32> to vector<2x256xf32>
    %1016 = arith.mulf %1015, %1014 : vector<2x256xf32>
    %c-2_i32_360 = arith.constant -2 : i32
    %1017 = vector.broadcast %c-2_i32_360 : i32 to vector<1x256xi32>
    %1018 = arith.cmpi sge, %2, %1017 : vector<1x256xi32>
    %c14_i32_361 = arith.constant 14 : i32
    %1019 = vector.broadcast %c14_i32_361 : i32 to vector<1x256xi32>
    %1020 = arith.cmpi slt, %2, %1019 : vector<1x256xi32>
    %1021 = arith.andi %1018, %1020 : vector<1x256xi1>
    %c0_i32_362 = arith.constant 0 : i32
    %1022 = vector.broadcast %c0_i32_362 : i32 to vector<1x256xi32>
    %1023 = arith.cmpi sge, %3, %1022 : vector<1x256xi32>
    %1024 = arith.andi %1021, %1023 : vector<1x256xi1>
    %c16_i32_363 = arith.constant 16 : i32
    %1025 = vector.broadcast %c16_i32_363 : i32 to vector<1x256xi32>
    %1026 = arith.cmpi slt, %3, %1025 : vector<1x256xi32>
    %1027 = arith.andi %1024, %1026 : vector<1x256xi1>
    %cst_364 = arith.constant 0.000000e+00 : f32
    %1028 = vector.shape_cast %1027 : vector<1x256xi1> to vector<1x256xi1>
    %1029 = vector.broadcast %1028 : vector<1x256xi1> to vector<2x256xi1>
    %1030 = vector.broadcast %cst_364 : f32 to vector<2x256xf32>
    %1031 = arith.select %1029, %1016, %1030 : vector<2x256xi1>, vector<2x256xf32>
    %1032 = arith.addf %1012, %1031 : vector<2x256xf32>
    %1033 = vector.extract_strided_slice %251 {offsets = [0, 39], sizes = [2, 1], strides = [1, 1]} : vector<2x49xf32> to vector<2x1xf32>
    %c0_365 = arith.constant 0 : index
    %c161 = arith.constant 161 : index
    %1034 = vector.load %arg15[%c0_365, %c161] : memref<2x512xf32, #tpu.memory_space<vmem>>, vector<2x256xf32>
    %1035 = vector.broadcast %1033 : vector<2x1xf32> to vector<2x256xf32>
    %1036 = arith.mulf %1035, %1034 : vector<2x256xf32>
    %c-2_i32_366 = arith.constant -2 : i32
    %1037 = vector.broadcast %c-2_i32_366 : i32 to vector<1x256xi32>
    %1038 = arith.cmpi sge, %2, %1037 : vector<1x256xi32>
    %c14_i32_367 = arith.constant 14 : i32
    %1039 = vector.broadcast %c14_i32_367 : i32 to vector<1x256xi32>
    %1040 = arith.cmpi slt, %2, %1039 : vector<1x256xi32>
    %1041 = arith.andi %1038, %1040 : vector<1x256xi1>
    %c-1_i32_368 = arith.constant -1 : i32
    %1042 = vector.broadcast %c-1_i32_368 : i32 to vector<1x256xi32>
    %1043 = arith.cmpi sge, %3, %1042 : vector<1x256xi32>
    %1044 = arith.andi %1041, %1043 : vector<1x256xi1>
    %c15_i32_369 = arith.constant 15 : i32
    %1045 = vector.broadcast %c15_i32_369 : i32 to vector<1x256xi32>
    %1046 = arith.cmpi slt, %3, %1045 : vector<1x256xi32>
    %1047 = arith.andi %1044, %1046 : vector<1x256xi1>
    %cst_370 = arith.constant 0.000000e+00 : f32
    %1048 = vector.shape_cast %1047 : vector<1x256xi1> to vector<1x256xi1>
    %1049 = vector.broadcast %1048 : vector<1x256xi1> to vector<2x256xi1>
    %1050 = vector.broadcast %cst_370 : f32 to vector<2x256xf32>
    %1051 = arith.select %1049, %1036, %1050 : vector<2x256xi1>, vector<2x256xf32>
    %1052 = arith.addf %1032, %1051 : vector<2x256xf32>
    %1053 = vector.extract_strided_slice %251 {offsets = [0, 40], sizes = [2, 1], strides = [1, 1]} : vector<2x49xf32> to vector<2x1xf32>
    %c0_371 = arith.constant 0 : index
    %c162 = arith.constant 162 : index
    %1054 = vector.load %arg15[%c0_371, %c162] : memref<2x512xf32, #tpu.memory_space<vmem>>, vector<2x256xf32>
    %1055 = vector.broadcast %1053 : vector<2x1xf32> to vector<2x256xf32>
    %1056 = arith.mulf %1055, %1054 : vector<2x256xf32>
    %c-2_i32_372 = arith.constant -2 : i32
    %1057 = vector.broadcast %c-2_i32_372 : i32 to vector<1x256xi32>
    %1058 = arith.cmpi sge, %2, %1057 : vector<1x256xi32>
    %c14_i32_373 = arith.constant 14 : i32
    %1059 = vector.broadcast %c14_i32_373 : i32 to vector<1x256xi32>
    %1060 = arith.cmpi slt, %2, %1059 : vector<1x256xi32>
    %1061 = arith.andi %1058, %1060 : vector<1x256xi1>
    %c-2_i32_374 = arith.constant -2 : i32
    %1062 = vector.broadcast %c-2_i32_374 : i32 to vector<1x256xi32>
    %1063 = arith.cmpi sge, %3, %1062 : vector<1x256xi32>
    %1064 = arith.andi %1061, %1063 : vector<1x256xi1>
    %c14_i32_375 = arith.constant 14 : i32
    %1065 = vector.broadcast %c14_i32_375 : i32 to vector<1x256xi32>
    %1066 = arith.cmpi slt, %3, %1065 : vector<1x256xi32>
    %1067 = arith.andi %1064, %1066 : vector<1x256xi1>
    %cst_376 = arith.constant 0.000000e+00 : f32
    %1068 = vector.shape_cast %1067 : vector<1x256xi1> to vector<1x256xi1>
    %1069 = vector.broadcast %1068 : vector<1x256xi1> to vector<2x256xi1>
    %1070 = vector.broadcast %cst_376 : f32 to vector<2x256xf32>
    %1071 = arith.select %1069, %1056, %1070 : vector<2x256xi1>, vector<2x256xf32>
    %1072 = arith.addf %1052, %1071 : vector<2x256xf32>
    %1073 = vector.extract_strided_slice %251 {offsets = [0, 41], sizes = [2, 1], strides = [1, 1]} : vector<2x49xf32> to vector<2x1xf32>
    %c0_377 = arith.constant 0 : index
    %c163 = arith.constant 163 : index
    %1074 = vector.load %arg15[%c0_377, %c163] : memref<2x512xf32, #tpu.memory_space<vmem>>, vector<2x256xf32>
    %1075 = vector.broadcast %1073 : vector<2x1xf32> to vector<2x256xf32>
    %1076 = arith.mulf %1075, %1074 : vector<2x256xf32>
    %c-2_i32_378 = arith.constant -2 : i32
    %1077 = vector.broadcast %c-2_i32_378 : i32 to vector<1x256xi32>
    %1078 = arith.cmpi sge, %2, %1077 : vector<1x256xi32>
    %c14_i32_379 = arith.constant 14 : i32
    %1079 = vector.broadcast %c14_i32_379 : i32 to vector<1x256xi32>
    %1080 = arith.cmpi slt, %2, %1079 : vector<1x256xi32>
    %1081 = arith.andi %1078, %1080 : vector<1x256xi1>
    %c-3_i32_380 = arith.constant -3 : i32
    %1082 = vector.broadcast %c-3_i32_380 : i32 to vector<1x256xi32>
    %1083 = arith.cmpi sge, %3, %1082 : vector<1x256xi32>
    %1084 = arith.andi %1081, %1083 : vector<1x256xi1>
    %c13_i32_381 = arith.constant 13 : i32
    %1085 = vector.broadcast %c13_i32_381 : i32 to vector<1x256xi32>
    %1086 = arith.cmpi slt, %3, %1085 : vector<1x256xi32>
    %1087 = arith.andi %1084, %1086 : vector<1x256xi1>
    %cst_382 = arith.constant 0.000000e+00 : f32
    %1088 = vector.shape_cast %1087 : vector<1x256xi1> to vector<1x256xi1>
    %1089 = vector.broadcast %1088 : vector<1x256xi1> to vector<2x256xi1>
    %1090 = vector.broadcast %cst_382 : f32 to vector<2x256xf32>
    %1091 = arith.select %1089, %1076, %1090 : vector<2x256xi1>, vector<2x256xf32>
    %1092 = arith.addf %1072, %1091 : vector<2x256xf32>
    %1093 = vector.extract_strided_slice %251 {offsets = [0, 42], sizes = [2, 1], strides = [1, 1]} : vector<2x49xf32> to vector<2x1xf32>
    %c0_383 = arith.constant 0 : index
    %c173 = arith.constant 173 : index
    %1094 = vector.load %arg15[%c0_383, %c173] : memref<2x512xf32, #tpu.memory_space<vmem>>, vector<2x256xf32>
    %1095 = vector.broadcast %1093 : vector<2x1xf32> to vector<2x256xf32>
    %1096 = arith.mulf %1095, %1094 : vector<2x256xf32>
    %c-3_i32_384 = arith.constant -3 : i32
    %1097 = vector.broadcast %c-3_i32_384 : i32 to vector<1x256xi32>
    %1098 = arith.cmpi sge, %2, %1097 : vector<1x256xi32>
    %c13_i32_385 = arith.constant 13 : i32
    %1099 = vector.broadcast %c13_i32_385 : i32 to vector<1x256xi32>
    %1100 = arith.cmpi slt, %2, %1099 : vector<1x256xi32>
    %1101 = arith.andi %1098, %1100 : vector<1x256xi1>
    %c3_i32_386 = arith.constant 3 : i32
    %1102 = vector.broadcast %c3_i32_386 : i32 to vector<1x256xi32>
    %1103 = arith.cmpi sge, %3, %1102 : vector<1x256xi32>
    %1104 = arith.andi %1101, %1103 : vector<1x256xi1>
    %c19_i32_387 = arith.constant 19 : i32
    %1105 = vector.broadcast %c19_i32_387 : i32 to vector<1x256xi32>
    %1106 = arith.cmpi slt, %3, %1105 : vector<1x256xi32>
    %1107 = arith.andi %1104, %1106 : vector<1x256xi1>
    %cst_388 = arith.constant 0.000000e+00 : f32
    %1108 = vector.shape_cast %1107 : vector<1x256xi1> to vector<1x256xi1>
    %1109 = vector.broadcast %1108 : vector<1x256xi1> to vector<2x256xi1>
    %1110 = vector.broadcast %cst_388 : f32 to vector<2x256xf32>
    %1111 = arith.select %1109, %1096, %1110 : vector<2x256xi1>, vector<2x256xf32>
    %1112 = arith.addf %1092, %1111 : vector<2x256xf32>
    %1113 = vector.extract_strided_slice %251 {offsets = [0, 43], sizes = [2, 1], strides = [1, 1]} : vector<2x49xf32> to vector<2x1xf32>
    %c0_389 = arith.constant 0 : index
    %c174 = arith.constant 174 : index
    %1114 = vector.load %arg15[%c0_389, %c174] : memref<2x512xf32, #tpu.memory_space<vmem>>, vector<2x256xf32>
    %1115 = vector.broadcast %1113 : vector<2x1xf32> to vector<2x256xf32>
    %1116 = arith.mulf %1115, %1114 : vector<2x256xf32>
    %c-3_i32_390 = arith.constant -3 : i32
    %1117 = vector.broadcast %c-3_i32_390 : i32 to vector<1x256xi32>
    %1118 = arith.cmpi sge, %2, %1117 : vector<1x256xi32>
    %c13_i32_391 = arith.constant 13 : i32
    %1119 = vector.broadcast %c13_i32_391 : i32 to vector<1x256xi32>
    %1120 = arith.cmpi slt, %2, %1119 : vector<1x256xi32>
    %1121 = arith.andi %1118, %1120 : vector<1x256xi1>
    %c2_i32_392 = arith.constant 2 : i32
    %1122 = vector.broadcast %c2_i32_392 : i32 to vector<1x256xi32>
    %1123 = arith.cmpi sge, %3, %1122 : vector<1x256xi32>
    %1124 = arith.andi %1121, %1123 : vector<1x256xi1>
    %c18_i32_393 = arith.constant 18 : i32
    %1125 = vector.broadcast %c18_i32_393 : i32 to vector<1x256xi32>
    %1126 = arith.cmpi slt, %3, %1125 : vector<1x256xi32>
    %1127 = arith.andi %1124, %1126 : vector<1x256xi1>
    %cst_394 = arith.constant 0.000000e+00 : f32
    %1128 = vector.shape_cast %1127 : vector<1x256xi1> to vector<1x256xi1>
    %1129 = vector.broadcast %1128 : vector<1x256xi1> to vector<2x256xi1>
    %1130 = vector.broadcast %cst_394 : f32 to vector<2x256xf32>
    %1131 = arith.select %1129, %1116, %1130 : vector<2x256xi1>, vector<2x256xf32>
    %1132 = arith.addf %1112, %1131 : vector<2x256xf32>
    %1133 = vector.extract_strided_slice %251 {offsets = [0, 44], sizes = [2, 1], strides = [1, 1]} : vector<2x49xf32> to vector<2x1xf32>
    %c0_395 = arith.constant 0 : index
    %c175 = arith.constant 175 : index
    %1134 = vector.load %arg15[%c0_395, %c175] : memref<2x512xf32, #tpu.memory_space<vmem>>, vector<2x256xf32>
    %1135 = vector.broadcast %1133 : vector<2x1xf32> to vector<2x256xf32>
    %1136 = arith.mulf %1135, %1134 : vector<2x256xf32>
    %c-3_i32_396 = arith.constant -3 : i32
    %1137 = vector.broadcast %c-3_i32_396 : i32 to vector<1x256xi32>
    %1138 = arith.cmpi sge, %2, %1137 : vector<1x256xi32>
    %c13_i32_397 = arith.constant 13 : i32
    %1139 = vector.broadcast %c13_i32_397 : i32 to vector<1x256xi32>
    %1140 = arith.cmpi slt, %2, %1139 : vector<1x256xi32>
    %1141 = arith.andi %1138, %1140 : vector<1x256xi1>
    %c1_i32_398 = arith.constant 1 : i32
    %1142 = vector.broadcast %c1_i32_398 : i32 to vector<1x256xi32>
    %1143 = arith.cmpi sge, %3, %1142 : vector<1x256xi32>
    %1144 = arith.andi %1141, %1143 : vector<1x256xi1>
    %c17_i32_399 = arith.constant 17 : i32
    %1145 = vector.broadcast %c17_i32_399 : i32 to vector<1x256xi32>
    %1146 = arith.cmpi slt, %3, %1145 : vector<1x256xi32>
    %1147 = arith.andi %1144, %1146 : vector<1x256xi1>
    %cst_400 = arith.constant 0.000000e+00 : f32
    %1148 = vector.shape_cast %1147 : vector<1x256xi1> to vector<1x256xi1>
    %1149 = vector.broadcast %1148 : vector<1x256xi1> to vector<2x256xi1>
    %1150 = vector.broadcast %cst_400 : f32 to vector<2x256xf32>
    %1151 = arith.select %1149, %1136, %1150 : vector<2x256xi1>, vector<2x256xf32>
    %1152 = arith.addf %1132, %1151 : vector<2x256xf32>
    %1153 = vector.extract_strided_slice %251 {offsets = [0, 45], sizes = [2, 1], strides = [1, 1]} : vector<2x49xf32> to vector<2x1xf32>
    %c0_401 = arith.constant 0 : index
    %c176 = arith.constant 176 : index
    %1154 = vector.load %arg15[%c0_401, %c176] : memref<2x512xf32, #tpu.memory_space<vmem>>, vector<2x256xf32>
    %1155 = vector.broadcast %1153 : vector<2x1xf32> to vector<2x256xf32>
    %1156 = arith.mulf %1155, %1154 : vector<2x256xf32>
    %c-3_i32_402 = arith.constant -3 : i32
    %1157 = vector.broadcast %c-3_i32_402 : i32 to vector<1x256xi32>
    %1158 = arith.cmpi sge, %2, %1157 : vector<1x256xi32>
    %c13_i32_403 = arith.constant 13 : i32
    %1159 = vector.broadcast %c13_i32_403 : i32 to vector<1x256xi32>
    %1160 = arith.cmpi slt, %2, %1159 : vector<1x256xi32>
    %1161 = arith.andi %1158, %1160 : vector<1x256xi1>
    %c0_i32_404 = arith.constant 0 : i32
    %1162 = vector.broadcast %c0_i32_404 : i32 to vector<1x256xi32>
    %1163 = arith.cmpi sge, %3, %1162 : vector<1x256xi32>
    %1164 = arith.andi %1161, %1163 : vector<1x256xi1>
    %c16_i32_405 = arith.constant 16 : i32
    %1165 = vector.broadcast %c16_i32_405 : i32 to vector<1x256xi32>
    %1166 = arith.cmpi slt, %3, %1165 : vector<1x256xi32>
    %1167 = arith.andi %1164, %1166 : vector<1x256xi1>
    %cst_406 = arith.constant 0.000000e+00 : f32
    %1168 = vector.shape_cast %1167 : vector<1x256xi1> to vector<1x256xi1>
    %1169 = vector.broadcast %1168 : vector<1x256xi1> to vector<2x256xi1>
    %1170 = vector.broadcast %cst_406 : f32 to vector<2x256xf32>
    %1171 = arith.select %1169, %1156, %1170 : vector<2x256xi1>, vector<2x256xf32>
    %1172 = arith.addf %1152, %1171 : vector<2x256xf32>
    %1173 = vector.extract_strided_slice %251 {offsets = [0, 46], sizes = [2, 1], strides = [1, 1]} : vector<2x49xf32> to vector<2x1xf32>
    %c0_407 = arith.constant 0 : index
    %c177 = arith.constant 177 : index
    %1174 = vector.load %arg15[%c0_407, %c177] : memref<2x512xf32, #tpu.memory_space<vmem>>, vector<2x256xf32>
    %1175 = vector.broadcast %1173 : vector<2x1xf32> to vector<2x256xf32>
    %1176 = arith.mulf %1175, %1174 : vector<2x256xf32>
    %c-3_i32_408 = arith.constant -3 : i32
    %1177 = vector.broadcast %c-3_i32_408 : i32 to vector<1x256xi32>
    %1178 = arith.cmpi sge, %2, %1177 : vector<1x256xi32>
    %c13_i32_409 = arith.constant 13 : i32
    %1179 = vector.broadcast %c13_i32_409 : i32 to vector<1x256xi32>
    %1180 = arith.cmpi slt, %2, %1179 : vector<1x256xi32>
    %1181 = arith.andi %1178, %1180 : vector<1x256xi1>
    %c-1_i32_410 = arith.constant -1 : i32
    %1182 = vector.broadcast %c-1_i32_410 : i32 to vector<1x256xi32>
    %1183 = arith.cmpi sge, %3, %1182 : vector<1x256xi32>
    %1184 = arith.andi %1181, %1183 : vector<1x256xi1>
    %c15_i32_411 = arith.constant 15 : i32
    %1185 = vector.broadcast %c15_i32_411 : i32 to vector<1x256xi32>
    %1186 = arith.cmpi slt, %3, %1185 : vector<1x256xi32>
    %1187 = arith.andi %1184, %1186 : vector<1x256xi1>
    %cst_412 = arith.constant 0.000000e+00 : f32
    %1188 = vector.shape_cast %1187 : vector<1x256xi1> to vector<1x256xi1>
    %1189 = vector.broadcast %1188 : vector<1x256xi1> to vector<2x256xi1>
    %1190 = vector.broadcast %cst_412 : f32 to vector<2x256xf32>
    %1191 = arith.select %1189, %1176, %1190 : vector<2x256xi1>, vector<2x256xf32>
    %1192 = arith.addf %1172, %1191 : vector<2x256xf32>
    %1193 = vector.extract_strided_slice %251 {offsets = [0, 47], sizes = [2, 1], strides = [1, 1]} : vector<2x49xf32> to vector<2x1xf32>
    %c0_413 = arith.constant 0 : index
    %c178 = arith.constant 178 : index
    %1194 = vector.load %arg15[%c0_413, %c178] : memref<2x512xf32, #tpu.memory_space<vmem>>, vector<2x256xf32>
    %1195 = vector.broadcast %1193 : vector<2x1xf32> to vector<2x256xf32>
    %1196 = arith.mulf %1195, %1194 : vector<2x256xf32>
    %c-3_i32_414 = arith.constant -3 : i32
    %1197 = vector.broadcast %c-3_i32_414 : i32 to vector<1x256xi32>
    %1198 = arith.cmpi sge, %2, %1197 : vector<1x256xi32>
    %c13_i32_415 = arith.constant 13 : i32
    %1199 = vector.broadcast %c13_i32_415 : i32 to vector<1x256xi32>
    %1200 = arith.cmpi slt, %2, %1199 : vector<1x256xi32>
    %1201 = arith.andi %1198, %1200 : vector<1x256xi1>
    %c-2_i32_416 = arith.constant -2 : i32
    %1202 = vector.broadcast %c-2_i32_416 : i32 to vector<1x256xi32>
    %1203 = arith.cmpi sge, %3, %1202 : vector<1x256xi32>
    %1204 = arith.andi %1201, %1203 : vector<1x256xi1>
    %c14_i32_417 = arith.constant 14 : i32
    %1205 = vector.broadcast %c14_i32_417 : i32 to vector<1x256xi32>
    %1206 = arith.cmpi slt, %3, %1205 : vector<1x256xi32>
    %1207 = arith.andi %1204, %1206 : vector<1x256xi1>
    %cst_418 = arith.constant 0.000000e+00 : f32
    %1208 = vector.shape_cast %1207 : vector<1x256xi1> to vector<1x256xi1>
    %1209 = vector.broadcast %1208 : vector<1x256xi1> to vector<2x256xi1>
    %1210 = vector.broadcast %cst_418 : f32 to vector<2x256xf32>
    %1211 = arith.select %1209, %1196, %1210 : vector<2x256xi1>, vector<2x256xf32>
    %1212 = arith.addf %1192, %1211 : vector<2x256xf32>
    %1213 = vector.extract_strided_slice %251 {offsets = [0, 48], sizes = [2, 1], strides = [1, 1]} : vector<2x49xf32> to vector<2x1xf32>
    %c0_419 = arith.constant 0 : index
    %c179 = arith.constant 179 : index
    %1214 = vector.load %arg15[%c0_419, %c179] : memref<2x512xf32, #tpu.memory_space<vmem>>, vector<2x256xf32>
    %1215 = vector.broadcast %1213 : vector<2x1xf32> to vector<2x256xf32>
    %1216 = arith.mulf %1215, %1214 : vector<2x256xf32>
    %c-3_i32_420 = arith.constant -3 : i32
    %1217 = vector.broadcast %c-3_i32_420 : i32 to vector<1x256xi32>
    %1218 = arith.cmpi sge, %2, %1217 : vector<1x256xi32>
    %c13_i32_421 = arith.constant 13 : i32
    %1219 = vector.broadcast %c13_i32_421 : i32 to vector<1x256xi32>
    %1220 = arith.cmpi slt, %2, %1219 : vector<1x256xi32>
    %1221 = arith.andi %1218, %1220 : vector<1x256xi1>
    %c-3_i32_422 = arith.constant -3 : i32
    %1222 = vector.broadcast %c-3_i32_422 : i32 to vector<1x256xi32>
    %1223 = arith.cmpi sge, %3, %1222 : vector<1x256xi32>
    %1224 = arith.andi %1221, %1223 : vector<1x256xi1>
    %c13_i32_423 = arith.constant 13 : i32
    %1225 = vector.broadcast %c13_i32_423 : i32 to vector<1x256xi32>
    %1226 = arith.cmpi slt, %3, %1225 : vector<1x256xi32>
    %1227 = arith.andi %1224, %1226 : vector<1x256xi1>
    %cst_424 = arith.constant 0.000000e+00 : f32
    %1228 = vector.shape_cast %1227 : vector<1x256xi1> to vector<1x256xi1>
    %1229 = vector.broadcast %1228 : vector<1x256xi1> to vector<2x256xi1>
    %1230 = vector.broadcast %cst_424 : f32 to vector<2x256xf32>
    %1231 = arith.select %1229, %1216, %1230 : vector<2x256xi1>, vector<2x256xf32>
    %1232 = arith.addf %1212, %1231 : vector<2x256xf32>
    %1233 = vector.extract_strided_slice %1232 {offsets = [0, 0], sizes = [1, 256], strides = [1, 1]} : vector<2x256xf32> to vector<1x256xf32>
    %1234 = vector.extract_strided_slice %1232 {offsets = [1, 0], sizes = [1, 256], strides = [1, 1]} : vector<2x256xf32> to vector<1x256xf32>
    %1235 = arith.addf %1233, %1234 : vector<1x256xf32>
    %cst_425 = arith.constant 0.000000e+00 : f32
    %1236 = vector.broadcast %cst_425 : f32 to vector<1x256xf32>
    %1237 = arith.subf %1236, %1235 : vector<1x256xf32>
    %1238 = math.exp %1237 : vector<1x256xf32>
    %cst_426 = arith.constant 1.000000e+00 : f32
    %1239 = vector.broadcast %cst_426 : f32 to vector<1x256xf32>
    %1240 = arith.addf %1239, %1238 : vector<1x256xf32>
    %cst_427 = arith.constant 1.000000e+00 : f32
    %1241 = vector.broadcast %cst_427 : f32 to vector<1x256xf32>
    %1242 = arith.divf %1241, %1240 : vector<1x256xf32>
    %1243 = vector.broadcast %1242 : vector<1x256xf32> to vector<16x256xf32>
    %1244 = arith.mulf %240, %1243 : vector<16x256xf32>
    %1245 = arith.addf %1244, %1 : vector<16x256xf32>
    %cst_428 = arith.constant 0.000000e+00 : f32
    %1246 = vector.broadcast %cst_428 : f32 to vector<16x256xf32>
    %1247 = arith.maximumf %1245, %1246 : vector<16x256xf32>
    %c0_429 = arith.constant 0 : index
    %c0_430 = arith.constant 0 : index
    %c0_431 = arith.constant 0 : index
    %1248 = vector.load %arg13[%c0_429, %c0_430, %c0_431] : memref<1x16x256xf32, #tpu.memory_space<vmem>>, vector<1x16x256xf32>
    %1249 = vector.shape_cast %1248 : vector<1x16x256xf32> to vector<16x256xf32>
    %1250 = vector.shape_cast %1247 : vector<16x256xf32> to vector<1x16x256xf32>
    tpu.vector_store %arg13[%c0_429, %c0_430, %c0_431], %1250 {strides = array<i32>} : memref<1x16x256xf32, #tpu.memory_space<vmem>>, vector<1x16x256xf32>,
    return
  }
  func.func @transform_0(%arg0: i32) -> (i32, i32, i32) {
    %c0_i32 = arith.constant 0 : i32
    %c0_i32_0 = arith.constant 0 : i32
    %c0_i32_1 = arith.constant 0 : i32
    return %arg0, %c0_i32, %c0_i32_0 : i32, i32, i32
  }
  func.func @transform_1(%arg0: i32) -> (i32, i32) {
    %c0_i32 = arith.constant 0 : i32
    %c0_i32_0 = arith.constant 0 : i32
    %c0_i32_1 = arith.constant 0 : i32
    return %c0_i32, %c0_i32_0 : i32, i32
  }
  func.func @transform_2(%arg0: i32) -> (i32, i32) {
    %c0_i32 = arith.constant 0 : i32
    %c0_i32_0 = arith.constant 0 : i32
    %c0_i32_1 = arith.constant 0 : i32
    return %c0_i32, %c0_i32_0 : i32, i32
  }
  func.func @transform_3(%arg0: i32) -> (i32, i32) {
    %c0_i32 = arith.constant 0 : i32
    %c0_i32_0 = arith.constant 0 : i32
    %c0_i32_1 = arith.constant 0 : i32
    return %c0_i32, %c0_i32_0 : i32, i32
  }
  func.func @transform_4(%arg0: i32) -> (i32, i32) {
    %c0_i32 = arith.constant 0 : i32
    %c0_i32_0 = arith.constant 0 : i32
    %c0_i32_1 = arith.constant 0 : i32
    return %c0_i32, %c0_i32_0 : i32, i32
  }
  func.func @transform_5(%arg0: i32) -> (i32, i32, i32) {
    %c0_i32 = arith.constant 0 : i32
    %c0_i32_0 = arith.constant 0 : i32
    %c0_i32_1 = arith.constant 0 : i32
    %c0_i32_2 = arith.constant 0 : i32
    return %c0_i32, %c0_i32_0, %c0_i32_1 : i32, i32, i32
  }
  func.func @transform_6(%arg0: i32) -> (i32, i32) {
    %c0_i32 = arith.constant 0 : i32
    %c0_i32_0 = arith.constant 0 : i32
    %c0_i32_1 = arith.constant 0 : i32
    return %c0_i32, %c0_i32_0 : i32, i32
  }
  func.func @transform_7(%arg0: i32) -> (i32, i32) {
    %c0_i32 = arith.constant 0 : i32
    %c0_i32_0 = arith.constant 0 : i32
    %c0_i32_1 = arith.constant 0 : i32
    return %c0_i32, %c0_i32_0 : i32, i32
  }
  func.func @transform_8(%arg0: i32) -> (i32, i32) {
    %c0_i32 = arith.constant 0 : i32
    %c0_i32_0 = arith.constant 0 : i32
    %c0_i32_1 = arith.constant 0 : i32
    return %c0_i32, %c0_i32_0 : i32, i32
  }
  func.func @transform_9(%arg0: i32) -> (i32, i32) {
    %c0_i32 = arith.constant 0 : i32
    %c0_i32_0 = arith.constant 0 : i32
    %c0_i32_1 = arith.constant 0 : i32
    return %c0_i32, %c0_i32_0 : i32, i32
  }
  func.func @transform_10(%arg0: i32) -> (i32, i32) {
    %c0_i32 = arith.constant 0 : i32
    %c0_i32_0 = arith.constant 0 : i32
    %c0_i32_1 = arith.constant 0 : i32
    return %c0_i32, %c0_i32_0 : i32, i32
  }
  func.func @transform_11(%arg0: i32) -> (i32, i32) {
    %c0_i32 = arith.constant 0 : i32
    %c0_i32_0 = arith.constant 0 : i32
    %c0_i32_1 = arith.constant 0 : i32
    return %c0_i32, %c0_i32_0 : i32, i32
  }
  func.func @transform_12(%arg0: i32) -> (i32, i32, i32) {
    %c0_i32 = arith.constant 0 : i32
    %c0_i32_0 = arith.constant 0 : i32
    %c0_i32_1 = arith.constant 0 : i32
    return %arg0, %c0_i32, %c0_i32_0 : i32, i32, i32
  }
}

</mosaic_0001>

<llo_original>
// kernel: bottleneck_forward.1
$region0: #{bottleneck_forward.1}
  #allocation0 [shape = 'u32[]', space=smem, size = 0x4, offset = 0x4, fixed_abs, tag = 'smem constant byte address 0x4 - core index']
  #allocation1 [shape = 'u32[144,128]{1,0:T(1,128)}', space=vmem, size = 0x12000, scoped, tag = 'internal scratch']
  #allocation2 [shape = 'f32[4,512]{1,0:T(4,128)}', space=vmem, size = 0x2000, scoped, tag = 'scratch operand']
  #allocation3 [shape = 'f32[2,512]{1,0:T(2,128)}', space=vmem, size = 0x1000, scoped, tag = 'scratch operand']
  %s0 = inlined_call_operand.vmem [shape: f32[2,16,256], index: 0, kind: input, shape index: {}]
  %s1 = inlined_call_operand.vmem [shape: s32[1,256], index: 1, kind: input, shape index: {}]
  %s2 = inlined_call_operand.vmem [shape: s32[1,256], index: 2, kind: input, shape index: {}]
  %s3 = inlined_call_operand.vmem [shape: f32[4,16], index: 3, kind: input, shape index: {}]
  %s4 = inlined_call_operand.vmem [shape: f32[4,1], index: 4, kind: input, shape index: {}]
  %s5 = inlined_call_operand.vmem [shape: f32[9,4,4], index: 5, kind: input, shape index: {}]
  %s6 = inlined_call_operand.vmem [shape: f32[4,1], index: 6, kind: input, shape index: {}]
  %s7 = inlined_call_operand.vmem [shape: f32[16,4], index: 7, kind: input, shape index: {}]
  %s8 = inlined_call_operand.vmem [shape: f32[16,1], index: 8, kind: input, shape index: {}]
  %s9 = inlined_call_operand.vmem [shape: f32[16,1], index: 9, kind: input, shape index: {}]
  %s10 = inlined_call_operand.vmem [shape: f32[16,1], index: 10, kind: input, shape index: {}]
  %s11 = inlined_call_operand.vmem [shape: f32[2,49], index: 11, kind: input, shape index: {}]
  %s12 = inlined_call_operand.vmem [shape: f32[2,16,256], index: 12, kind: output, shape index: {}]
  %s13 = sld [smem:[#allocation0]]
  $region81: #{bottleneck_forward.1} parent=0
    _
  %s15 = ssub.s32 1, %s13
  %s16 = scalar_select 0, %s15, %s13
  loop: start=0, step=1, limit=4
  $region2: #{bottleneck_forward.1} parent=0 // loop_pre_header
    _
  $region3: #{bottleneck_forward.1} parent=0 // loop_header
    %s18 = sphi 0, %s22
    %p19 = scmp.ge.s32.totalorder %s18, 4
    %s28 = sphi 0, %s30
    %s31 = sphi 0, %s28
    %s32 = sphi 0, %s31
    %s48 = sphi 0, %s32
    %s52 = sphi 0, %s52
    %s54 = sphi 0, %s52
    %s55 = sphi 0, %s54
    %s69 = sphi 0, %s55
    %s73 = sphi 0, %s73
    %s75 = sphi 0, %s73
    %s76 = sphi 0, %s75
    %s90 = sphi 0, %s76
    %s94 = sphi 0, %s94
    %s96 = sphi 0, %s94
    %s97 = sphi 0, %s96
    %s111 = sphi 0, %s97
    %s115 = sphi 0, %s115
    %s117 = sphi 0, %s115
    %s118 = sphi 0, %s117
    %s132 = sphi 0, %s118
    %s136 = sphi 0, %s136
    %s138 = sphi 0, %s136
    %s139 = sphi 0, %s138
    %s153 = sphi 0, %s139
    %s157 = sphi 0, %s157
    %s159 = sphi 0, %s157
    %s160 = sphi 0, %s159
    %s174 = sphi 0, %s160
    %s178 = sphi 0, %s178
    %s180 = sphi 0, %s178
    %s181 = sphi 0, %s180
    %s195 = sphi 0, %s181
    %s199 = sphi 0, %s199
    %s201 = sphi 0, %s199
    %s202 = sphi 0, %s201
    %s216 = sphi 0, %s202
    %s220 = sphi 0, %s220
    %s222 = sphi 0, %s220
    %s223 = sphi 0, %s222
    %s237 = sphi 0, %s223
    %s241 = sphi 0, %s241
    %s243 = sphi 0, %s241
    %s244 = sphi 0, %s243
    %s258 = sphi 0, %s244
    %s262 = sphi 0, %s262
    %s264 = sphi 0, %s262
    %s265 = sphi 0, %s264
    %s279 = sphi 0, %s265
    %s285 = sphi 0, %s287
    %s288 = sphi 0, %s285
    %s289 = sphi 0, %s288
    %s305 = sphi 0, %s289
  $region4: #{bottleneck_forward.1} parent=0 // loop_header_branch
    %21 = sbr.rel (%p19) target = $region8
  $region5: #{bottleneck_forward.1} parent=0 // loop_body
    %s23 = ssub.s32 %s18, 1
    %s24 = ssub.s32 %s18, 2
    %s25 = sadd.s32 %s18, 1
    %s26 = ssub.s32 %s18, %s25
    %p27 = scmp.eq.s32.totalorder %s26, 0
    %s29 = sadd.s32 %s28, 1
    %s30 = scalar_select %p27, %s28, %s29
    %p33 = pneg %p27
    %p34 = scmp.eq.s32.totalorder %s18, 1
    %p35 = por %p33, %p34
    %p36 = scmp.ne.s32.totalorder %s28, %s31
    %p37 = scmp.eq.s32.totalorder %s18, 0
    %p38 = por %p36, %p37
    %p39 = scmp.ne.s32.totalorder %s28, %s31
    %p40 = scmp.eq.s32.totalorder %s23, 1
    %p41 = por %p39, %p40
    %p42 = scmp.ne.s32.totalorder %s31, %s32
    %p43 = scmp.eq.s32.totalorder %s23, 0
    %p44 = por %p42, %p43
    %p45 = scmp.ne.s32.totalorder %s31, %s32
    %p46 = scmp.eq.s32.totalorder %s24, 1
    %p47 = por %p45, %p46
    %p49 = scmp.ne.s32.totalorder %s32, %s48
    %p50 = scmp.eq.s32.totalorder %s24, 0
    %p51 = por %p49, %p50
    %s53 = sadd.s32 %s52, 1
    %p56 = scmp.eq.s32.totalorder %s18, 1
    %p57 = scmp.ne.s32.totalorder %s52, %s54
    %p58 = scmp.eq.s32.totalorder %s18, 0
    %p59 = por %p57, %p58
    %p60 = scmp.ne.s32.totalorder %s52, %s54
    %p61 = scmp.eq.s32.totalorder %s23, 1
    %p62 = por %p60, %p61
    %p63 = scmp.ne.s32.totalorder %s54, %s55
    %p64 = scmp.eq.s32.totalorder %s23, 0
    %p65 = por %p63, %p64
    %p66 = scmp.ne.s32.totalorder %s54, %s55
    %p67 = scmp.eq.s32.totalorder %s24, 1
    %p68 = por %p66, %p67
    %p70 = scmp.ne.s32.totalorder %s55, %s69
    %p71 = scmp.eq.s32.totalorder %s24, 0
    %p72 = por %p70, %p71
    %s74 = sadd.s32 %s73, 1
    %p77 = scmp.eq.s32.totalorder %s18, 1
    %p78 = scmp.ne.s32.totalorder %s73, %s75
    %p79 = scmp.eq.s32.totalorder %s18, 0
    %p80 = por %p78, %p79
    %p81 = scmp.ne.s32.totalorder %s73, %s75
    %p82 = scmp.eq.s32.totalorder %s23, 1
    %p83 = por %p81, %p82
    %p84 = scmp.ne.s32.totalorder %s75, %s76
    %p85 = scmp.eq.s32.totalorder %s23, 0
    %p86 = por %p84, %p85
    %p87 = scmp.ne.s32.totalorder %s75, %s76
    %p88 = scmp.eq.s32.totalorder %s24, 1
    %p89 = por %p87, %p88
    %p91 = scmp.ne.s32.totalorder %s76, %s90
    %p92 = scmp.eq.s32.totalorder %s24, 0
    %p93 = por %p91, %p92
    %s95 = sadd.s32 %s94, 1
    %p98 = scmp.eq.s32.totalorder %s18, 1
    %p99 = scmp.ne.s32.totalorder %s94, %s96
    %p100 = scmp.eq.s32.totalorder %s18, 0
    %p101 = por %p99, %p100
    %p102 = scmp.ne.s32.totalorder %s94, %s96
    %p103 = scmp.eq.s32.totalorder %s23, 1
    %p104 = por %p102, %p103
    %p105 = scmp.ne.s32.totalorder %s96, %s97
    %p106 = scmp.eq.s32.totalorder %s23, 0
    %p107 = por %p105, %p106
    %p108 = scmp.ne.s32.totalorder %s96, %s97
    %p109 = scmp.eq.s32.totalorder %s24, 1
    %p110 = por %p108, %p109
    %p112 = scmp.ne.s32.totalorder %s97, %s111
    %p113 = scmp.eq.s32.totalorder %s24, 0
    %p114 = por %p112, %p113
    %s116 = sadd.s32 %s115, 1
    %p119 = scmp.eq.s32.totalorder %s18, 1
    %p120 = scmp.ne.s32.totalorder %s115, %s117
    %p121 = scmp.eq.s32.totalorder %s18, 0
    %p122 = por %p120, %p121
    %p123 = scmp.ne.s32.totalorder %s115, %s117
    %p124 = scmp.eq.s32.totalorder %s23, 1
    %p125 = por %p123, %p124
    %p126 = scmp.ne.s32.totalorder %s117, %s118
    %p127 = scmp.eq.s32.totalorder %s23, 0
    %p128 = por %p126, %p127
    %p129 = scmp.ne.s32.totalorder %s117, %s118
    %p130 = scmp.eq.s32.totalorder %s24, 1
    %p131 = por %p129, %p130
    %p133 = scmp.ne.s32.totalorder %s118, %s132
    %p134 = scmp.eq.s32.totalorder %s24, 0
    %p135 = por %p133, %p134
    %s137 = sadd.s32 %s136, 1
    %p140 = scmp.eq.s32.totalorder %s18, 1
    %p141 = scmp.ne.s32.totalorder %s136, %s138
    %p142 = scmp.eq.s32.totalorder %s18, 0
    %p143 = por %p141, %p142
    %p144 = scmp.ne.s32.totalorder %s136, %s138
    %p145 = scmp.eq.s32.totalorder %s23, 1
    %p146 = por %p144, %p145
    %p147 = scmp.ne.s32.totalorder %s138, %s139
    %p148 = scmp.eq.s32.totalorder %s23, 0
    %p149 = por %p147, %p148
    %p150 = scmp.ne.s32.totalorder %s138, %s139
    %p151 = scmp.eq.s32.totalorder %s24, 1
    %p152 = por %p150, %p151
    %p154 = scmp.ne.s32.totalorder %s139, %s153
    %p155 = scmp.eq.s32.totalorder %s24, 0
    %p156 = por %p154, %p155
    %s158 = sadd.s32 %s157, 1
    %p161 = scmp.eq.s32.totalorder %s18, 1
    %p162 = scmp.ne.s32.totalorder %s157, %s159
    %p163 = scmp.eq.s32.totalorder %s18, 0
    %p164 = por %p162, %p163
    %p165 = scmp.ne.s32.totalorder %s157, %s159
    %p166 = scmp.eq.s32.totalorder %s23, 1
    %p167 = por %p165, %p166
    %p168 = scmp.ne.s32.totalorder %s159, %s160
    %p169 = scmp.eq.s32.totalorder %s23, 0
    %p170 = por %p168, %p169
    %p171 = scmp.ne.s32.totalorder %s159, %s160
    %p172 = scmp.eq.s32.totalorder %s24, 1
    %p173 = por %p171, %p172
    %p175 = scmp.ne.s32.totalorder %s160, %s174
    %p176 = scmp.eq.s32.totalorder %s24, 0
    %p177 = por %p175, %p176
    %s179 = sadd.s32 %s178, 1
    %p182 = scmp.eq.s32.totalorder %s18, 1
    %p183 = scmp.ne.s32.totalorder %s178, %s180
    %p184 = scmp.eq.s32.totalorder %s18, 0
    %p185 = por %p183, %p184
    %p186 = scmp.ne.s32.totalorder %s178, %s180
    %p187 = scmp.eq.s32.totalorder %s23, 1
    %p188 = por %p186, %p187
    %p189 = scmp.ne.s32.totalorder %s180, %s181
    %p190 = scmp.eq.s32.totalorder %s23, 0
    %p191 = por %p189, %p190
    %p192 = scmp.ne.s32.totalorder %s180, %s181
    %p193 = scmp.eq.s32.totalorder %s24, 1
    %p194 = por %p192, %p193
    %p196 = scmp.ne.s32.totalorder %s181, %s195
    %p197 = scmp.eq.s32.totalorder %s24, 0
    %p198 = por %p196, %p197
    %s200 = sadd.s32 %s199, 1
    %p203 = scmp.eq.s32.totalorder %s18, 1
    %p204 = scmp.ne.s32.totalorder %s199, %s201
    %p205 = scmp.eq.s32.totalorder %s18, 0
    %p206 = por %p204, %p205
    %p207 = scmp.ne.s32.totalorder %s199, %s201
    %p208 = scmp.eq.s32.totalorder %s23, 1
    %p209 = por %p207, %p208
    %p210 = scmp.ne.s32.totalorder %s201, %s202
    %p211 = scmp.eq.s32.totalorder %s23, 0
    %p212 = por %p210, %p211
    %p213 = scmp.ne.s32.totalorder %s201, %s202
    %p214 = scmp.eq.s32.totalorder %s24, 1
    %p215 = por %p213, %p214
    %p217 = scmp.ne.s32.totalorder %s202, %s216
    %p218 = scmp.eq.s32.totalorder %s24, 0
    %p219 = por %p217, %p218
    %s221 = sadd.s32 %s220, 1
    %p224 = scmp.eq.s32.totalorder %s18, 1
    %p225 = scmp.ne.s32.totalorder %s220, %s222
    %p226 = scmp.eq.s32.totalorder %s18, 0
    %p227 = por %p225, %p226
    %p228 = scmp.ne.s32.totalorder %s220, %s222
    %p229 = scmp.eq.s32.totalorder %s23, 1
    %p230 = por %p228, %p229
    %p231 = scmp.ne.s32.totalorder %s222, %s223
    %p232 = scmp.eq.s32.totalorder %s23, 0
    %p233 = por %p231, %p232
    %p234 = scmp.ne.s32.totalorder %s222, %s223
    %p235 = scmp.eq.s32.totalorder %s24, 1
    %p236 = por %p234, %p235
    %p238 = scmp.ne.s32.totalorder %s223, %s237
    %p239 = scmp.eq.s32.totalorder %s24, 0
    %p240 = por %p238, %p239
    %s242 = sadd.s32 %s241, 1
    %p245 = scmp.eq.s32.totalorder %s18, 1
    %p246 = scmp.ne.s32.totalorder %s241, %s243
    %p247 = scmp.eq.s32.totalorder %s18, 0
    %p248 = por %p246, %p247
    %p249 = scmp.ne.s32.totalorder %s241, %s243
    %p250 = scmp.eq.s32.totalorder %s23, 1
    %p251 = por %p249, %p250
    %p252 = scmp.ne.s32.totalorder %s243, %s244
    %p253 = scmp.eq.s32.totalorder %s23, 0
    %p254 = por %p252, %p253
    %p255 = scmp.ne.s32.totalorder %s243, %s244
    %p256 = scmp.eq.s32.totalorder %s24, 1
    %p257 = por %p255, %p256
    %p259 = scmp.ne.s32.totalorder %s244, %s258
    %p260 = scmp.eq.s32.totalorder %s24, 0
    %p261 = por %p259, %p260
    %s263 = sadd.s32 %s262, 1
    %p266 = scmp.eq.s32.totalorder %s18, 1
    %p267 = scmp.ne.s32.totalorder %s262, %s264
    %p268 = scmp.eq.s32.totalorder %s18, 0
    %p269 = por %p267, %p268
    %p270 = scmp.ne.s32.totalorder %s262, %s264
    %p271 = scmp.eq.s32.totalorder %s23, 1
    %p272 = por %p270, %p271
    %p273 = scmp.ne.s32.totalorder %s264, %s265
    %p274 = scmp.eq.s32.totalorder %s23, 0
    %p275 = por %p273, %p274
    %p276 = scmp.ne.s32.totalorder %s264, %s265
    %p277 = scmp.eq.s32.totalorder %s24, 1
    %p278 = por %p276, %p277
    %p280 = scmp.ne.s32.totalorder %s265, %s279
    %p281 = scmp.eq.s32.totalorder %s24, 0
    %p282 = por %p280, %p281
    %s283 = ssub.s32 %s18, %s25
    %p284 = scmp.eq.s32.totalorder %s283, 0
    %s286 = sadd.s32 %s285, 1
    %s287 = scalar_select %p284, %s285, %s286
    %p290 = pneg %p284
    %p291 = scmp.eq.s32.totalorder %s18, 1
    %p292 = por %p290, %p291
    %p293 = scmp.ne.s32.totalorder %s285, %s288
    %p294 = scmp.eq.s32.totalorder %s18, 0
    %p295 = por %p293, %p294
    %p296 = scmp.ne.s32.totalorder %s285, %s288
    %p297 = scmp.eq.s32.totalorder %s23, 1
    %p298 = por %p296, %p297
    %p299 = scmp.ne.s32.totalorder %s288, %s289
    %p300 = scmp.eq.s32.totalorder %s23, 0
    %p301 = por %p299, %p300
    %p302 = scmp.ne.s32.totalorder %s288, %s289
    %p303 = scmp.eq.s32.totalorder %s24, 1
    %p304 = por %p302, %p303
    %p306 = scmp.ne.s32.totalorder %s289, %s305
    %p307 = scmp.eq.s32.totalorder %s24, 0
    %p308 = por %p306, %p307
    %p309 = scmp.le.s32.totalorder 1, %s18
    %p310 = scmp.lt.s32.totalorder %s18, 3
    %p311 = pnand %p309, %p310
    %p312 = pneg %p311
    // Predicated region
    $region9: #{bottleneck_forward.1} parent=5 // pred_check
      _
    $region10: #{bottleneck_forward.1} parent=5 // pred_check_branch
      %314 = sbr.rel (%p311) target = $region12
    $region11: #{bottleneck_forward.1} parent=5 // pred_region
      %s315 = ssub.s32 %s18, 1
      // Predicated region
      $region13: #{bottleneck_forward.1} parent=11 // pred_check
        %p316 = pneg %p65
      $region14: #{bottleneck_forward.1} parent=11 // pred_check_branch
        %318 = sbr.rel (%p316) target = $region16
      $region15: #{bottleneck_forward.1} parent=11 // pred_region
        _
      $region16: #{bottleneck_forward.1} parent=11 // pred_fallthru
        _
      // Predicated region
      $region17: #{bottleneck_forward.1} parent=11 // pred_check
        %p319 = pneg %p86
      $region18: #{bottleneck_forward.1} parent=11 // pred_check_branch
        %321 = sbr.rel (%p319) target = $region20
      $region19: #{bottleneck_forward.1} parent=11 // pred_region
        _
      $region20: #{bottleneck_forward.1} parent=11 // pred_fallthru
        _
      // Predicated region
      $region21: #{bottleneck_forward.1} parent=11 // pred_check
        %p322 = pneg %p107
      $region22: #{bottleneck_forward.1} parent=11 // pred_check_branch
        %324 = sbr.rel (%p322) target = $region24
      $region23: #{bottleneck_forward.1} parent=11 // pred_region
        _
      $region24: #{bottleneck_forward.1} parent=11 // pred_fallthru
        _
      // Predicated region
      $region25: #{bottleneck_forward.1} parent=11 // pred_check
        %p325 = pneg %p128
      $region26: #{bottleneck_forward.1} parent=11 // pred_check_branch
        %327 = sbr.rel (%p325) target = $region28
      $region27: #{bottleneck_forward.1} parent=11 // pred_region
        _
      $region28: #{bottleneck_forward.1} parent=11 // pred_fallthru
        _
      // Predicated region
      $region29: #{bottleneck_forward.1} parent=11 // pred_check
        %p328 = pneg %p149
      $region30: #{bottleneck_forward.1} parent=11 // pred_check_branch
        %330 = sbr.rel (%p328) target = $region32
      $region31: #{bottleneck_forward.1} parent=11 // pred_region
        _
      $region32: #{bottleneck_forward.1} parent=11 // pred_fallthru
        _
      // Predicated region
      $region33: #{bottleneck_forward.1} parent=11 // pred_check
        %p331 = pneg %p170
      $region34: #{bottleneck_forward.1} parent=11 // pred_check_branch
        %333 = sbr.rel (%p331) target = $region36
      $region35: #{bottleneck_forward.1} parent=11 // pred_region
        _
      $region36: #{bottleneck_forward.1} parent=11 // pred_fallthru
        _
      // Predicated region
      $region37: #{bottleneck_forward.1} parent=11 // pred_check
        %p334 = pneg %p191
      $region38: #{bottleneck_forward.1} parent=11 // pred_check_branch
        %336 = sbr.rel (%p334) target = $region40
      $region39: #{bottleneck_forward.1} parent=11 // pred_region
        _
      $region40: #{bottleneck_forward.1} parent=11 // pred_fallthru
        _
      // Predicated region
      $region41: #{bottleneck_forward.1} parent=11 // pred_check
        %p337 = pneg %p212
      $region42: #{bottleneck_forward.1} parent=11 // pred_check_branch
        %339 = sbr.rel (%p337) target = $region44
      $region43: #{bottleneck_forward.1} parent=11 // pred_region
        _
      $region44: #{bottleneck_forward.1} parent=11 // pred_fallthru
        _
      // Predicated region
      $region45: #{bottleneck_forward.1} parent=11 // pred_check
        %p340 = pneg %p233
      $region46: #{bottleneck_forward.1} parent=11 // pred_check_branch
        %342 = sbr.rel (%p340) target = $region48
      $region47: #{bottleneck_forward.1} parent=11 // pred_region
        _
      $region48: #{bottleneck_forward.1} parent=11 // pred_fallthru
        _
      // Predicated region
      $region49: #{bottleneck_forward.1} parent=11 // pred_check
        %p343 = pneg %p254
      $region50: #{bottleneck_forward.1} parent=11 // pred_check_branch
        %345 = sbr.rel (%p343) target = $region52
      $region51: #{bottleneck_forward.1} parent=11 // pred_region
        _
      $region52: #{bottleneck_forward.1} parent=11 // pred_fallthru
        _
      // Predicated region
      $region53: #{bottleneck_forward.1} parent=11 // pred_check
        %p346 = pneg %p275
      $region54: #{bottleneck_forward.1} parent=11 // pred_check_branch
        %348 = sbr.rel (%p346) target = $region56
      $region55: #{bottleneck_forward.1} parent=11 // pred_region
        _
      $region56: #{bottleneck_forward.1} parent=11 // pred_fallthru
        _
    $region12: #{bottleneck_forward.1} parent=5 // pred_fallthru
      _
    %p349 = scmp.lt.s32.totalorder %s18, 2
    // Predicated region
    $region57: #{bottleneck_forward.1} parent=5 // pred_check
      %p350 = pneg %p349
    $region58: #{bottleneck_forward.1} parent=5 // pred_check_branch
      %352 = sbr.rel (%p350) target = $region60
    $region59: #{bottleneck_forward.1} parent=5 // pred_region
      // Predicated region
      $region61: #{bottleneck_forward.1} parent=59 // pred_check
        %p353 = pneg %p38
      $region62: #{bottleneck_forward.1} parent=59 // pred_check_branch
        %355 = sbr.rel (%p353) target = $region64
      $region63: #{bottleneck_forward.1} parent=59 // pred_region
        %p356 = scmp.lt.s32.totalorder %s18, 1
        %s357 = scalar_select %p356, %s18, 1
        %s358 = smul.addr %s357, 4
        %s359 = smul.addr %s358, 8
        %s360 = scalar_lea.vmem %s0, %s359
      $region64: #{bottleneck_forward.1} parent=59 // pred_fallthru
        _
    $region60: #{bottleneck_forward.1} parent=5 // pred_fallthru
      _
    %p361 = scmp.le.s32.totalorder 1, %s18
    %p362 = scmp.lt.s32.totalorder %s18, 3
    %p363 = pnand %p361, %p362
    %p364 = pneg %p363
    // Predicated region
    $region65: #{bottleneck_forward.1} parent=5 // pred_check
      _
    $region66: #{bottleneck_forward.1} parent=5 // pred_check_branch
      %366 = sbr.rel (%p363) target = $region68
    $region67: #{bottleneck_forward.1} parent=5 // pred_region
      %s367 = ssub.s32 %s18, 1
      %p368 = scmp.lt.s32.totalorder %s23, 1
      %s369 = scalar_select %p368, %s23, 1
      %s370 = smul.addr %s369, 4
      %s371 = smul.addr %s370, 8
      %s372 = scalar_lea.vmem %s0, %s371
      %p373 = pneg %p44
      %p374 = pneg %p41
      %p375 = pneg %p65
      %p376 = pneg %p62
      %p377 = pneg %p86
      %p378 = pneg %p83
      %p379 = pneg %p107
      %p380 = pneg %p104
      %p381 = pneg %p128
      %p382 = pneg %p125
      %p383 = pneg %p149
      %p384 = pneg %p146
      %p385 = pneg %p170
      %p386 = pneg %p167
      %p387 = pneg %p191
      %p388 = pneg %p188
      %p389 = pneg %p212
      %p390 = pneg %p209
      %p391 = pneg %p233
      %p392 = pneg %p230
      %p393 = pneg %p254
      %p394 = pneg %p251
      %p395 = pneg %p275
      %p396 = pneg %p272
      %p397 = pneg %p301
      %p398 = pneg %p298
      %p399 = scmp.lt.s32.totalorder %s23, 1
      %s400 = scalar_select %p399, %s23, 1
      %s401 = smul.addr %s400, 4
      %s402 = smul.addr %s401, 8
      %s403 = scalar_lea.vmem %s12, %s402
      %p404 = scmp.lt.s32.totalorder %s23, 1
      %s405 = scalar_select %p404, %s23, 1
      %s406 = smul.addr %s405, 4
      %s407 = smul.addr %s406, 8
      %s408 = scalar_lea.vmem %s0, %s407
      %p409 = scmp.lt.s32.totalorder %s23, 1
      %s410 = scalar_select %p409, %s23, 1
      %s411 = smul.addr %s410, 4
      %s412 = smul.addr %s411, 8
      %s413 = scalar_lea.vmem %s12, %s412
      %v414 = vld [vmem:[%s408] sm:$0xff]
      %v415 = vld [vmem:[%s408 + $0x8] sm:$0xff]
      %v416 = vld [vmem:[%s408 + $0x10] sm:$0xff]
      %v417 = vld [vmem:[%s408 + $0x18] sm:$0xff]
      %v418 = vld [vmem:[%s1] sm:$0x3]
      %v419 = vld [vmem:[%s2] sm:$0x3]
      %v420 = vld [vmem:[%s3] sm:$0xf]
      %v421 = vld [vmem:[%s4] sm:$0xf]
      %423 = vset.pattern.permute.xlu0 0
      %424 = vperm.xlu0 %423, %v421
      %v425 = vpop.permute.xlu0 %424
      %vm427 = vcmask 130048
      %v429 = vsel %vm427, %v420, 0
      %431 = vmatprep.subr.mxu0 %v415
      %432 = vmatpush1.msra.mxu0 %v414
      %433 = vmatprep.subr.mxu0 %v417
      %434 = vmatpush1.msra.mxu0 %v416
      %435 = vmatprep.subr.mxu0 0.0
      %436 = vmatpush1.msra.mxu0 0.0
      %437 = vmatprep.subr.mxu0 0.0
      %438 = vmatpush1.msra.mxu0 0.0
      %439 = vmatprep.subr.mxu0 0.0
      %440 = vmatpush1.msra.mxu0 0.0
      %441 = vmatprep.subr.mxu0 0.0
      %442 = vmatpush1.msra.mxu0 0.0
      %443 = vmatprep.subr.mxu0 0.0
      %444 = vmatpush1.msra.mxu0 0.0
      %445 = vmatprep.subr.mxu0 0.0
      %446 = vmatpush1.msra.mxu0 0.0
      %447 = vmatprep.subr.mxu0 0.0
      %448 = vmatpush1.msra.mxu0 0.0
      %449 = vmatprep.subr.mxu0 0.0
      %450 = vmatpush1.msra.mxu0 0.0
      %451 = vmatprep.subr.mxu0 0.0
      %452 = vmatpush1.msra.mxu0 0.0
      %453 = vmatprep.subr.mxu0 0.0
      %454 = vmatpush1.msra.mxu0 0.0
      %455 = vmatprep.subr.mxu0 0.0
      %456 = vmatpush1.msra.mxu0 0.0
      %457 = vmatprep.subr.mxu0 0.0
      %458 = vmatpush1.msra.mxu0 0.0
      %459 = vmatprep.subr.mxu0 0.0
      %460 = vmatpush1.msra.mxu0 0.0
      %461 = vmatprep.subr.mxu0 0.0
      %462 = vmatpush1.msra.mxu0 0.0
      %463 = vmatprep.subr.mxu0 0.0
      %464 = vmatpush1.msra.mxu0 0.0
      %465 = vmatprep.subr.mxu0 0.0
      %466 = vmatpush1.msra.mxu0 0.0
      %467 = vmatprep.subr.mxu0 0.0
      %468 = vmatpush1.msra.mxu0 0.0
      %469 = vmatprep.subr.mxu0 0.0
      %470 = vmatpush1.msra.mxu0 0.0
      %471 = vmatprep.subr.mxu0 0.0
      %472 = vmatpush1.msra.mxu0 0.0
      %473 = vmatprep.subr.mxu0 0.0
      %474 = vmatpush1.msra.mxu0 0.0
      %475 = vmatprep.subr.mxu0 0.0
      %476 = vmatpush1.msra.mxu0 0.0
      %477 = vmatprep.subr.mxu0 0.0
      %478 = vmatpush1.msra.mxu0 0.0
      %479 = vmatprep.subr.mxu0 0.0
      %480 = vmatpush1.msra.mxu0 0.0
      %481 = vmatprep.subr.mxu0 0.0
      %482 = vmatpush1.msra.mxu0 0.0
      %483 = vmatprep.subr.mxu0 0.0
      %484 = vmatpush1.msra.mxu0 0.0
      %485 = vmatprep.subr.mxu0 0.0
      %486 = vmatpush1.msra.mxu0 0.0
      %487 = vmatprep.subr.mxu0 0.0
      %488 = vmatpush1.msra.mxu0 0.0
      %489 = vmatprep.subr.mxu0 0.0
      %490 = vmatpush1.msra.mxu0 0.0
      %491 = vmatprep.subr.mxu0 0.0
      %492 = vmatpush1.msra.mxu0 0.0
      %493 = vmatprep.subr.mxu0 0.0
      %494 = vmatpush1.msra.mxu0 0.0
      %495 = vmatprep.mubr.f32.mxu0 0.0
      %496 = vmatmul.mubr.f32.gmra.mrb[0].mxu0 %v429
      %v497 = vpop.f32.mrb[0].mxu0
      %v498 = vadd.f32 %v425, %v497
      %v499 = vpop.f32.mrb[0].mxu0
      %v500 = vadd.f32 %v425, %v499
      %501 = vdwg.mxu0
      %v502 = vmax.f32 %v498, 0.0
      %v503 = vmax.f32 %v500, 0.0
      %504 = vst [vmem:[#allocation2] sm:$0xff] 0.0
      %505 = vst [vmem:[#allocation2 + $0x8] sm:$0xff] 0.0
      %v508 = vcombine.low %v502, %v503
      %510 = vst [vmem:[#allocation2 + $0x4] sm:$0xff] %v508
      %vm511 = vcmp.ge.s32.totalorder %v418, 1
      %vm512 = vcmp.lt.s32.totalorder %v418, 17
      %vm513 = vmand %vm511, %vm512
      %vm514 = vcmp.ge.s32.totalorder %v419, 1
      %vm515 = vmand %vm513, %vm514
      %vm516 = vcmp.lt.s32.totalorder %v419, 17
      %vm517 = vmand %vm515, %vm516
      %v518 = vld [vmem:[#allocation2] sm:$0xff]
      %v519 = vld [vmem:[#allocation2 + $0x8] sm:$0xf]
      %v520 = vsel %vm517, 1, 0
      %v521 = vlaneseq
      %v522 = vshrl.u32 %v521, 7
      %v523 = vsub.s32 0, %v522
      %v524 = vrot.slane %v520, %v523
      %v525 = vlaneseq
      %v526 = vshrl.u32 %v525, 7
      %v527 = vsub.s32 1, %v526
      %v528 = vrot.slane %v520, %v527
      %vm529 = vcmp.eq.s32.totalorder %v524, 1
      %vm530 = vcmp.eq.s32.totalorder %v528, 1
      %v533 = vcombine.high %v518, %v518
      %534 = vrot.lane.b32.xlu0 %v518, 17
      %v535 = vpop.permute.xlu0 %534
      %536 = vrot.lane.b32.xlu0 %v533, 17
      %v537 = vpop.permute.xlu0 %536
      %538 = vrot.lane.b32.xlu0 %v519, 17
      %v539 = vpop.permute.xlu0 %538
      %vm540 = vcmask 138240
      %v541 = vsel %vm540, %v535, %v537
      %v542 = vsel %vm540, %v537, %v539
      %v545 = vsel %vm529, %v541, 0.0
      %v546 = vsel %vm530, %v542, 0.0
      %v547 = vld [vmem:[%s5] sm:$0xf]
      %vm548 = vcmp.ge.s32.totalorder %v419, 0
      %vm549 = vmand %vm513, %vm548
      %vm550 = vcmp.lt.s32.totalorder %v419, 16
      %vm551 = vmand %vm549, %vm550
      %v552 = vsel %vm551, 1, 0
      %v553 = vlaneseq
      %v554 = vshrl.u32 %v553, 7
      %v555 = vsub.s32 0, %v554
      %v556 = vrot.slane %v552, %v555
      %v557 = vlaneseq
      %v558 = vshrl.u32 %v557, 7
      %v559 = vsub.s32 1, %v558
      %v560 = vrot.slane %v552, %v559
      %vm561 = vcmp.eq.s32.totalorder %v556, 1
      %vm562 = vcmp.eq.s32.totalorder %v560, 1
      %563 = vrot.lane.b32.xlu0 %v518, 16
      %v564 = vpop.permute.xlu0 %563
      %565 = vrot.lane.b32.xlu0 %v533, 16
      %v566 = vpop.permute.xlu0 %565
      %567 = vrot.lane.b32.xlu0 %v519, 16
      %v568 = vpop.permute.xlu0 %567
      %v569 = vsel %vm427, %v564, %v566
      %v570 = vsel %vm427, %v566, %v568
      %v573 = vsel %vm561, %v569, 0.0
      %v574 = vsel %vm562, %v570, 0.0
      %s575 = scalar_lea.vmem %s5, 4
      %v576 = vld [vmem:[%s575] sm:$0xf]
      %vm577 = vcmask 31744
      %v579 = vsel %vm577, %v576, 0
      %vm581 = vcmask 1043456
      %v583 = vsel %vm581, %v573, 0
      %v586 = vsel %vm581, %v574, 0
      %588 = vmatprep.subr.mxu0 %v586
      %589 = vmatpush1.msra.mxu0 %v583
      %590 = vmatprep.subr.mxu0 0.0
      %591 = vmatpush1.msra.mxu0 0.0
      %592 = vmatprep.subr.mxu0 0.0
      %593 = vmatpush1.msra.mxu0 0.0
      %594 = vmatprep.subr.mxu0 0.0
      %595 = vmatpush1.msra.mxu0 0.0
      %596 = vmatprep.subr.mxu0 0.0
      %597 = vmatpush1.msra.mxu0 0.0
      %598 = vmatprep.subr.mxu0 0.0
      %599 = vmatpush1.msra.mxu0 0.0
      %600 = vmatprep.subr.mxu0 0.0
      %601 = vmatpush1.msra.mxu0 0.0
      %602 = vmatprep.subr.mxu0 0.0
      %603 = vmatpush1.msra.mxu0 0.0
      %604 = vmatprep.subr.mxu0 0.0
      %605 = vmatpush1.msra.mxu0 0.0
      %606 = vmatprep.subr.mxu0 0.0
      %607 = vmatpush1.msra.mxu0 0.0
      %608 = vmatprep.subr.mxu0 0.0
      %609 = vmatpush1.msra.mxu0 0.0
      %610 = vmatprep.subr.mxu0 0.0
      %611 = vmatpush1.msra.mxu0 0.0
      %612 = vmatprep.subr.mxu0 0.0
      %613 = vmatpush1.msra.mxu0 0.0
      %614 = vmatprep.subr.mxu0 0.0
      %615 = vmatpush1.msra.mxu0 0.0
      %616 = vmatprep.subr.mxu0 0.0
      %617 = vmatpush1.msra.mxu0 0.0
      %618 = vmatprep.subr.mxu0 0.0
      %619 = vmatpush1.msra.mxu0 0.0
      %620 = vmatprep.subr.mxu0 0.0
      %621 = vmatpush1.msra.mxu0 0.0
      %622 = vmatprep.subr.mxu0 0.0
      %623 = vmatpush1.msra.mxu0 0.0
      %624 = vmatprep.subr.mxu0 0.0
      %625 = vmatpush1.msra.mxu0 0.0
      %626 = vmatprep.subr.mxu0 0.0
      %627 = vmatpush1.msra.mxu0 0.0
      %628 = vmatprep.subr.mxu0 0.0
      %629 = vmatpush1.msra.mxu0 0.0
      %630 = vmatprep.subr.mxu0 0.0
      %631 = vmatpush1.msra.mxu0 0.0
      %632 = vmatprep.subr.mxu0 0.0
      %633 = vmatpush1.msra.mxu0 0.0
      %634 = vmatprep.subr.mxu0 0.0
      %635 = vmatpush1.msra.mxu0 0.0
      %636 = vmatprep.subr.mxu0 0.0
      %637 = vmatpush1.msra.mxu0 0.0
      %638 = vmatprep.subr.mxu0 0.0
      %639 = vmatpush1.msra.mxu0 0.0
      %640 = vmatprep.subr.mxu0 0.0
      %641 = vmatpush1.msra.mxu0 0.0
      %642 = vmatprep.subr.mxu0 0.0
      %643 = vmatpush1.msra.mxu0 0.0
      %644 = vmatprep.subr.mxu0 0.0
      %645 = vmatpush1.msra.mxu0 0.0
      %646 = vmatprep.subr.mxu0 0.0
      %647 = vmatpush1.msra.mxu0 0.0
      %648 = vmatprep.subr.mxu0 0.0
      %649 = vmatpush1.msra.mxu0 0.0
      %650 = vmatprep.subr.mxu0 0.0
      %651 = vmatpush1.msra.mxu0 0.0
      %652 = vmatprep.mubr.f32.mxu0 0.0
      %653 = vmatmul.mubr.f32.gmra.mrb[0].mxu0 %v579
      %v654 = vpop.f32.mrb[0].mxu0
      %v655 = vadd.f32 0.0, %v654
      %v656 = vpop.f32.mrb[0].mxu0
      %v657 = vadd.f32 0.0, %v656
      %658 = vdwg.mxu0
      %v660 = vsel %vm577, %v547, 0
      %v663 = vsel %vm581, %v545, 0
      %v666 = vsel %vm581, %v546, 0
      %668 = vmatprep.subr.mxu0 %v666
      %669 = vmatpush1.msra.mxu0 %v663
      %670 = vmatprep.subr.mxu0 0.0
      %671 = vmatpush1.msra.mxu0 0.0
      %672 = vmatprep.subr.mxu0 0.0
      %673 = vmatpush1.msra.mxu0 0.0
      %674 = vmatprep.subr.mxu0 0.0
      %675 = vmatpush1.msra.mxu0 0.0
      %676 = vmatprep.subr.mxu0 0.0
      %677 = vmatpush1.msra.mxu0 0.0
      %678 = vmatprep.subr.mxu0 0.0
      %679 = vmatpush1.msra.mxu0 0.0
      %680 = vmatprep.subr.mxu0 0.0
      %681 = vmatpush1.msra.mxu0 0.0
      %682 = vmatprep.subr.mxu0 0.0
      %683 = vmatpush1.msra.mxu0 0.0
      %684 = vmatprep.subr.mxu0 0.0
      %685 = vmatpush1.msra.mxu0 0.0
      %686 = vmatprep.subr.mxu0 0.0
      %687 = vmatpush1.msra.mxu0 0.0
      %688 = vmatprep.subr.mxu0 0.0
      %689 = vmatpush1.msra.mxu0 0.0
      %690 = vmatprep.subr.mxu0 0.0
      %691 = vmatpush1.msra.mxu0 0.0
      %692 = vmatprep.subr.mxu0 0.0
      %693 = vmatpush1.msra.mxu0 0.0
      %694 = vmatprep.subr.mxu0 0.0
      %695 = vmatpush1.msra.mxu0 0.0
      %696 = vmatprep.subr.mxu0 0.0
      %697 = vmatpush1.msra.mxu0 0.0
      %698 = vmatprep.subr.mxu0 0.0
      %699 = vmatpush1.msra.mxu0 0.0
      %700 = vmatprep.subr.mxu0 0.0
      %701 = vmatpush1.msra.mxu0 0.0
      %702 = vmatprep.subr.mxu0 0.0
      %703 = vmatpush1.msra.mxu0 0.0
      %704 = vmatprep.subr.mxu0 0.0
      %705 = vmatpush1.msra.mxu0 0.0
      %706 = vmatprep.subr.mxu0 0.0
      %707 = vmatpush1.msra.mxu0 0.0
      %708 = vmatprep.subr.mxu0 0.0
      %709 = vmatpush1.msra.mxu0 0.0
      %710 = vmatprep.subr.mxu0 0.0
      %711 = vmatpush1.msra.mxu0 0.0
      %712 = vmatprep.subr.mxu0 0.0
      %713 = vmatpush1.msra.mxu0 0.0
      %714 = vmatprep.subr.mxu0 0.0
      %715 = vmatpush1.msra.mxu0 0.0
      %716 = vmatprep.subr.mxu0 0.0
      %717 = vmatpush1.msra.mxu0 0.0
      %718 = vmatprep.subr.mxu0 0.0
      %719 = vmatpush1.msra.mxu0 0.0
      %720 = vmatprep.subr.mxu0 0.0
      %721 = vmatpush1.msra.mxu0 0.0
      %722 = vmatprep.subr.mxu0 0.0
      %723 = vmatpush1.msra.mxu0 0.0
      %724 = vmatprep.subr.mxu0 0.0
      %725 = vmatpush1.msra.mxu0 0.0
      %726 = vmatprep.subr.mxu0 0.0
      %727 = vmatpush1.msra.mxu0 0.0
      %728 = vmatprep.subr.mxu0 0.0
      %729 = vmatpush1.msra.mxu0 0.0
      %730 = vmatprep.subr.mxu0 0.0
      %731 = vmatpush1.msra.mxu0 0.0
      %732 = vmatprep.mubr.f32.mxu0 0.0
      %733 = vmatmul.mubr.f32.gmra.mrb[0].mxu0 %v660
      %v734 = vpop.f32.mrb[0].mxu0
      %v735 = vadd.f32 %v655, %v734
      %v736 = vpop.f32.mrb[0].mxu0
      %v737 = vadd.f32 %v657, %v736
      %738 = vdwg.mxu0
      %vm739 = vcmp.ge.s32.totalorder %v419, 4294967295
      %vm740 = vmand %vm513, %vm739
      %vm741 = vcmp.lt.s32.totalorder %v419, 15
      %vm742 = vmand %vm740, %vm741
      %v743 = vld [vmem:[#allocation2] sm:$0xff]
      %v744 = vld [vmem:[#allocation2 + $0x8] sm:$0xf]
      %v745 = vsel %vm742, 1, 0
      %v746 = vlaneseq
      %v747 = vshrl.u32 %v746, 7
      %v748 = vsub.s32 0, %v747
      %v749 = vrot.slane %v745, %v748
      %v750 = vlaneseq
      %v751 = vshrl.u32 %v750, 7
      %v752 = vsub.s32 1, %v751
      %v753 = vrot.slane %v745, %v752
      %vm754 = vcmp.eq.s32.totalorder %v749, 1
      %vm755 = vcmp.eq.s32.totalorder %v753, 1
      %v758 = vcombine.high %v743, %v743
      %759 = vrot.lane.b32.xlu0 %v743, 15
      %v760 = vpop.permute.xlu0 %759
      %761 = vrot.lane.b32.xlu0 %v758, 15
      %v762 = vpop.permute.xlu0 %761
      %763 = vrot.lane.b32.xlu0 %v744, 15
      %v764 = vpop.permute.xlu0 %763
      %vm765 = vcmask 121856
      %v766 = vsel %vm765, %v760, %v762
      %v767 = vsel %vm765, %v762, %v764
      %v770 = vsel %vm754, %v766, 0.0
      %v771 = vsel %vm755, %v767, 0.0
      %s772 = scalar_lea.vmem %s5, 8
      %v773 = vld [vmem:[%s772] sm:$0xf]
      %v775 = vsel %vm577, %v773, 0
      %v778 = vsel %vm581, %v770, 0
      %v781 = vsel %vm581, %v771, 0
      %783 = vmatprep.subr.mxu0 %v781
      %784 = vmatpush1.msra.mxu0 %v778
      %785 = vmatprep.subr.mxu0 0.0
      %786 = vmatpush1.msra.mxu0 0.0
      %787 = vmatprep.subr.mxu0 0.0
      %788 = vmatpush1.msra.mxu0 0.0
      %789 = vmatprep.subr.mxu0 0.0
      %790 = vmatpush1.msra.mxu0 0.0
      %791 = vmatprep.subr.mxu0 0.0
      %792 = vmatpush1.msra.mxu0 0.0
      %793 = vmatprep.subr.mxu0 0.0
      %794 = vmatpush1.msra.mxu0 0.0
      %795 = vmatprep.subr.mxu0 0.0
      %796 = vmatpush1.msra.mxu0 0.0
      %797 = vmatprep.subr.mxu0 0.0
      %798 = vmatpush1.msra.mxu0 0.0
      %799 = vmatprep.subr.mxu0 0.0
      %800 = vmatpush1.msra.mxu0 0.0
      %801 = vmatprep.subr.mxu0 0.0
      %802 = vmatpush1.msra.mxu0 0.0
      %803 = vmatprep.subr.mxu0 0.0
      %804 = vmatpush1.msra.mxu0 0.0
      %805 = vmatprep.subr.mxu0 0.0
      %806 = vmatpush1.msra.mxu0 0.0
      %807 = vmatprep.subr.mxu0 0.0
      %808 = vmatpush1.msra.mxu0 0.0
      %809 = vmatprep.subr.mxu0 0.0
      %810 = vmatpush1.msra.mxu0 0.0
      %811 = vmatprep.subr.mxu0 0.0
      %812 = vmatpush1.msra.mxu0 0.0
      %813 = vmatprep.subr.mxu0 0.0
      %814 = vmatpush1.msra.mxu0 0.0
      %815 = vmatprep.subr.mxu0 0.0
      %816 = vmatpush1.msra.mxu0 0.0
      %817 = vmatprep.subr.mxu0 0.0
      %818 = vmatpush1.msra.mxu0 0.0
      %819 = vmatprep.subr.mxu0 0.0
      %820 = vmatpush1.msra.mxu0 0.0
      %821 = vmatprep.subr.mxu0 0.0
      %822 = vmatpush1.msra.mxu0 0.0
      %823 = vmatprep.subr.mxu0 0.0
      %824 = vmatpush1.msra.mxu0 0.0
      %825 = vmatprep.subr.mxu0 0.0
      %826 = vmatpush1.msra.mxu0 0.0
      %827 = vmatprep.subr.mxu0 0.0
      %828 = vmatpush1.msra.mxu0 0.0
      %829 = vmatprep.subr.mxu0 0.0
      %830 = vmatpush1.msra.mxu0 0.0
      %831 = vmatprep.subr.mxu0 0.0
      %832 = vmatpush1.msra.mxu0 0.0
      %833 = vmatprep.subr.mxu0 0.0
      %834 = vmatpush1.msra.mxu0 0.0
      %835 = vmatprep.subr.mxu0 0.0
      %836 = vmatpush1.msra.mxu0 0.0
      %837 = vmatprep.subr.mxu0 0.0
      %838 = vmatpush1.msra.mxu0 0.0
      %839 = vmatprep.subr.mxu0 0.0
      %840 = vmatpush1.msra.mxu0 0.0
      %841 = vmatprep.subr.mxu0 0.0
      %842 = vmatpush1.msra.mxu0 0.0
      %843 = vmatprep.subr.mxu0 0.0
      %844 = vmatpush1.msra.mxu0 0.0
      %845 = vmatprep.subr.mxu0 0.0
      %846 = vmatpush1.msra.mxu0 0.0
      %847 = vmatprep.mubr.f32.mxu0 0.0
      %848 = vmatmul.mubr.f32.gmra.mrb[0].mxu0 %v775
      %v849 = vpop.f32.mrb[0].mxu0
      %v850 = vadd.f32 0.0, %v849
      %v851 = vpop.f32.mrb[0].mxu0
      %v852 = vadd.f32 0.0, %v851
      %853 = vdwg.mxu0
      %v854 = vadd.f32 %v735, %v850
      %v855 = vadd.f32 %v737, %v852
      %vm856 = vcmp.ge.s32.totalorder %v418, 0
      %vm857 = vcmp.lt.s32.totalorder %v418, 16
      %vm858 = vmand %vm856, %vm857
      %vm859 = vmand %vm858, %vm514
      %vm860 = vmand %vm859, %vm516
      %v861 = vld [vmem:[#allocation2] sm:$0xff]
      %v862 = vld [vmem:[#allocation2 + $0x8] sm:$0xf]
      %v863 = vsel %vm860, 1, 0
      %v864 = vlaneseq
      %v865 = vshrl.u32 %v864, 7
      %v866 = vsub.s32 0, %v865
      %v867 = vrot.slane %v863, %v866
      %v868 = vlaneseq
      %v869 = vshrl.u32 %v868, 7
      %v870 = vsub.s32 1, %v869
      %v871 = vrot.slane %v863, %v870
      %vm872 = vcmp.eq.s32.totalorder %v867, 1
      %vm873 = vcmp.eq.s32.totalorder %v871, 1
      %v876 = vcombine.high %v861, %v861
      %877 = vrot.lane.b32.xlu0 %v861, 1
      %v878 = vpop.permute.xlu0 %877
      %879 = vrot.lane.b32.xlu0 %v876, 1
      %v880 = vpop.permute.xlu0 %879
      %881 = vrot.lane.b32.xlu0 %v862, 1
      %v882 = vpop.permute.xlu0 %881
      %vm883 = vcmask 7168
      %v884 = vsel %vm883, %v878, %v880
      %v885 = vsel %vm883, %v880, %v882
      %v888 = vsel %vm872, %v884, 0.0
      %v889 = vsel %vm873, %v885, 0.0
      %s890 = scalar_lea.vmem %s5, 12
      %v891 = vld [vmem:[%s890] sm:$0xf]
      %v893 = vsel %vm577, %v891, 0
      %v896 = vsel %vm581, %v888, 0
      %v899 = vsel %vm581, %v889, 0
      %901 = vmatprep.subr.mxu0 %v899
      %902 = vmatpush1.msra.mxu0 %v896
      %903 = vmatprep.subr.mxu0 0.0
      %904 = vmatpush1.msra.mxu0 0.0
      %905 = vmatprep.subr.mxu0 0.0
      %906 = vmatpush1.msra.mxu0 0.0
      %907 = vmatprep.subr.mxu0 0.0
      %908 = vmatpush1.msra.mxu0 0.0
      %909 = vmatprep.subr.mxu0 0.0
      %910 = vmatpush1.msra.mxu0 0.0
      %911 = vmatprep.subr.mxu0 0.0
      %912 = vmatpush1.msra.mxu0 0.0
      %913 = vmatprep.subr.mxu0 0.0
      %914 = vmatpush1.msra.mxu0 0.0
      %915 = vmatprep.subr.mxu0 0.0
      %916 = vmatpush1.msra.mxu0 0.0
      %917 = vmatprep.subr.mxu0 0.0
      %918 = vmatpush1.msra.mxu0 0.0
      %919 = vmatprep.subr.mxu0 0.0
      %920 = vmatpush1.msra.mxu0 0.0
      %921 = vmatprep.subr.mxu0 0.0
      %922 = vmatpush1.msra.mxu0 0.0
      %923 = vmatprep.subr.mxu0 0.0
      %924 = vmatpush1.msra.mxu0 0.0
      %925 = vmatprep.subr.mxu0 0.0
      %926 = vmatpush1.msra.mxu0 0.0
      %927 = vmatprep.subr.mxu0 0.0
      %928 = vmatpush1.msra.mxu0 0.0
      %929 = vmatprep.subr.mxu0 0.0
      %930 = vmatpush1.msra.mxu0 0.0
      %931 = vmatprep.subr.mxu0 0.0
      %932 = vmatpush1.msra.mxu0 0.0
      %933 = vmatprep.subr.mxu0 0.0
      %934 = vmatpush1.msra.mxu0 0.0
      %935 = vmatprep.subr.mxu0 0.0
      %936 = vmatpush1.msra.mxu0 0.0
      %937 = vmatprep.subr.mxu0 0.0
      %938 = vmatpush1.msra.mxu0 0.0
      %939 = vmatprep.subr.mxu0 0.0
      %940 = vmatpush1.msra.mxu0 0.0
      %941 = vmatprep.subr.mxu0 0.0
      %942 = vmatpush1.msra.mxu0 0.0
      %943 = vmatprep.subr.mxu0 0.0
      %944 = vmatpush1.msra.mxu0 0.0
      %945 = vmatprep.subr.mxu0 0.0
      %946 = vmatpush1.msra.mxu0 0.0
      %947 = vmatprep.subr.mxu0 0.0
      %948 = vmatpush1.msra.mxu0 0.0
      %949 = vmatprep.subr.mxu0 0.0
      %950 = vmatpush1.msra.mxu0 0.0
      %951 = vmatprep.subr.mxu0 0.0
      %952 = vmatpush1.msra.mxu0 0.0
      %953 = vmatprep.subr.mxu0 0.0
      %954 = vmatpush1.msra.mxu0 0.0
      %955 = vmatprep.subr.mxu0 0.0
      %956 = vmatpush1.msra.mxu0 0.0
      %957 = vmatprep.subr.mxu0 0.0
      %958 = vmatpush1.msra.mxu0 0.0
      %959 = vmatprep.subr.mxu0 0.0
      %960 = vmatpush1.msra.mxu0 0.0
      %961 = vmatprep.subr.mxu0 0.0
      %962 = vmatpush1.msra.mxu0 0.0
      %963 = vmatprep.subr.mxu0 0.0
      %964 = vmatpush1.msra.mxu0 0.0
      %965 = vmatprep.mubr.f32.mxu0 0.0
      %966 = vmatmul.mubr.f32.gmra.mrb[0].mxu0 %v893
      %v967 = vpop.f32.mrb[0].mxu0
      %v968 = vadd.f32 0.0, %v967
      %v969 = vpop.f32.mrb[0].mxu0
      %v970 = vadd.f32 0.0, %v969
      %971 = vdwg.mxu0
      %v972 = vadd.f32 %v854, %v968
      %v973 = vadd.f32 %v855, %v970
      %vm974 = vmand %vm858, %vm548
      %vm975 = vmand %vm974, %vm550
      %v976 = vld [vmem:[#allocation2 + $0x4] sm:$0xff]
      %v977 = vsel %vm975, 1, 0
      %v978 = vlaneseq
      %v979 = vshrl.u32 %v978, 7
      %v980 = vsub.s32 0, %v979
      %v981 = vrot.slane %v977, %v980
      %v982 = vlaneseq
      %v983 = vshrl.u32 %v982, 7
      %v984 = vsub.s32 1, %v983
      %v985 = vrot.slane %v977, %v984
      %vm986 = vcmp.eq.s32.totalorder %v981, 1
      %vm987 = vcmp.eq.s32.totalorder %v985, 1
      %v989 = vcombine.high %v976, %v976
      %v991 = vsel %vm986, %v976, 0.0
      %v992 = vsel %vm987, %v989, 0.0
      %s993 = scalar_lea.vmem %s5, 16
      %v994 = vld [vmem:[%s993] sm:$0xf]
      %v996 = vsel %vm577, %v994, 0
      %v999 = vsel %vm581, %v991, 0
      %v1002 = vsel %vm581, %v992, 0
      %1004 = vmatprep.subr.mxu0 %v1002
      %1005 = vmatpush1.msra.mxu0 %v999
      %1006 = vmatprep.subr.mxu0 0.0
      %1007 = vmatpush1.msra.mxu0 0.0
      %1008 = vmatprep.subr.mxu0 0.0
      %1009 = vmatpush1.msra.mxu0 0.0
      %1010 = vmatprep.subr.mxu0 0.0
      %1011 = vmatpush1.msra.mxu0 0.0
      %1012 = vmatprep.subr.mxu0 0.0
      %1013 = vmatpush1.msra.mxu0 0.0
      %1014 = vmatprep.subr.mxu0 0.0
      %1015 = vmatpush1.msra.mxu0 0.0
      %1016 = vmatprep.subr.mxu0 0.0
      %1017 = vmatpush1.msra.mxu0 0.0
      %1018 = vmatprep.subr.mxu0 0.0
      %1019 = vmatpush1.msra.mxu0 0.0
      %1020 = vmatprep.subr.mxu0 0.0
      %1021 = vmatpush1.msra.mxu0 0.0
      %1022 = vmatprep.subr.mxu0 0.0
      %1023 = vmatpush1.msra.mxu0 0.0
      %1024 = vmatprep.subr.mxu0 0.0
      %1025 = vmatpush1.msra.mxu0 0.0
      %1026 = vmatprep.subr.mxu0 0.0
      %1027 = vmatpush1.msra.mxu0 0.0
      %1028 = vmatprep.subr.mxu0 0.0
      %1029 = vmatpush1.msra.mxu0 0.0
      %1030 = vmatprep.subr.mxu0 0.0
      %1031 = vmatpush1.msra.mxu0 0.0
      %1032 = vmatprep.subr.mxu0 0.0
      %1033 = vmatpush1.msra.mxu0 0.0
      %1034 = vmatprep.subr.mxu0 0.0
      %1035 = vmatpush1.msra.mxu0 0.0
      %1036 = vmatprep.subr.mxu0 0.0
      %1037 = vmatpush1.msra.mxu0 0.0
      %1038 = vmatprep.subr.mxu0 0.0
      %1039 = vmatpush1.msra.mxu0 0.0
      %1040 = vmatprep.subr.mxu0 0.0
      %1041 = vmatpush1.msra.mxu0 0.0
      %1042 = vmatprep.subr.mxu0 0.0
      %1043 = vmatpush1.msra.mxu0 0.0
      %1044 = vmatprep.subr.mxu0 0.0
      %1045 = vmatpush1.msra.mxu0 0.0
      %1046 = vmatprep.subr.mxu0 0.0
      %1047 = vmatpush1.msra.mxu0 0.0
      %1048 = vmatprep.subr.mxu0 0.0
      %1049 = vmatpush1.msra.mxu0 0.0
      %1050 = vmatprep.subr.mxu0 0.0
      %1051 = vmatpush1.msra.mxu0 0.0
      %1052 = vmatprep.subr.mxu0 0.0
      %1053 = vmatpush1.msra.mxu0 0.0
      %1054 = vmatprep.subr.mxu0 0.0
      %1055 = vmatpush1.msra.mxu0 0.0
      %1056 = vmatprep.subr.mxu0 0.0
      %1057 = vmatpush1.msra.mxu0 0.0
      %1058 = vmatprep.subr.mxu0 0.0
      %1059 = vmatpush1.msra.mxu0 0.0
      %1060 = vmatprep.subr.mxu0 0.0
      %1061 = vmatpush1.msra.mxu0 0.0
      %1062 = vmatprep.subr.mxu0 0.0
      %1063 = vmatpush1.msra.mxu0 0.0
      %1064 = vmatprep.subr.mxu0 0.0
      %1065 = vmatpush1.msra.mxu0 0.0
      %1066 = vmatprep.subr.mxu0 0.0
      %1067 = vmatpush1.msra.mxu0 0.0
      %1068 = vmatprep.mubr.f32.mxu0 0.0
      %1069 = vmatmul.mubr.f32.gmra.mrb[0].mxu0 %v996
      %v1070 = vpop.f32.mrb[0].mxu0
      %v1071 = vadd.f32 0.0, %v1070
      %v1072 = vpop.f32.mrb[0].mxu0
      %v1073 = vadd.f32 0.0, %v1072
      %1074 = vdwg.mxu0
      %v1075 = vadd.f32 %v972, %v1071
      %v1076 = vadd.f32 %v973, %v1073
      %vm1077 = vmand %vm858, %vm739
      %vm1078 = vmand %vm1077, %vm741
      %v1079 = vld [vmem:[#allocation2 + $0x4] sm:$0xff]
      %v1080 = vld [vmem:[#allocation2 + $0xc] sm:$0xf]
      %v1081 = vsel %vm1078, 1, 0
      %v1082 = vlaneseq
      %v1083 = vshrl.u32 %v1082, 7
      %v1084 = vsub.s32 0, %v1083
      %v1085 = vrot.slane %v1081, %v1084
      %v1086 = vlaneseq
      %v1087 = vshrl.u32 %v1086, 7
      %v1088 = vsub.s32 1, %v1087
      %v1089 = vrot.slane %v1081, %v1088
      %vm1090 = vcmp.eq.s32.totalorder %v1085, 1
      %vm1091 = vcmp.eq.s32.totalorder %v1089, 1
      %v1094 = vcombine.high %v1079, %v1079
      %1095 = vrot.lane.b32.xlu0 %v1079, 127
      %v1096 = vpop.permute.xlu0 %1095
      %1097 = vrot.lane.b32.xlu0 %v1094, 127
      %v1098 = vpop.permute.xlu0 %1097
      %1099 = vrot.lane.b32.xlu0 %v1080, 127
      %v1100 = vpop.permute.xlu0 %1099
      %vm1101 = vcmask 1039360
      %v1102 = vsel %vm1101, %v1096, %v1098
      %v1103 = vsel %vm1101, %v1098, %v1100
      %v1106 = vsel %vm1090, %v1102, 0.0
      %v1107 = vsel %vm1091, %v1103, 0.0
      %s1108 = scalar_lea.vmem %s5, 20
      %v1109 = vld [vmem:[%s1108] sm:$0xf]
      %v1111 = vsel %vm577, %v1109, 0
      %v1114 = vsel %vm581, %v1106, 0
      %v1117 = vsel %vm581, %v1107, 0
      %1119 = vmatprep.subr.mxu0 %v1117
      %1120 = vmatpush1.msra.mxu0 %v1114
      %1121 = vmatprep.subr.mxu0 0.0
      %1122 = vmatpush1.msra.mxu0 0.0
      %1123 = vmatprep.subr.mxu0 0.0
      %1124 = vmatpush1.msra.mxu0 0.0
      %1125 = vmatprep.subr.mxu0 0.0
      %1126 = vmatpush1.msra.mxu0 0.0
      %1127 = vmatprep.subr.mxu0 0.0
      %1128 = vmatpush1.msra.mxu0 0.0
      %1129 = vmatprep.subr.mxu0 0.0
      %1130 = vmatpush1.msra.mxu0 0.0
      %1131 = vmatprep.subr.mxu0 0.0
      %1132 = vmatpush1.msra.mxu0 0.0
      %1133 = vmatprep.subr.mxu0 0.0
      %1134 = vmatpush1.msra.mxu0 0.0
      %1135 = vmatprep.subr.mxu0 0.0
      %1136 = vmatpush1.msra.mxu0 0.0
      %1137 = vmatprep.subr.mxu0 0.0
      %1138 = vmatpush1.msra.mxu0 0.0
      %1139 = vmatprep.subr.mxu0 0.0
      %1140 = vmatpush1.msra.mxu0 0.0
      %1141 = vmatprep.subr.mxu0 0.0
      %1142 = vmatpush1.msra.mxu0 0.0
      %1143 = vmatprep.subr.mxu0 0.0
      %1144 = vmatpush1.msra.mxu0 0.0
      %1145 = vmatprep.subr.mxu0 0.0
      %1146 = vmatpush1.msra.mxu0 0.0
      %1147 = vmatprep.subr.mxu0 0.0
      %1148 = vmatpush1.msra.mxu0 0.0
      %1149 = vmatprep.subr.mxu0 0.0
      %1150 = vmatpush1.msra.mxu0 0.0
      %1151 = vmatprep.subr.mxu0 0.0
      %1152 = vmatpush1.msra.mxu0 0.0
      %1153 = vmatprep.subr.mxu0 0.0
      %1154 = vmatpush1.msra.mxu0 0.0
      %1155 = vmatprep.subr.mxu0 0.0
      %1156 = vmatpush1.msra.mxu0 0.0
      %1157 = vmatprep.subr.mxu0 0.0
      %1158 = vmatpush1.msra.mxu0 0.0
      %1159 = vmatprep.subr.mxu0 0.0
      %1160 = vmatpush1.msra.mxu0 0.0
      %1161 = vmatprep.subr.mxu0 0.0
      %1162 = vmatpush1.msra.mxu0 0.0
      %1163 = vmatprep.subr.mxu0 0.0
      %1164 = vmatpush1.msra.mxu0 0.0
      %1165 = vmatprep.subr.mxu0 0.0
      %1166 = vmatpush1.msra.mxu0 0.0
      %1167 = vmatprep.subr.mxu0 0.0
      %1168 = vmatpush1.msra.mxu0 0.0
      %1169 = vmatprep.subr.mxu0 0.0
      %1170 = vmatpush1.msra.mxu0 0.0
      %1171 = vmatprep.subr.mxu0 0.0
      %1172 = vmatpush1.msra.mxu0 0.0
      %1173 = vmatprep.subr.mxu0 0.0
      %1174 = vmatpush1.msra.mxu0 0.0
      %1175 = vmatprep.subr.mxu0 0.0
      %1176 = vmatpush1.msra.mxu0 0.0
      %1177 = vmatprep.subr.mxu0 0.0
      %1178 = vmatpush1.msra.mxu0 0.0
      %1179 = vmatprep.subr.mxu0 0.0
      %1180 = vmatpush1.msra.mxu0 0.0
      %1181 = vmatprep.subr.mxu0 0.0
      %1182 = vmatpush1.msra.mxu0 0.0
      %1183 = vmatprep.mubr.f32.mxu0 0.0
      %1184 = vmatmul.mubr.f32.gmra.mrb[0].mxu0 %v1111
      %v1185 = vpop.f32.mrb[0].mxu0
      %v1186 = vadd.f32 0.0, %v1185
      %v1187 = vpop.f32.mrb[0].mxu0
      %v1188 = vadd.f32 0.0, %v1187
      %1189 = vdwg.mxu0
      %v1190 = vadd.f32 %v1075, %v1186
      %v1191 = vadd.f32 %v1076, %v1188
      %vm1192 = vcmp.ge.s32.totalorder %v418, 4294967295
      %vm1193 = vcmp.lt.s32.totalorder %v418, 15
      %vm1194 = vmand %vm1192, %vm1193
      %vm1195 = vmand %vm1194, %vm514
      %vm1196 = vmand %vm1195, %vm516
      %v1197 = vld [vmem:[#allocation2 + $0x4] sm:$0xff]
      %v1198 = vld [vmem:[#allocation2 + $0xc] sm:$0xf]
      %v1199 = vsel %vm1196, 1, 0
      %v1200 = vlaneseq
      %v1201 = vshrl.u32 %v1200, 7
      %v1202 = vsub.s32 0, %v1201
      %v1203 = vrot.slane %v1199, %v1202
      %v1204 = vlaneseq
      %v1205 = vshrl.u32 %v1204, 7
      %v1206 = vsub.s32 1, %v1205
      %v1207 = vrot.slane %v1199, %v1206
      %vm1208 = vcmp.eq.s32.totalorder %v1203, 1
      %vm1209 = vcmp.eq.s32.totalorder %v1207, 1
      %v1212 = vcombine.high %v1197, %v1197
      %1213 = vrot.lane.b32.xlu0 %v1197, 113
      %v1214 = vpop.permute.xlu0 %1213
      %1215 = vrot.lane.b32.xlu0 %v1212, 113
      %v1216 = vpop.permute.xlu0 %1215
      %1217 = vrot.lane.b32.xlu0 %v1198, 113
      %v1218 = vpop.permute.xlu0 %1217
      %vm1219 = vcmask 924672
      %v1220 = vsel %vm1219, %v1214, %v1216
      %v1221 = vsel %vm1219, %v1216, %v1218
      %v1224 = vsel %vm1208, %v1220, 0.0
      %v1225 = vsel %vm1209, %v1221, 0.0
      %s1226 = scalar_lea.vmem %s5, 24
      %v1227 = vld [vmem:[%s1226] sm:$0xf]
      %v1229 = vsel %vm577, %v1227, 0
      %v1232 = vsel %vm581, %v1224, 0
      %v1235 = vsel %vm581, %v1225, 0
      %1237 = vmatprep.subr.mxu0 %v1235
      %1238 = vmatpush1.msra.mxu0 %v1232
      %1239 = vmatprep.subr.mxu0 0.0
      %1240 = vmatpush1.msra.mxu0 0.0
      %1241 = vmatprep.subr.mxu0 0.0
      %1242 = vmatpush1.msra.mxu0 0.0
      %1243 = vmatprep.subr.mxu0 0.0
      %1244 = vmatpush1.msra.mxu0 0.0
      %1245 = vmatprep.subr.mxu0 0.0
      %1246 = vmatpush1.msra.mxu0 0.0
      %1247 = vmatprep.subr.mxu0 0.0
      %1248 = vmatpush1.msra.mxu0 0.0
      %1249 = vmatprep.subr.mxu0 0.0
      %1250 = vmatpush1.msra.mxu0 0.0
      %1251 = vmatprep.subr.mxu0 0.0
      %1252 = vmatpush1.msra.mxu0 0.0
      %1253 = vmatprep.subr.mxu0 0.0
      %1254 = vmatpush1.msra.mxu0 0.0
      %1255 = vmatprep.subr.mxu0 0.0
      %1256 = vmatpush1.msra.mxu0 0.0
      %1257 = vmatprep.subr.mxu0 0.0
      %1258 = vmatpush1.msra.mxu0 0.0
      %1259 = vmatprep.subr.mxu0 0.0
      %1260 = vmatpush1.msra.mxu0 0.0
      %1261 = vmatprep.subr.mxu0 0.0
      %1262 = vmatpush1.msra.mxu0 0.0
      %1263 = vmatprep.subr.mxu0 0.0
      %1264 = vmatpush1.msra.mxu0 0.0
      %1265 = vmatprep.subr.mxu0 0.0
      %1266 = vmatpush1.msra.mxu0 0.0
      %1267 = vmatprep.subr.mxu0 0.0
      %1268 = vmatpush1.msra.mxu0 0.0
      %1269 = vmatprep.subr.mxu0 0.0
      %1270 = vmatpush1.msra.mxu0 0.0
      %1271 = vmatprep.subr.mxu0 0.0
      %1272 = vmatpush1.msra.mxu0 0.0
      %1273 = vmatprep.subr.mxu0 0.0
      %1274 = vmatpush1.msra.mxu0 0.0
      %1275 = vmatprep.subr.mxu0 0.0
      %1276 = vmatpush1.msra.mxu0 0.0
      %1277 = vmatprep.subr.mxu0 0.0
      %1278 = vmatpush1.msra.mxu0 0.0
      %1279 = vmatprep.subr.mxu0 0.0
      %1280 = vmatpush1.msra.mxu0 0.0
      %1281 = vmatprep.subr.mxu0 0.0
      %1282 = vmatpush1.msra.mxu0 0.0
      %1283 = vmatprep.subr.mxu0 0.0
      %1284 = vmatpush1.msra.mxu0 0.0
      %1285 = vmatprep.subr.mxu0 0.0
      %1286 = vmatpush1.msra.mxu0 0.0
      %1287 = vmatprep.subr.mxu0 0.0
      %1288 = vmatpush1.msra.mxu0 0.0
      %1289 = vmatprep.subr.mxu0 0.0
      %1290 = vmatpush1.msra.mxu0 0.0
      %1291 = vmatprep.subr.mxu0 0.0
      %1292 = vmatpush1.msra.mxu0 0.0
      %1293 = vmatprep.subr.mxu0 0.0
      %1294 = vmatpush1.msra.mxu0 0.0
      %1295 = vmatprep.subr.mxu0 0.0
      %1296 = vmatpush1.msra.mxu0 0.0
      %1297 = vmatprep.subr.mxu0 0.0
      %1298 = vmatpush1.msra.mxu0 0.0
      %1299 = vmatprep.subr.mxu0 0.0
      %1300 = vmatpush1.msra.mxu0 0.0
      %1301 = vmatprep.mubr.f32.mxu0 0.0
      %1302 = vmatmul.mubr.f32.gmra.mrb[0].mxu0 %v1229
      %v1303 = vpop.f32.mrb[0].mxu0
      %v1304 = vadd.f32 0.0, %v1303
      %v1305 = vpop.f32.mrb[0].mxu0
      %v1306 = vadd.f32 0.0, %v1305
      %1307 = vdwg.mxu0
      %v1308 = vadd.f32 %v1190, %v1304
      %v1309 = vadd.f32 %v1191, %v1306
      %vm1310 = vmand %vm1194, %vm548
      %vm1311 = vmand %vm1310, %vm550
      %v1312 = vld [vmem:[#allocation2 + $0x4] sm:$0xff]
      %v1313 = vld [vmem:[#allocation2 + $0xc] sm:$0xf]
      %v1314 = vsel %vm1311, 1, 0
      %v1315 = vlaneseq
      %v1316 = vshrl.u32 %v1315, 7
      %v1317 = vsub.s32 0, %v1316
      %v1318 = vrot.slane %v1314, %v1317
      %v1319 = vlaneseq
      %v1320 = vshrl.u32 %v1319, 7
      %v1321 = vsub.s32 1, %v1320
      %v1322 = vrot.slane %v1314, %v1321
      %vm1323 = vcmp.eq.s32.totalorder %v1318, 1
      %vm1324 = vcmp.eq.s32.totalorder %v1322, 1
      %v1327 = vcombine.high %v1312, %v1312
      %1328 = vrot.lane.b32.xlu0 %v1312, 112
      %v1329 = vpop.permute.xlu0 %1328
      %1330 = vrot.lane.b32.xlu0 %v1327, 112
      %v1331 = vpop.permute.xlu0 %1330
      %1332 = vrot.lane.b32.xlu0 %v1313, 112
      %v1333 = vpop.permute.xlu0 %1332
      %vm1334 = vcmask 916480
      %v1335 = vsel %vm1334, %v1329, %v1331
      %v1336 = vsel %vm1334, %v1331, %v1333
      %v1339 = vsel %vm1323, %v1335, 0.0
      %v1340 = vsel %vm1324, %v1336, 0.0
      %s1341 = scalar_lea.vmem %s5, 28
      %v1342 = vld [vmem:[%s1341] sm:$0xf]
      %v1344 = vsel %vm577, %v1342, 0
      %v1347 = vsel %vm581, %v1339, 0
      %v1350 = vsel %vm581, %v1340, 0
      %1352 = vmatprep.subr.mxu0 %v1350
      %1353 = vmatpush1.msra.mxu0 %v1347
      %1354 = vmatprep.subr.mxu0 0.0
      %1355 = vmatpush1.msra.mxu0 0.0
      %1356 = vmatprep.subr.mxu0 0.0
      %1357 = vmatpush1.msra.mxu0 0.0
      %1358 = vmatprep.subr.mxu0 0.0
      %1359 = vmatpush1.msra.mxu0 0.0
      %1360 = vmatprep.subr.mxu0 0.0
      %1361 = vmatpush1.msra.mxu0 0.0
      %1362 = vmatprep.subr.mxu0 0.0
      %1363 = vmatpush1.msra.mxu0 0.0
      %1364 = vmatprep.subr.mxu0 0.0
      %1365 = vmatpush1.msra.mxu0 0.0
      %1366 = vmatprep.subr.mxu0 0.0
      %1367 = vmatpush1.msra.mxu0 0.0
      %1368 = vmatprep.subr.mxu0 0.0
      %1369 = vmatpush1.msra.mxu0 0.0
      %1370 = vmatprep.subr.mxu0 0.0
      %1371 = vmatpush1.msra.mxu0 0.0
      %1372 = vmatprep.subr.mxu0 0.0
      %1373 = vmatpush1.msra.mxu0 0.0
      %1374 = vmatprep.subr.mxu0 0.0
      %1375 = vmatpush1.msra.mxu0 0.0
      %1376 = vmatprep.subr.mxu0 0.0
      %1377 = vmatpush1.msra.mxu0 0.0
      %1378 = vmatprep.subr.mxu0 0.0
      %1379 = vmatpush1.msra.mxu0 0.0
      %1380 = vmatprep.subr.mxu0 0.0
      %1381 = vmatpush1.msra.mxu0 0.0
      %1382 = vmatprep.subr.mxu0 0.0
      %1383 = vmatpush1.msra.mxu0 0.0
      %1384 = vmatprep.subr.mxu0 0.0
      %1385 = vmatpush1.msra.mxu0 0.0
      %1386 = vmatprep.subr.mxu0 0.0
      %1387 = vmatpush1.msra.mxu0 0.0
      %1388 = vmatprep.subr.mxu0 0.0
      %1389 = vmatpush1.msra.mxu0 0.0
      %1390 = vmatprep.subr.mxu0 0.0
      %1391 = vmatpush1.msra.mxu0 0.0
      %1392 = vmatprep.subr.mxu0 0.0
      %1393 = vmatpush1.msra.mxu0 0.0
      %1394 = vmatprep.subr.mxu0 0.0
      %1395 = vmatpush1.msra.mxu0 0.0
      %1396 = vmatprep.subr.mxu0 0.0
      %1397 = vmatpush1.msra.mxu0 0.0
      %1398 = vmatprep.subr.mxu0 0.0
      %1399 = vmatpush1.msra.mxu0 0.0
      %1400 = vmatprep.subr.mxu0 0.0
      %1401 = vmatpush1.msra.mxu0 0.0
      %1402 = vmatprep.subr.mxu0 0.0
      %1403 = vmatpush1.msra.mxu0 0.0
      %1404 = vmatprep.subr.mxu0 0.0
      %1405 = vmatpush1.msra.mxu0 0.0
      %1406 = vmatprep.subr.mxu0 0.0
      %1407 = vmatpush1.msra.mxu0 0.0
      %1408 = vmatprep.subr.mxu0 0.0
      %1409 = vmatpush1.msra.mxu0 0.0
      %1410 = vmatprep.subr.mxu0 0.0
      %1411 = vmatpush1.msra.mxu0 0.0
      %1412 = vmatprep.subr.mxu0 0.0
      %1413 = vmatpush1.msra.mxu0 0.0
      %1414 = vmatprep.subr.mxu0 0.0
      %1415 = vmatpush1.msra.mxu0 0.0
      %1416 = vmatprep.mubr.f32.mxu0 0.0
      %1417 = vmatmul.mubr.f32.gmra.mrb[0].mxu0 %v1344
      %v1418 = vpop.f32.mrb[0].mxu0
      %v1419 = vadd.f32 0.0, %v1418
      %v1420 = vpop.f32.mrb[0].mxu0
      %v1421 = vadd.f32 0.0, %v1420
      %1422 = vdwg.mxu0
      %v1423 = vadd.f32 %v1308, %v1419
      %v1424 = vadd.f32 %v1309, %v1421
      %vm1425 = vmand %vm1194, %vm739
      %vm1426 = vmand %vm1425, %vm741
      %v1427 = vld [vmem:[#allocation2 + $0x4] sm:$0xff]
      %v1428 = vld [vmem:[#allocation2 + $0xc] sm:$0xf]
      %v1429 = vsel %vm1426, 1, 0
      %v1430 = vlaneseq
      %v1431 = vshrl.u32 %v1430, 7
      %v1432 = vsub.s32 0, %v1431
      %v1433 = vrot.slane %v1429, %v1432
      %v1434 = vlaneseq
      %v1435 = vshrl.u32 %v1434, 7
      %v1436 = vsub.s32 1, %v1435
      %v1437 = vrot.slane %v1429, %v1436
      %vm1438 = vcmp.eq.s32.totalorder %v1433, 1
      %vm1439 = vcmp.eq.s32.totalorder %v1437, 1
      %v1442 = vcombine.high %v1427, %v1427
      %1443 = vrot.lane.b32.xlu0 %v1427, 111
      %v1444 = vpop.permute.xlu0 %1443
      %1445 = vrot.lane.b32.xlu0 %v1442, 111
      %v1446 = vpop.permute.xlu0 %1445
      %1447 = vrot.lane.b32.xlu0 %v1428, 111
      %v1448 = vpop.permute.xlu0 %1447
      %vm1449 = vcmask 908288
      %v1450 = vsel %vm1449, %v1444, %v1446
      %v1451 = vsel %vm1449, %v1446, %v1448
      %v1454 = vsel %vm1438, %v1450, 0.0
      %v1455 = vsel %vm1439, %v1451, 0.0
      %s1456 = scalar_lea.vmem %s5, 32
      %v1457 = vld [vmem:[%s1456] sm:$0xf]
      %v1459 = vsel %vm577, %v1457, 0
      %v1462 = vsel %vm581, %v1454, 0
      %v1465 = vsel %vm581, %v1455, 0
      %1467 = vmatprep.subr.mxu0 %v1465
      %1468 = vmatpush1.msra.mxu0 %v1462
      %1469 = vmatprep.subr.mxu0 0.0
      %1470 = vmatpush1.msra.mxu0 0.0
      %1471 = vmatprep.subr.mxu0 0.0
      %1472 = vmatpush1.msra.mxu0 0.0
      %1473 = vmatprep.subr.mxu0 0.0
      %1474 = vmatpush1.msra.mxu0 0.0
      %1475 = vmatprep.subr.mxu0 0.0
      %1476 = vmatpush1.msra.mxu0 0.0
      %1477 = vmatprep.subr.mxu0 0.0
      %1478 = vmatpush1.msra.mxu0 0.0
      %1479 = vmatprep.subr.mxu0 0.0
      %1480 = vmatpush1.msra.mxu0 0.0
      %1481 = vmatprep.subr.mxu0 0.0
      %1482 = vmatpush1.msra.mxu0 0.0
      %1483 = vmatprep.subr.mxu0 0.0
      %1484 = vmatpush1.msra.mxu0 0.0
      %1485 = vmatprep.subr.mxu0 0.0
      %1486 = vmatpush1.msra.mxu0 0.0
      %1487 = vmatprep.subr.mxu0 0.0
      %1488 = vmatpush1.msra.mxu0 0.0
      %1489 = vmatprep.subr.mxu0 0.0
      %1490 = vmatpush1.msra.mxu0 0.0
      %1491 = vmatprep.subr.mxu0 0.0
      %1492 = vmatpush1.msra.mxu0 0.0
      %1493 = vmatprep.subr.mxu0 0.0
      %1494 = vmatpush1.msra.mxu0 0.0
      %1495 = vmatprep.subr.mxu0 0.0
      %1496 = vmatpush1.msra.mxu0 0.0
      %1497 = vmatprep.subr.mxu0 0.0
      %1498 = vmatpush1.msra.mxu0 0.0
      %1499 = vmatprep.subr.mxu0 0.0
      %1500 = vmatpush1.msra.mxu0 0.0
      %1501 = vmatprep.subr.mxu0 0.0
      %1502 = vmatpush1.msra.mxu0 0.0
      %1503 = vmatprep.subr.mxu0 0.0
      %1504 = vmatpush1.msra.mxu0 0.0
      %1505 = vmatprep.subr.mxu0 0.0
      %1506 = vmatpush1.msra.mxu0 0.0
      %1507 = vmatprep.subr.mxu0 0.0
      %1508 = vmatpush1.msra.mxu0 0.0
      %1509 = vmatprep.subr.mxu0 0.0
      %1510 = vmatpush1.msra.mxu0 0.0
      %1511 = vmatprep.subr.mxu0 0.0
      %1512 = vmatpush1.msra.mxu0 0.0
      %1513 = vmatprep.subr.mxu0 0.0
      %1514 = vmatpush1.msra.mxu0 0.0
      %1515 = vmatprep.subr.mxu0 0.0
      %1516 = vmatpush1.msra.mxu0 0.0
      %1517 = vmatprep.subr.mxu0 0.0
      %1518 = vmatpush1.msra.mxu0 0.0
      %1519 = vmatprep.subr.mxu0 0.0
      %1520 = vmatpush1.msra.mxu0 0.0
      %1521 = vmatprep.subr.mxu0 0.0
      %1522 = vmatpush1.msra.mxu0 0.0
      %1523 = vmatprep.subr.mxu0 0.0
      %1524 = vmatpush1.msra.mxu0 0.0
      %1525 = vmatprep.subr.mxu0 0.0
      %1526 = vmatpush1.msra.mxu0 0.0
      %1527 = vmatprep.subr.mxu0 0.0
      %1528 = vmatpush1.msra.mxu0 0.0
      %1529 = vmatprep.subr.mxu0 0.0
      %1530 = vmatpush1.msra.mxu0 0.0
      %1531 = vmatprep.mubr.f32.mxu0 0.0
      %1532 = vmatmul.mubr.f32.gmra.mrb[0].mxu0 %v1459
      %v1533 = vpop.f32.mrb[0].mxu0
      %v1534 = vadd.f32 0.0, %v1533
      %v1535 = vpop.f32.mrb[0].mxu0
      %v1536 = vadd.f32 0.0, %v1535
      %1537 = vdwg.mxu0
      %v1538 = vadd.f32 %v1423, %v1534
      %v1539 = vadd.f32 %v1424, %v1536
      %v1540 = vld [vmem:[%s6] sm:$0xf]
      %1542 = vset.pattern.permute.xlu0 0
      %1543 = vperm.xlu0 %1542, %v1540
      %v1544 = vpop.permute.xlu0 %1543
      %v1546 = vadd.f32 %v1538, %v1544
      %v1547 = vadd.f32 %v1539, %v1544
      %v1548 = vmax.f32 %v1546, 0.0
      %v1549 = vmax.f32 %v1547, 0.0
      %v1550 = vld [vmem:[%s7] sm:$0xff]
      %v1551 = vld [vmem:[%s7 + $0x8] sm:$0xff]
      %v1552 = vld [vmem:[%s8] sm:$0xff]
      %v1553 = vld [vmem:[%s8 + $0x8] sm:$0xff]
      %1555 = vset.pattern.permute.xlu0 0
      %1556 = vperm.xlu0 %1555, %v1552
      %v1557 = vpop.permute.xlu0 %1556
      %1560 = vset.pattern.permute.xlu0 0
      %1561 = vperm.xlu0 %1560, %v1553
      %v1562 = vpop.permute.xlu0 %1561
      %v1565 = vsel %vm577, %v1550, 0
      %v1568 = vsel %vm577, %v1551, 0
      %v1571 = vsel %vm581, %v1548, 0
      %v1574 = vsel %vm581, %v1549, 0
      %1576 = vmatprep.subr.mxu0 %v1574
      %1577 = vmatpush1.msra.mxu0 %v1571
      %1578 = vmatprep.subr.mxu0 0.0
      %1579 = vmatpush1.msra.mxu0 0.0
      %1580 = vmatprep.subr.mxu0 0.0
      %1581 = vmatpush1.msra.mxu0 0.0
      %1582 = vmatprep.subr.mxu0 0.0
      %1583 = vmatpush1.msra.mxu0 0.0
      %1584 = vmatprep.subr.mxu0 0.0
      %1585 = vmatpush1.msra.mxu0 0.0
      %1586 = vmatprep.subr.mxu0 0.0
      %1587 = vmatpush1.msra.mxu0 0.0
      %1588 = vmatprep.subr.mxu0 0.0
      %1589 = vmatpush1.msra.mxu0 0.0
      %1590 = vmatprep.subr.mxu0 0.0
      %1591 = vmatpush1.msra.mxu0 0.0
      %1592 = vmatprep.subr.mxu0 0.0
      %1593 = vmatpush1.msra.mxu0 0.0
      %1594 = vmatprep.subr.mxu0 0.0
      %1595 = vmatpush1.msra.mxu0 0.0
      %1596 = vmatprep.subr.mxu0 0.0
      %1597 = vmatpush1.msra.mxu0 0.0
      %1598 = vmatprep.subr.mxu0 0.0
      %1599 = vmatpush1.msra.mxu0 0.0
      %1600 = vmatprep.subr.mxu0 0.0
      %1601 = vmatpush1.msra.mxu0 0.0
      %1602 = vmatprep.subr.mxu0 0.0
      %1603 = vmatpush1.msra.mxu0 0.0
      %1604 = vmatprep.subr.mxu0 0.0
      %1605 = vmatpush1.msra.mxu0 0.0
      %1606 = vmatprep.subr.mxu0 0.0
      %1607 = vmatpush1.msra.mxu0 0.0
      %1608 = vmatprep.subr.mxu0 0.0
      %1609 = vmatpush1.msra.mxu0 0.0
      %1610 = vmatprep.subr.mxu0 0.0
      %1611 = vmatpush1.msra.mxu0 0.0
      %1612 = vmatprep.subr.mxu0 0.0
      %1613 = vmatpush1.msra.mxu0 0.0
      %1614 = vmatprep.subr.mxu0 0.0
      %1615 = vmatpush1.msra.mxu0 0.0
      %1616 = vmatprep.subr.mxu0 0.0
      %1617 = vmatpush1.msra.mxu0 0.0
      %1618 = vmatprep.subr.mxu0 0.0
      %1619 = vmatpush1.msra.mxu0 0.0
      %1620 = vmatprep.subr.mxu0 0.0
      %1621 = vmatpush1.msra.mxu0 0.0
      %1622 = vmatprep.subr.mxu0 0.0
      %1623 = vmatpush1.msra.mxu0 0.0
      %1624 = vmatprep.subr.mxu0 0.0
      %1625 = vmatpush1.msra.mxu0 0.0
      %1626 = vmatprep.subr.mxu0 0.0
      %1627 = vmatpush1.msra.mxu0 0.0
      %1628 = vmatprep.subr.mxu0 0.0
      %1629 = vmatpush1.msra.mxu0 0.0
      %1630 = vmatprep.subr.mxu0 0.0
      %1631 = vmatpush1.msra.mxu0 0.0
      %1632 = vmatprep.subr.mxu0 0.0
      %1633 = vmatpush1.msra.mxu0 0.0
      %1634 = vmatprep.subr.mxu0 0.0
      %1635 = vmatpush1.msra.mxu0 0.0
      %1636 = vmatprep.subr.mxu0 0.0
      %1637 = vmatpush1.msra.mxu0 0.0
      %1638 = vmatprep.subr.mxu0 0.0
      %1639 = vmatpush1.msra.mxu0 0.0
      %1640 = vmatprep.mubr.f32.mxu0 0.0
      %1641 = vmatmul.mubr.f32.gmra.mrb[0].mxu0 %v1565
      %v1642 = vpop.f32.mrb[0].mxu0
      %v1643 = vadd.f32 %v1557, %v1642
      %v1644 = vpop.f32.mrb[0].mxu0
      %v1645 = vadd.f32 %v1557, %v1644
      %1646 = vmatprep.mubr.f32.mxu0 0.0
      %1647 = vmatmul.mubr.f32.gmra.mrb[0].mxu0 %v1568
      %v1648 = vpop.f32.mrb[0].mxu0
      %v1649 = vadd.f32 %v1562, %v1648
      %v1650 = vpop.f32.mrb[0].mxu0
      %v1651 = vadd.f32 %v1562, %v1650
      %1652 = vdwg.mxu0
      %v1653 = vadd.f32 %v1643, %v1645
      %1654 = vadd.xlane.f32.xlu0 %v1653
      %v1655 = vpop.xlane.xlu0 %1654
      %v1656 = vadd.f32 %v1649, %v1651
      %1657 = vadd.xlane.f32.xlu0 %v1656
      %v1658 = vpop.xlane.xlu0 %1657
      %v1659 = vmul.f32 %v1655, 0.00390625
      %v1660 = vmul.f32 %v1658, 0.00390625
      %v1661 = vmax.f32 %v1643, %v1645
      %1662 = vmax.xlane.f32.xlu0 %v1661
      %v1663 = vpop.xlane.xlu0 %1662
      %v1664 = vmax.f32 %v1649, %v1651
      %1665 = vmax.xlane.f32.xlu0 %v1664
      %v1666 = vpop.xlane.xlu0 %1665
      %v1667 = vld [vmem:[%s9] sm:$0xff]
      %v1668 = vld [vmem:[%s9 + $0x8] sm:$0xff]
      %v1669 = vld [vmem:[%s10] sm:$0xff]
      %v1670 = vld [vmem:[%s10 + $0x8] sm:$0xff]
      %v1671 = vmul.f32 %v1667, %v1659
      %v1672 = vmul.f32 %v1668, %v1660
      %v1673 = vsel %vm883, %v1671, 0.0
      %v1674 = vsel %vm883, %v1672, 0.0
      %v1675 = vadd.f32 %v1673, %v1674
      %v1676 = vrot.slane %v1675, 4
      %v1677 = vadd.f32 %v1675, %v1676
      %v1678 = vrot.slane %v1677, 2
      %v1679 = vadd.f32 %v1677, %v1678
      %v1680 = vrot.slane %v1679, 1
      %v1681 = vadd.f32 %v1679, %v1680
      %v1682 = vmax.f32 %v1681, 0.0
      %v1683 = vmul.f32 %v1669, %v1682
      %v1684 = vmul.f32 %v1670, %v1682
      %v1685 = vadd.f32 %v1683, 0.0
      %v1686 = vadd.f32 %v1684, 0.0
      %v1687 = vmul.f32 %v1667, %v1663
      %v1688 = vmul.f32 %v1668, %v1666
      %v1689 = vsel %vm883, %v1687, 0.0
      %v1690 = vsel %vm883, %v1688, 0.0
      %v1691 = vadd.f32 %v1689, %v1690
      %v1692 = vrot.slane %v1691, 4
      %v1693 = vadd.f32 %v1691, %v1692
      %v1694 = vrot.slane %v1693, 2
      %v1695 = vadd.f32 %v1693, %v1694
      %v1696 = vrot.slane %v1695, 1
      %v1697 = vadd.f32 %v1695, %v1696
      %v1698 = vmax.f32 %v1697, 0.0
      %v1699 = vmul.f32 %v1669, %v1698
      %v1700 = vmul.f32 %v1670, %v1698
      %v1701 = vadd.f32 %v1699, 0.0
      %v1702 = vadd.f32 %v1700, 0.0
      %v1703 = vadd.f32 %v1685, %v1701
      %v1704 = vadd.f32 %v1686, %v1702
      %v1705 = vsub.f32 0.0, %v1703
      %v1706 = vsub.f32 0.0, %v1704
      %v1707 = vmul.f32 %v1705, 1.442695
      %v1708 = vpow.pop %v1707
      %v1709 = vmul.f32 %v1706, 1.442695
      %v1710 = vpow.pop %v1709
      %v1711 = vadd.f32 %v1708, 1.0
      %v1712 = vadd.f32 %v1710, 1.0
      %v1713 = vrcp.pop %v1711
      %v1714 = vmul.f32 1.0, %v1713
      %v1715 = vrcp.pop %v1712
      %v1716 = vmul.f32 1.0, %v1715
      %1718 = vset.pattern.permute.xlu0 0
      %1719 = vperm.xlu0 %1718, %v1714
      %v1720 = vpop.permute.xlu0 %1719
      %1723 = vset.pattern.permute.xlu0 0
      %1724 = vperm.xlu0 %1723, %v1716
      %v1725 = vpop.permute.xlu0 %1724
      %v1727 = vmul.f32 %v1643, %v1720
      %v1728 = vmul.f32 %v1645, %v1720
      %v1729 = vmul.f32 %v1649, %v1725
      %v1730 = vmul.f32 %v1651, %v1725
      %v1731 = vadd.f32 %v1727, %v1729
      %v1732 = vrot.slane %v1731, 4
      %v1733 = vadd.f32 %v1731, %v1732
      %v1734 = vrot.slane %v1733, 2
      %v1735 = vadd.f32 %v1733, %v1734
      %v1736 = vrot.slane %v1735, 1
      %v1737 = vadd.f32 %v1735, %v1736
      %v1738 = vadd.f32 %v1728, %v1730
      %v1739 = vrot.slane %v1738, 4
      %v1740 = vadd.f32 %v1738, %v1739
      %v1741 = vrot.slane %v1740, 2
      %v1742 = vadd.f32 %v1740, %v1741
      %v1743 = vrot.slane %v1742, 1
      %v1744 = vadd.f32 %v1742, %v1743
      %v1745 = vmul.f32 %v1737, 0.0625
      %v1746 = vmul.f32 %v1744, 0.0625
      %v1747 = vmax.f32 %v1727, %v1729
      %v1748 = vrot.slane %v1747, 4
      %v1749 = vmax.f32 %v1747, %v1748
      %v1750 = vrot.slane %v1749, 2
      %v1751 = vmax.f32 %v1749, %v1750
      %v1752 = vrot.slane %v1751, 1
      %v1753 = vmax.f32 %v1751, %v1752
      %v1754 = vmax.f32 %v1728, %v1730
      %v1755 = vrot.slane %v1754, 4
      %v1756 = vmax.f32 %v1754, %v1755
      %v1757 = vrot.slane %v1756, 2
      %v1758 = vmax.f32 %v1756, %v1757
      %v1759 = vrot.slane %v1758, 1
      %v1760 = vmax.f32 %v1758, %v1759
      %1761 = vst [vmem:[#allocation3] sm:$0xff] 0.0
      %v1764 = vcombine.low %v1745, %v1746
      %v1766 = vunpack.c.l.s4 1966171168
      %v1767 = vunpack.c.0.s8 %v1766
      %v1768 = vlaneseq
      %v1769 = vshrl.u32 %v1768, 7
      %v1770 = vsub.s32 %v1767, %v1769
      %v1771 = vrot.slane %v1764, %v1770
      %v1773 = vunpack.c.l.s4 1966171168
      %v1774 = vunpack.c.0.s8 %v1773
      %v1775 = vlaneseq
      %v1776 = vshrl.u32 %v1775, 7
      %v1777 = vsub.s32 %v1774, %v1776
      %v1778 = vrot.slane %v1771, %v1777
      %v1780 = vlaneseq
      %vm1781 = vcmp.ge.s32.totalorder %v1780, 0
      %vm1782 = vcmp.lt.s32.totalorder %v1780, 256
      %vm1783 = vmand %vm1781, %vm1782
      %s1784 = scalar_lea.vmem [#allocation3], 2
      %1785 = vst.msk [vmem:[%s1784] ss:$2 sm:$0x3] %vm1783, %v1778
      %v1788 = vcombine.low %v1753, %v1760
      %v1790 = vunpack.c.l.s4 1966171168
      %v1791 = vunpack.c.0.s8 %v1790
      %v1792 = vlaneseq
      %v1793 = vshrl.u32 %v1792, 7
      %v1794 = vsub.s32 %v1791, %v1793
      %v1795 = vrot.slane %v1788, %v1794
      %v1797 = vunpack.c.l.s4 1966171168
      %v1798 = vunpack.c.0.s8 %v1797
      %v1799 = vlaneseq
      %v1800 = vshrl.u32 %v1799, 7
      %v1801 = vsub.s32 %v1798, %v1800
      %v1802 = vrot.slane %v1795, %v1801
      %s1804 = scalar_lea.vmem [#allocation3], 3
      %1805 = vst.msk [vmem:[%s1804] ss:$2 sm:$0x3] %vm1783, %v1802
      %v1806 = vld [vmem:[%s11] sm:$0x3]
      %v1807 = vld [vmem:[#allocation3] sm:$0x3f]
      %1809 = vset.pattern.permute.xlu0 0
      %1810 = vperm.xlu0 %1809, %v1806
      %v1811 = vpop.permute.xlu0 %1810
      %v1814 = vcombine.high %v1807, %v1807
      %v1816 = vunpack.c.l.s4 1983009808
      %v1817 = vunpack.c.0.s8 %v1816
      %v1818 = vlaneseq
      %v1819 = vshrl.u32 %v1818, 7
      %v1820 = vsub.s32 %v1817, %v1819
      %v1821 = vrot.slane %v1807, %v1820
      %v1823 = vunpack.c.l.s4 1983009808
      %v1824 = vunpack.c.0.s8 %v1823
      %v1825 = vlaneseq
      %v1826 = vshrl.u32 %v1825, 7
      %v1827 = vsub.s32 %v1824, %v1826
      %v1828 = vrot.slane %v1814, %v1827
      %v1829 = vcombine.high %v1821, %v1821
      %1830 = vrot.lane.b32.xlu0 %v1821, 51
      %v1831 = vpop.permute.xlu0 %1830
      %1832 = vrot.lane.b32.xlu0 %v1829, 51
      %v1833 = vpop.permute.xlu0 %1832
      %1834 = vrot.lane.b32.xlu0 %v1828, 51
      %v1835 = vpop.permute.xlu0 %1834
      %vm1836 = vcmask 416768
      %v1837 = vsel %vm1836, %v1831, %v1833
      %v1838 = vsel %vm1836, %v1833, %v1835
      %v1841 = vmul.f32 %v1811, %v1837
      %v1842 = vmul.f32 %v1811, %v1838
      %vm1843 = vcmp.ge.s32.totalorder %v418, 3
      %vm1844 = vcmp.lt.s32.totalorder %v418, 19
      %vm1845 = vmand %vm1843, %vm1844
      %vm1846 = vcmp.ge.s32.totalorder %v419, 3
      %vm1847 = vmand %vm1845, %vm1846
      %vm1848 = vcmp.lt.s32.totalorder %v419, 19
      %vm1849 = vmand %vm1847, %vm1848
      %v1850 = vsel %vm1849, 1, 0
      %v1851 = vlaneseq
      %v1852 = vshrl.u32 %v1851, 7
      %v1853 = vsub.s32 0, %v1852
      %v1854 = vrot.slane %v1850, %v1853
      %v1855 = vlaneseq
      %v1856 = vshrl.u32 %v1855, 7
      %v1857 = vsub.s32 1, %v1856
      %v1858 = vrot.slane %v1850, %v1857
      %vm1859 = vcmp.eq.s32.totalorder %v1854, 1
      %vm1860 = vcmp.eq.s32.totalorder %v1858, 1
      %v1861 = vsel %vm1859, %v1841, 0.0
      %v1862 = vsel %vm1860, %v1842, 0.0
      %v1863 = vadd.f32 %v1861, 0.0
      %v1864 = vadd.f32 %v1862, 0.0
      %v1865 = vld [vmem:[#allocation3] sm:$0x3f]
      %1866 = vset.pattern.permute.xlu0 1
      %1867 = vperm.xlu0 %1866, %v1806
      %v1868 = vpop.permute.xlu0 %1867
      %v1871 = vcombine.high %v1865, %v1865
      %v1873 = vunpack.c.l.s4 1983009808
      %v1874 = vunpack.c.0.s8 %v1873
      %v1875 = vlaneseq
      %v1876 = vshrl.u32 %v1875, 7
      %v1877 = vsub.s32 %v1874, %v1876
      %v1878 = vrot.slane %v1865, %v1877
      %v1880 = vunpack.c.l.s4 1983009808
      %v1881 = vunpack.c.0.s8 %v1880
      %v1882 = vlaneseq
      %v1883 = vshrl.u32 %v1882, 7
      %v1884 = vsub.s32 %v1881, %v1883
      %v1885 = vrot.slane %v1871, %v1884
      %v1886 = vcombine.high %v1878, %v1878
      %1887 = vrot.lane.b32.xlu0 %v1878, 50
      %v1888 = vpop.permute.xlu0 %1887
      %1889 = vrot.lane.b32.xlu0 %v1886, 50
      %v1890 = vpop.permute.xlu0 %1889
      %1891 = vrot.lane.b32.xlu0 %v1885, 50
      %v1892 = vpop.permute.xlu0 %1891
      %vm1893 = vcmask 408576
      %v1894 = vsel %vm1893, %v1888, %v1890
      %v1895 = vsel %vm1893, %v1890, %v1892
      %v1898 = vmul.f32 %v1868, %v1894
      %v1899 = vmul.f32 %v1868, %v1895
      %vm1900 = vcmp.ge.s32.totalorder %v419, 2
      %vm1901 = vmand %vm1845, %vm1900
      %vm1902 = vcmp.lt.s32.totalorder %v419, 18
      %vm1903 = vmand %vm1901, %vm1902
      %v1904 = vsel %vm1903, 1, 0
      %v1905 = vlaneseq
      %v1906 = vshrl.u32 %v1905, 7
      %v1907 = vsub.s32 0, %v1906
      %v1908 = vrot.slane %v1904, %v1907
      %v1909 = vlaneseq
      %v1910 = vshrl.u32 %v1909, 7
      %v1911 = vsub.s32 1, %v1910
      %v1912 = vrot.slane %v1904, %v1911
      %vm1913 = vcmp.eq.s32.totalorder %v1908, 1
      %vm1914 = vcmp.eq.s32.totalorder %v1912, 1
      %v1915 = vsel %vm1913, %v1898, 0.0
      %v1916 = vsel %vm1914, %v1899, 0.0
      %v1917 = vadd.f32 %v1863, %v1915
      %v1918 = vadd.f32 %v1864, %v1916
      %v1919 = vld [vmem:[#allocation3] sm:$0x3f]
      %1920 = vset.pattern.permute.xlu0 2
      %1921 = vperm.xlu0 %1920, %v1806
      %v1922 = vpop.permute.xlu0 %1921
      %v1925 = vcombine.high %v1919, %v1919
      %v1927 = vunpack.c.l.s4 1983009808
      %v1928 = vunpack.c.0.s8 %v1927
      %v1929 = vlaneseq
      %v1930 = vshrl.u32 %v1929, 7
      %v1931 = vsub.s32 %v1928, %v1930
      %v1932 = vrot.slane %v1919, %v1931
      %v1934 = vunpack.c.l.s4 1983009808
      %v1935 = vunpack.c.0.s8 %v1934
      %v1936 = vlaneseq
      %v1937 = vshrl.u32 %v1936, 7
      %v1938 = vsub.s32 %v1935, %v1937
      %v1939 = vrot.slane %v1925, %v1938
      %v1940 = vcombine.high %v1932, %v1932
      %1941 = vrot.lane.b32.xlu0 %v1932, 49
      %v1942 = vpop.permute.xlu0 %1941
      %1943 = vrot.lane.b32.xlu0 %v1940, 49
      %v1944 = vpop.permute.xlu0 %1943
      %1945 = vrot.lane.b32.xlu0 %v1939, 49
      %v1946 = vpop.permute.xlu0 %1945
      %vm1947 = vcmask 400384
      %v1948 = vsel %vm1947, %v1942, %v1944
      %v1949 = vsel %vm1947, %v1944, %v1946
      %v1952 = vmul.f32 %v1922, %v1948
      %v1953 = vmul.f32 %v1922, %v1949
      %vm1954 = vmand %vm1845, %vm514
      %vm1955 = vmand %vm1954, %vm516
      %v1956 = vsel %vm1955, 1, 0
      %v1957 = vlaneseq
      %v1958 = vshrl.u32 %v1957, 7
      %v1959 = vsub.s32 0, %v1958
      %v1960 = vrot.slane %v1956, %v1959
      %v1961 = vlaneseq
      %v1962 = vshrl.u32 %v1961, 7
      %v1963 = vsub.s32 1, %v1962
      %v1964 = vrot.slane %v1956, %v1963
      %vm1965 = vcmp.eq.s32.totalorder %v1960, 1
      %vm1966 = vcmp.eq.s32.totalorder %v1964, 1
      %v1967 = vsel %vm1965, %v1952, 0.0
      %v1968 = vsel %vm1966, %v1953, 0.0
      %v1969 = vadd.f32 %v1917, %v1967
      %v1970 = vadd.f32 %v1918, %v1968
      %v1971 = vld [vmem:[#allocation3] sm:$0x3f]
      %1972 = vset.pattern.permute.xlu0 3
      %1973 = vperm.xlu0 %1972, %v1806
      %v1974 = vpop.permute.xlu0 %1973
      %v1977 = vcombine.high %v1971, %v1971
      %v1979 = vunpack.c.l.s4 1983009808
      %v1980 = vunpack.c.0.s8 %v1979
      %v1981 = vlaneseq
      %v1982 = vshrl.u32 %v1981, 7
      %v1983 = vsub.s32 %v1980, %v1982
      %v1984 = vrot.slane %v1971, %v1983
      %v1986 = vunpack.c.l.s4 1983009808
      %v1987 = vunpack.c.0.s8 %v1986
      %v1988 = vlaneseq
      %v1989 = vshrl.u32 %v1988, 7
      %v1990 = vsub.s32 %v1987, %v1989
      %v1991 = vrot.slane %v1977, %v1990
      %v1992 = vcombine.high %v1984, %v1984
      %1993 = vrot.lane.b32.xlu0 %v1984, 48
      %v1994 = vpop.permute.xlu0 %1993
      %1995 = vrot.lane.b32.xlu0 %v1992, 48
      %v1996 = vpop.permute.xlu0 %1995
      %1997 = vrot.lane.b32.xlu0 %v1991, 48
      %v1998 = vpop.permute.xlu0 %1997
      %vm1999 = vcmask 392192
      %v2000 = vsel %vm1999, %v1994, %v1996
      %v2001 = vsel %vm1999, %v1996, %v1998
      %v2004 = vmul.f32 %v1974, %v2000
      %v2005 = vmul.f32 %v1974, %v2001
      %vm2006 = vmand %vm1845, %vm548
      %vm2007 = vmand %vm2006, %vm550
      %v2008 = vsel %vm2007, 1, 0
      %v2009 = vlaneseq
      %v2010 = vshrl.u32 %v2009, 7
      %v2011 = vsub.s32 0, %v2010
      %v2012 = vrot.slane %v2008, %v2011
      %v2013 = vlaneseq
      %v2014 = vshrl.u32 %v2013, 7
      %v2015 = vsub.s32 1, %v2014
      %v2016 = vrot.slane %v2008, %v2015
      %vm2017 = vcmp.eq.s32.totalorder %v2012, 1
      %vm2018 = vcmp.eq.s32.totalorder %v2016, 1
      %v2019 = vsel %vm2017, %v2004, 0.0
      %v2020 = vsel %vm2018, %v2005, 0.0
      %v2021 = vadd.f32 %v1969, %v2019
      %v2022 = vadd.f32 %v1970, %v2020
      %v2023 = vld [vmem:[#allocation3] sm:$0x3f]
      %2024 = vset.pattern.permute.xlu0 4
      %2025 = vperm.xlu0 %2024, %v1806
      %v2026 = vpop.permute.xlu0 %2025
      %v2029 = vcombine.high %v2023, %v2023
      %v2031 = vunpack.c.l.s4 1983009808
      %v2032 = vunpack.c.0.s8 %v2031
      %v2033 = vlaneseq
      %v2034 = vshrl.u32 %v2033, 7
      %v2035 = vsub.s32 %v2032, %v2034
      %v2036 = vrot.slane %v2023, %v2035
      %v2038 = vunpack.c.l.s4 1983009808
      %v2039 = vunpack.c.0.s8 %v2038
      %v2040 = vlaneseq
      %v2041 = vshrl.u32 %v2040, 7
      %v2042 = vsub.s32 %v2039, %v2041
      %v2043 = vrot.slane %v2029, %v2042
      %v2044 = vcombine.high %v2036, %v2036
      %2045 = vrot.lane.b32.xlu0 %v2036, 47
      %v2046 = vpop.permute.xlu0 %2045
      %2047 = vrot.lane.b32.xlu0 %v2044, 47
      %v2048 = vpop.permute.xlu0 %2047
      %2049 = vrot.lane.b32.xlu0 %v2043, 47
      %v2050 = vpop.permute.xlu0 %2049
      %vm2051 = vcmask 384000
      %v2052 = vsel %vm2051, %v2046, %v2048
      %v2053 = vsel %vm2051, %v2048, %v2050
      %v2056 = vmul.f32 %v2026, %v2052
      %v2057 = vmul.f32 %v2026, %v2053
      %vm2058 = vmand %vm1845, %vm739
      %vm2059 = vmand %vm2058, %vm741
      %v2060 = vsel %vm2059, 1, 0
      %v2061 = vlaneseq
      %v2062 = vshrl.u32 %v2061, 7
      %v2063 = vsub.s32 0, %v2062
      %v2064 = vrot.slane %v2060, %v2063
      %v2065 = vlaneseq
      %v2066 = vshrl.u32 %v2065, 7
      %v2067 = vsub.s32 1, %v2066
      %v2068 = vrot.slane %v2060, %v2067
      %vm2069 = vcmp.eq.s32.totalorder %v2064, 1
      %vm2070 = vcmp.eq.s32.totalorder %v2068, 1
      %v2071 = vsel %vm2069, %v2056, 0.0
      %v2072 = vsel %vm2070, %v2057, 0.0
      %v2073 = vadd.f32 %v2021, %v2071
      %v2074 = vadd.f32 %v2022, %v2072
      %v2075 = vld [vmem:[#allocation3] sm:$0x3f]
      %2076 = vset.pattern.permute.xlu0 5
      %2077 = vperm.xlu0 %2076, %v1806
      %v2078 = vpop.permute.xlu0 %2077
      %v2081 = vcombine.high %v2075, %v2075
      %v2083 = vunpack.c.l.s4 1983009808
      %v2084 = vunpack.c.0.s8 %v2083
      %v2085 = vlaneseq
      %v2086 = vshrl.u32 %v2085, 7
      %v2087 = vsub.s32 %v2084, %v2086
      %v2088 = vrot.slane %v2075, %v2087
      %v2090 = vunpack.c.l.s4 1983009808
      %v2091 = vunpack.c.0.s8 %v2090
      %v2092 = vlaneseq
      %v2093 = vshrl.u32 %v2092, 7
      %v2094 = vsub.s32 %v2091, %v2093
      %v2095 = vrot.slane %v2081, %v2094
      %v2096 = vcombine.high %v2088, %v2088
      %2097 = vrot.lane.b32.xlu0 %v2088, 46
      %v2098 = vpop.permute.xlu0 %2097
      %2099 = vrot.lane.b32.xlu0 %v2096, 46
      %v2100 = vpop.permute.xlu0 %2099
      %2101 = vrot.lane.b32.xlu0 %v2095, 46
      %v2102 = vpop.permute.xlu0 %2101
      %vm2103 = vcmask 375808
      %v2104 = vsel %vm2103, %v2098, %v2100
      %v2105 = vsel %vm2103, %v2100, %v2102
      %v2108 = vmul.f32 %v2078, %v2104
      %v2109 = vmul.f32 %v2078, %v2105
      %vm2110 = vcmp.ge.s32.totalorder %v419, 4294967294
      %vm2111 = vmand %vm1845, %vm2110
      %vm2112 = vcmp.lt.s32.totalorder %v419, 14
      %vm2113 = vmand %vm2111, %vm2112
      %v2114 = vsel %vm2113, 1, 0
      %v2115 = vlaneseq
      %v2116 = vshrl.u32 %v2115, 7
      %v2117 = vsub.s32 0, %v2116
      %v2118 = vrot.slane %v2114, %v2117
      %v2119 = vlaneseq
      %v2120 = vshrl.u32 %v2119, 7
      %v2121 = vsub.s32 1, %v2120
      %v2122 = vrot.slane %v2114, %v2121
      %vm2123 = vcmp.eq.s32.totalorder %v2118, 1
      %vm2124 = vcmp.eq.s32.totalorder %v2122, 1
      %v2125 = vsel %vm2123, %v2108, 0.0
      %v2126 = vsel %vm2124, %v2109, 0.0
      %v2127 = vadd.f32 %v2073, %v2125
      %v2128 = vadd.f32 %v2074, %v2126
      %v2129 = vld [vmem:[#allocation3] sm:$0x3f]
      %2130 = vset.pattern.permute.xlu0 6
      %2131 = vperm.xlu0 %2130, %v1806
      %v2132 = vpop.permute.xlu0 %2131
      %v2135 = vcombine.high %v2129, %v2129
      %v2137 = vunpack.c.l.s4 1983009808
      %v2138 = vunpack.c.0.s8 %v2137
      %v2139 = vlaneseq
      %v2140 = vshrl.u32 %v2139, 7
      %v2141 = vsub.s32 %v2138, %v2140
      %v2142 = vrot.slane %v2129, %v2141
      %v2144 = vunpack.c.l.s4 1983009808
      %v2145 = vunpack.c.0.s8 %v2144
      %v2146 = vlaneseq
      %v2147 = vshrl.u32 %v2146, 7
      %v2148 = vsub.s32 %v2145, %v2147
      %v2149 = vrot.slane %v2135, %v2148
      %v2150 = vcombine.high %v2142, %v2142
      %2151 = vrot.lane.b32.xlu0 %v2142, 45
      %v2152 = vpop.permute.xlu0 %2151
      %2153 = vrot.lane.b32.xlu0 %v2150, 45
      %v2154 = vpop.permute.xlu0 %2153
      %2155 = vrot.lane.b32.xlu0 %v2149, 45
      %v2156 = vpop.permute.xlu0 %2155
      %vm2157 = vcmask 367616
      %v2158 = vsel %vm2157, %v2152, %v2154
      %v2159 = vsel %vm2157, %v2154, %v2156
      %v2162 = vmul.f32 %v2132, %v2158
      %v2163 = vmul.f32 %v2132, %v2159
      %vm2164 = vcmp.ge.s32.totalorder %v419, 4294967293
      %vm2165 = vmand %vm1845, %vm2164
      %vm2166 = vcmp.lt.s32.totalorder %v419, 13
      %vm2167 = vmand %vm2165, %vm2166
      %v2168 = vsel %vm2167, 1, 0
      %v2169 = vlaneseq
      %v2170 = vshrl.u32 %v2169, 7
      %v2171 = vsub.s32 0, %v2170
      %v2172 = vrot.slane %v2168, %v2171
      %v2173 = vlaneseq
      %v2174 = vshrl.u32 %v2173, 7
      %v2175 = vsub.s32 1, %v2174
      %v2176 = vrot.slane %v2168, %v2175
      %vm2177 = vcmp.eq.s32.totalorder %v2172, 1
      %vm2178 = vcmp.eq.s32.totalorder %v2176, 1
      %v2179 = vsel %vm2177, %v2162, 0.0
      %v2180 = vsel %vm2178, %v2163, 0.0
      %v2181 = vadd.f32 %v2127, %v2179
      %v2182 = vadd.f32 %v2128, %v2180
      %v2183 = vld [vmem:[#allocation3] sm:$0x3f]
      %2184 = vset.pattern.permute.xlu0 7
      %2185 = vperm.xlu0 %2184, %v1806
      %v2186 = vpop.permute.xlu0 %2185
      %v2189 = vcombine.high %v2183, %v2183
      %v2191 = vunpack.c.l.s4 1983009808
      %v2192 = vunpack.c.0.s8 %v2191
      %v2193 = vlaneseq
      %v2194 = vshrl.u32 %v2193, 7
      %v2195 = vsub.s32 %v2192, %v2194
      %v2196 = vrot.slane %v2183, %v2195
      %v2198 = vunpack.c.l.s4 1983009808
      %v2199 = vunpack.c.0.s8 %v2198
      %v2200 = vlaneseq
      %v2201 = vshrl.u32 %v2200, 7
      %v2202 = vsub.s32 %v2199, %v2201
      %v2203 = vrot.slane %v2189, %v2202
      %v2204 = vcombine.high %v2196, %v2196
      %2205 = vrot.lane.b32.xlu0 %v2196, 35
      %v2206 = vpop.permute.xlu0 %2205
      %2207 = vrot.lane.b32.xlu0 %v2204, 35
      %v2208 = vpop.permute.xlu0 %2207
      %2209 = vrot.lane.b32.xlu0 %v2203, 35
      %v2210 = vpop.permute.xlu0 %2209
      %vm2211 = vcmask 285696
      %v2212 = vsel %vm2211, %v2206, %v2208
      %v2213 = vsel %vm2211, %v2208, %v2210
      %v2216 = vmul.f32 %v2186, %v2212
      %v2217 = vmul.f32 %v2186, %v2213
      %vm2218 = vcmp.ge.s32.totalorder %v418, 2
      %vm2219 = vcmp.lt.s32.totalorder %v418, 18
      %vm2220 = vmand %vm2218, %vm2219
      %vm2221 = vmand %vm2220, %vm1846
      %vm2222 = vmand %vm2221, %vm1848
      %v2223 = vsel %vm2222, 1, 0
      %v2224 = vlaneseq
      %v2225 = vshrl.u32 %v2224, 7
      %v2226 = vsub.s32 0, %v2225
      %v2227 = vrot.slane %v2223, %v2226
      %v2228 = vlaneseq
      %v2229 = vshrl.u32 %v2228, 7
      %v2230 = vsub.s32 1, %v2229
      %v2231 = vrot.slane %v2223, %v2230
      %vm2232 = vcmp.eq.s32.totalorder %v2227, 1
      %vm2233 = vcmp.eq.s32.totalorder %v2231, 1
      %v2234 = vsel %vm2232, %v2216, 0.0
      %v2235 = vsel %vm2233, %v2217, 0.0
      %v2236 = vadd.f32 %v2181, %v2234
      %v2237 = vadd.f32 %v2182, %v2235
      %v2238 = vld [vmem:[#allocation3] sm:$0x3f]
      %2239 = vset.pattern.permute.xlu0 8
      %2240 = vperm.xlu0 %2239, %v1806
      %v2241 = vpop.permute.xlu0 %2240
      %v2244 = vcombine.high %v2238, %v2238
      %v2246 = vunpack.c.l.s4 1983009808
      %v2247 = vunpack.c.0.s8 %v2246
      %v2248 = vlaneseq
      %v2249 = vshrl.u32 %v2248, 7
      %v2250 = vsub.s32 %v2247, %v2249
      %v2251 = vrot.slane %v2238, %v2250
      %v2253 = vunpack.c.l.s4 1983009808
      %v2254 = vunpack.c.0.s8 %v2253
      %v2255 = vlaneseq
      %v2256 = vshrl.u32 %v2255, 7
      %v2257 = vsub.s32 %v2254, %v2256
      %v2258 = vrot.slane %v2244, %v2257
      %v2259 = vcombine.high %v2251, %v2251
      %2260 = vrot.lane.b32.xlu0 %v2251, 34
      %v2261 = vpop.permute.xlu0 %2260
      %2262 = vrot.lane.b32.xlu0 %v2259, 34
      %v2263 = vpop.permute.xlu0 %2262
      %2264 = vrot.lane.b32.xlu0 %v2258, 34
      %v2265 = vpop.permute.xlu0 %2264
      %vm2266 = vcmask 277504
      %v2267 = vsel %vm2266, %v2261, %v2263
      %v2268 = vsel %vm2266, %v2263, %v2265
      %v2271 = vmul.f32 %v2241, %v2267
      %v2272 = vmul.f32 %v2241, %v2268
      %vm2273 = vmand %vm2220, %vm1900
      %vm2274 = vmand %vm2273, %vm1902
      %v2275 = vsel %vm2274, 1, 0
      %v2276 = vlaneseq
      %v2277 = vshrl.u32 %v2276, 7
      %v2278 = vsub.s32 0, %v2277
      %v2279 = vrot.slane %v2275, %v2278
      %v2280 = vlaneseq
      %v2281 = vshrl.u32 %v2280, 7
      %v2282 = vsub.s32 1, %v2281
      %v2283 = vrot.slane %v2275, %v2282
      %vm2284 = vcmp.eq.s32.totalorder %v2279, 1
      %vm2285 = vcmp.eq.s32.totalorder %v2283, 1
      %v2286 = vsel %vm2284, %v2271, 0.0
      %v2287 = vsel %vm2285, %v2272, 0.0
      %v2288 = vadd.f32 %v2236, %v2286
      %v2289 = vadd.f32 %v2237, %v2287
      %v2290 = vld [vmem:[#allocation3] sm:$0x3f]
      %2291 = vset.pattern.permute.xlu0 9
      %2292 = vperm.xlu0 %2291, %v1806
      %v2293 = vpop.permute.xlu0 %2292
      %v2296 = vcombine.high %v2290, %v2290
      %v2298 = vunpack.c.l.s4 1983009808
      %v2299 = vunpack.c.0.s8 %v2298
      %v2300 = vlaneseq
      %v2301 = vshrl.u32 %v2300, 7
      %v2302 = vsub.s32 %v2299, %v2301
      %v2303 = vrot.slane %v2290, %v2302
      %v2305 = vunpack.c.l.s4 1983009808
      %v2306 = vunpack.c.0.s8 %v2305
      %v2307 = vlaneseq
      %v2308 = vshrl.u32 %v2307, 7
      %v2309 = vsub.s32 %v2306, %v2308
      %v2310 = vrot.slane %v2296, %v2309
      %v2311 = vcombine.high %v2303, %v2303
      %2312 = vrot.lane.b32.xlu0 %v2303, 33
      %v2313 = vpop.permute.xlu0 %2312
      %2314 = vrot.lane.b32.xlu0 %v2311, 33
      %v2315 = vpop.permute.xlu0 %2314
      %2316 = vrot.lane.b32.xlu0 %v2310, 33
      %v2317 = vpop.permute.xlu0 %2316
      %vm2318 = vcmask 269312
      %v2319 = vsel %vm2318, %v2313, %v2315
      %v2320 = vsel %vm2318, %v2315, %v2317
      %v2323 = vmul.f32 %v2293, %v2319
      %v2324 = vmul.f32 %v2293, %v2320
      %vm2325 = vmand %vm2220, %vm514
      %vm2326 = vmand %vm2325, %vm516
      %v2327 = vsel %vm2326, 1, 0
      %v2328 = vlaneseq
      %v2329 = vshrl.u32 %v2328, 7
      %v2330 = vsub.s32 0, %v2329
      %v2331 = vrot.slane %v2327, %v2330
      %v2332 = vlaneseq
      %v2333 = vshrl.u32 %v2332, 7
      %v2334 = vsub.s32 1, %v2333
      %v2335 = vrot.slane %v2327, %v2334
      %vm2336 = vcmp.eq.s32.totalorder %v2331, 1
      %vm2337 = vcmp.eq.s32.totalorder %v2335, 1
      %v2338 = vsel %vm2336, %v2323, 0.0
      %v2339 = vsel %vm2337, %v2324, 0.0
      %v2340 = vadd.f32 %v2288, %v2338
      %v2341 = vadd.f32 %v2289, %v2339
      %v2342 = vld [vmem:[#allocation3] sm:$0x3f]
      %2343 = vset.pattern.permute.xlu0 10
      %2344 = vperm.xlu0 %2343, %v1806
      %v2345 = vpop.permute.xlu0 %2344
      %v2348 = vcombine.high %v2342, %v2342
      %v2350 = vunpack.c.l.s4 1983009808
      %v2351 = vunpack.c.0.s8 %v2350
      %v2352 = vlaneseq
      %v2353 = vshrl.u32 %v2352, 7
      %v2354 = vsub.s32 %v2351, %v2353
      %v2355 = vrot.slane %v2342, %v2354
      %v2357 = vunpack.c.l.s4 1983009808
      %v2358 = vunpack.c.0.s8 %v2357
      %v2359 = vlaneseq
      %v2360 = vshrl.u32 %v2359, 7
      %v2361 = vsub.s32 %v2358, %v2360
      %v2362 = vrot.slane %v2348, %v2361
      %v2363 = vcombine.high %v2355, %v2355
      %2364 = vrot.lane.b32.xlu0 %v2355, 32
      %v2365 = vpop.permute.xlu0 %2364
      %2366 = vrot.lane.b32.xlu0 %v2363, 32
      %v2367 = vpop.permute.xlu0 %2366
      %2368 = vrot.lane.b32.xlu0 %v2362, 32
      %v2369 = vpop.permute.xlu0 %2368
      %vm2370 = vcmask 261120
      %v2371 = vsel %vm2370, %v2365, %v2367
      %v2372 = vsel %vm2370, %v2367, %v2369
      %v2375 = vmul.f32 %v2345, %v2371
      %v2376 = vmul.f32 %v2345, %v2372
      %vm2377 = vmand %vm2220, %vm548
      %vm2378 = vmand %vm2377, %vm550
      %v2379 = vsel %vm2378, 1, 0
      %v2380 = vlaneseq
      %v2381 = vshrl.u32 %v2380, 7
      %v2382 = vsub.s32 0, %v2381
      %v2383 = vrot.slane %v2379, %v2382
      %v2384 = vlaneseq
      %v2385 = vshrl.u32 %v2384, 7
      %v2386 = vsub.s32 1, %v2385
      %v2387 = vrot.slane %v2379, %v2386
      %vm2388 = vcmp.eq.s32.totalorder %v2383, 1
      %vm2389 = vcmp.eq.s32.totalorder %v2387, 1
      %v2390 = vsel %vm2388, %v2375, 0.0
      %v2391 = vsel %vm2389, %v2376, 0.0
      %v2392 = vadd.f32 %v2340, %v2390
      %v2393 = vadd.f32 %v2341, %v2391
      %v2394 = vld [vmem:[#allocation3] sm:$0x3f]
      %2395 = vset.pattern.permute.xlu0 11
      %2396 = vperm.xlu0 %2395, %v1806
      %v2397 = vpop.permute.xlu0 %2396
      %v2400 = vcombine.high %v2394, %v2394
      %v2402 = vunpack.c.l.s4 1983009808
      %v2403 = vunpack.c.0.s8 %v2402
      %v2404 = vlaneseq
      %v2405 = vshrl.u32 %v2404, 7
      %v2406 = vsub.s32 %v2403, %v2405
      %v2407 = vrot.slane %v2394, %v2406
      %v2409 = vunpack.c.l.s4 1983009808
      %v2410 = vunpack.c.0.s8 %v2409
      %v2411 = vlaneseq
      %v2412 = vshrl.u32 %v2411, 7
      %v2413 = vsub.s32 %v2410, %v2412
      %v2414 = vrot.slane %v2400, %v2413
      %v2415 = vcombine.high %v2407, %v2407
      %2416 = vrot.lane.b32.xlu0 %v2407, 31
      %v2417 = vpop.permute.xlu0 %2416
      %2418 = vrot.lane.b32.xlu0 %v2415, 31
      %v2419 = vpop.permute.xlu0 %2418
      %2420 = vrot.lane.b32.xlu0 %v2414, 31
      %v2421 = vpop.permute.xlu0 %2420
      %vm2422 = vcmask 252928
      %v2423 = vsel %vm2422, %v2417, %v2419
      %v2424 = vsel %vm2422, %v2419, %v2421
      %v2427 = vmul.f32 %v2397, %v2423
      %v2428 = vmul.f32 %v2397, %v2424
      %vm2429 = vmand %vm2220, %vm739
      %vm2430 = vmand %vm2429, %vm741
      %v2431 = vsel %vm2430, 1, 0
      %v2432 = vlaneseq
      %v2433 = vshrl.u32 %v2432, 7
      %v2434 = vsub.s32 0, %v2433
      %v2435 = vrot.slane %v2431, %v2434
      %v2436 = vlaneseq
      %v2437 = vshrl.u32 %v2436, 7
      %v2438 = vsub.s32 1, %v2437
      %v2439 = vrot.slane %v2431, %v2438
      %vm2440 = vcmp.eq.s32.totalorder %v2435, 1
      %vm2441 = vcmp.eq.s32.totalorder %v2439, 1
      %v2442 = vsel %vm2440, %v2427, 0.0
      %v2443 = vsel %vm2441, %v2428, 0.0
      %v2444 = vadd.f32 %v2392, %v2442
      %v2445 = vadd.f32 %v2393, %v2443
      %v2446 = vld [vmem:[#allocation3] sm:$0x3f]
      %2447 = vset.pattern.permute.xlu0 12
      %2448 = vperm.xlu0 %2447, %v1806
      %v2449 = vpop.permute.xlu0 %2448
      %v2452 = vcombine.high %v2446, %v2446
      %v2454 = vunpack.c.l.s4 1983009808
      %v2455 = vunpack.c.0.s8 %v2454
      %v2456 = vlaneseq
      %v2457 = vshrl.u32 %v2456, 7
      %v2458 = vsub.s32 %v2455, %v2457
      %v2459 = vrot.slane %v2446, %v2458
      %v2461 = vunpack.c.l.s4 1983009808
      %v2462 = vunpack.c.0.s8 %v2461
      %v2463 = vlaneseq
      %v2464 = vshrl.u32 %v2463, 7
      %v2465 = vsub.s32 %v2462, %v2464
      %v2466 = vrot.slane %v2452, %v2465
      %v2467 = vcombine.high %v2459, %v2459
      %2468 = vrot.lane.b32.xlu0 %v2459, 30
      %v2469 = vpop.permute.xlu0 %2468
      %2470 = vrot.lane.b32.xlu0 %v2467, 30
      %v2471 = vpop.permute.xlu0 %2470
      %2472 = vrot.lane.b32.xlu0 %v2466, 30
      %v2473 = vpop.permute.xlu0 %2472
      %vm2474 = vcmask 244736
      %v2475 = vsel %vm2474, %v2469, %v2471
      %v2476 = vsel %vm2474, %v2471, %v2473
      %v2479 = vmul.f32 %v2449, %v2475
      %v2480 = vmul.f32 %v2449, %v2476
      %vm2481 = vmand %vm2220, %vm2110
      %vm2482 = vmand %vm2481, %vm2112
      %v2483 = vsel %vm2482, 1, 0
      %v2484 = vlaneseq
      %v2485 = vshrl.u32 %v2484, 7
      %v2486 = vsub.s32 0, %v2485
      %v2487 = vrot.slane %v2483, %v2486
      %v2488 = vlaneseq
      %v2489 = vshrl.u32 %v2488, 7
      %v2490 = vsub.s32 1, %v2489
      %v2491 = vrot.slane %v2483, %v2490
      %vm2492 = vcmp.eq.s32.totalorder %v2487, 1
      %vm2493 = vcmp.eq.s32.totalorder %v2491, 1
      %v2494 = vsel %vm2492, %v2479, 0.0
      %v2495 = vsel %vm2493, %v2480, 0.0
      %v2496 = vadd.f32 %v2444, %v2494
      %v2497 = vadd.f32 %v2445, %v2495
      %v2498 = vld [vmem:[#allocation3] sm:$0x3f]
      %2499 = vset.pattern.permute.xlu0 13
      %2500 = vperm.xlu0 %2499, %v1806
      %v2501 = vpop.permute.xlu0 %2500
      %v2504 = vcombine.high %v2498, %v2498
      %v2506 = vunpack.c.l.s4 1983009808
      %v2507 = vunpack.c.0.s8 %v2506
      %v2508 = vlaneseq
      %v2509 = vshrl.u32 %v2508, 7
      %v2510 = vsub.s32 %v2507, %v2509
      %v2511 = vrot.slane %v2498, %v2510
      %v2513 = vunpack.c.l.s4 1983009808
      %v2514 = vunpack.c.0.s8 %v2513
      %v2515 = vlaneseq
      %v2516 = vshrl.u32 %v2515, 7
      %v2517 = vsub.s32 %v2514, %v2516
      %v2518 = vrot.slane %v2504, %v2517
      %v2519 = vcombine.high %v2511, %v2511
      %2520 = vrot.lane.b32.xlu0 %v2511, 29
      %v2521 = vpop.permute.xlu0 %2520
      %2522 = vrot.lane.b32.xlu0 %v2519, 29
      %v2523 = vpop.permute.xlu0 %2522
      %2524 = vrot.lane.b32.xlu0 %v2518, 29
      %v2525 = vpop.permute.xlu0 %2524
      %vm2526 = vcmask 236544
      %v2527 = vsel %vm2526, %v2521, %v2523
      %v2528 = vsel %vm2526, %v2523, %v2525
      %v2531 = vmul.f32 %v2501, %v2527
      %v2532 = vmul.f32 %v2501, %v2528
      %vm2533 = vmand %vm2220, %vm2164
      %vm2534 = vmand %vm2533, %vm2166
      %v2535 = vsel %vm2534, 1, 0
      %v2536 = vlaneseq
      %v2537 = vshrl.u32 %v2536, 7
      %v2538 = vsub.s32 0, %v2537
      %v2539 = vrot.slane %v2535, %v2538
      %v2540 = vlaneseq
      %v2541 = vshrl.u32 %v2540, 7
      %v2542 = vsub.s32 1, %v2541
      %v2543 = vrot.slane %v2535, %v2542
      %vm2544 = vcmp.eq.s32.totalorder %v2539, 1
      %vm2545 = vcmp.eq.s32.totalorder %v2543, 1
      %v2546 = vsel %vm2544, %v2531, 0.0
      %v2547 = vsel %vm2545, %v2532, 0.0
      %v2548 = vadd.f32 %v2496, %v2546
      %v2549 = vadd.f32 %v2497, %v2547
      %v2550 = vld [vmem:[#allocation3] sm:$0x3f]
      %2551 = vset.pattern.permute.xlu0 14
      %2552 = vperm.xlu0 %2551, %v1806
      %v2553 = vpop.permute.xlu0 %2552
      %v2556 = vcombine.high %v2550, %v2550
      %v2558 = vunpack.c.l.s4 1983009808
      %v2559 = vunpack.c.0.s8 %v2558
      %v2560 = vlaneseq
      %v2561 = vshrl.u32 %v2560, 7
      %v2562 = vsub.s32 %v2559, %v2561
      %v2563 = vrot.slane %v2550, %v2562
      %v2565 = vunpack.c.l.s4 1983009808
      %v2566 = vunpack.c.0.s8 %v2565
      %v2567 = vlaneseq
      %v2568 = vshrl.u32 %v2567, 7
      %v2569 = vsub.s32 %v2566, %v2568
      %v2570 = vrot.slane %v2556, %v2569
      %v2571 = vcombine.high %v2563, %v2563
      %2572 = vrot.lane.b32.xlu0 %v2563, 19
      %v2573 = vpop.permute.xlu0 %2572
      %2574 = vrot.lane.b32.xlu0 %v2571, 19
      %v2575 = vpop.permute.xlu0 %2574
      %2576 = vrot.lane.b32.xlu0 %v2570, 19
      %v2577 = vpop.permute.xlu0 %2576
      %vm2578 = vcmask 154624
      %v2579 = vsel %vm2578, %v2573, %v2575
      %v2580 = vsel %vm2578, %v2575, %v2577
      %v2583 = vmul.f32 %v2553, %v2579
      %v2584 = vmul.f32 %v2553, %v2580
      %vm2585 = vmand %vm513, %vm1846
      %vm2586 = vmand %vm2585, %vm1848
      %v2587 = vsel %vm2586, 1, 0
      %v2588 = vlaneseq
      %v2589 = vshrl.u32 %v2588, 7
      %v2590 = vsub.s32 0, %v2589
      %v2591 = vrot.slane %v2587, %v2590
      %v2592 = vlaneseq
      %v2593 = vshrl.u32 %v2592, 7
      %v2594 = vsub.s32 1, %v2593
      %v2595 = vrot.slane %v2587, %v2594
      %vm2596 = vcmp.eq.s32.totalorder %v2591, 1
      %vm2597 = vcmp.eq.s32.totalorder %v2595, 1
      %v2598 = vsel %vm2596, %v2583, 0.0
      %v2599 = vsel %vm2597, %v2584, 0.0
      %v2600 = vadd.f32 %v2548, %v2598
      %v2601 = vadd.f32 %v2549, %v2599
      %v2602 = vld [vmem:[#allocation3] sm:$0x3f]
      %2603 = vset.pattern.permute.xlu0 15
      %2604 = vperm.xlu0 %2603, %v1806
      %v2605 = vpop.permute.xlu0 %2604
      %v2608 = vcombine.high %v2602, %v2602
      %v2610 = vunpack.c.l.s4 1983009808
      %v2611 = vunpack.c.0.s8 %v2610
      %v2612 = vlaneseq
      %v2613 = vshrl.u32 %v2612, 7
      %v2614 = vsub.s32 %v2611, %v2613
      %v2615 = vrot.slane %v2602, %v2614
      %v2617 = vunpack.c.l.s4 1983009808
      %v2618 = vunpack.c.0.s8 %v2617
      %v2619 = vlaneseq
      %v2620 = vshrl.u32 %v2619, 7
      %v2621 = vsub.s32 %v2618, %v2620
      %v2622 = vrot.slane %v2608, %v2621
      %v2623 = vcombine.high %v2615, %v2615
      %2624 = vrot.lane.b32.xlu0 %v2615, 18
      %v2625 = vpop.permute.xlu0 %2624
      %2626 = vrot.lane.b32.xlu0 %v2623, 18
      %v2627 = vpop.permute.xlu0 %2626
      %2628 = vrot.lane.b32.xlu0 %v2622, 18
      %v2629 = vpop.permute.xlu0 %2628
      %vm2630 = vcmask 146432
      %v2631 = vsel %vm2630, %v2625, %v2627
      %v2632 = vsel %vm2630, %v2627, %v2629
      %v2635 = vmul.f32 %v2605, %v2631
      %v2636 = vmul.f32 %v2605, %v2632
      %vm2637 = vmand %vm513, %vm1900
      %vm2638 = vmand %vm2637, %vm1902
      %v2639 = vsel %vm2638, 1, 0
      %v2640 = vlaneseq
      %v2641 = vshrl.u32 %v2640, 7
      %v2642 = vsub.s32 0, %v2641
      %v2643 = vrot.slane %v2639, %v2642
      %v2644 = vlaneseq
      %v2645 = vshrl.u32 %v2644, 7
      %v2646 = vsub.s32 1, %v2645
      %v2647 = vrot.slane %v2639, %v2646
      %vm2648 = vcmp.eq.s32.totalorder %v2643, 1
      %vm2649 = vcmp.eq.s32.totalorder %v2647, 1
      %v2650 = vsel %vm2648, %v2635, 0.0
      %v2651 = vsel %vm2649, %v2636, 0.0
      %v2652 = vadd.f32 %v2600, %v2650
      %v2653 = vadd.f32 %v2601, %v2651
      %v2654 = vld [vmem:[#allocation3] sm:$0x3f]
      %2655 = vset.pattern.permute.xlu0 16
      %2656 = vperm.xlu0 %2655, %v1806
      %v2657 = vpop.permute.xlu0 %2656
      %v2660 = vcombine.high %v2654, %v2654
      %v2662 = vunpack.c.l.s4 1983009808
      %v2663 = vunpack.c.0.s8 %v2662
      %v2664 = vlaneseq
      %v2665 = vshrl.u32 %v2664, 7
      %v2666 = vsub.s32 %v2663, %v2665
      %v2667 = vrot.slane %v2654, %v2666
      %v2669 = vunpack.c.l.s4 1983009808
      %v2670 = vunpack.c.0.s8 %v2669
      %v2671 = vlaneseq
      %v2672 = vshrl.u32 %v2671, 7
      %v2673 = vsub.s32 %v2670, %v2672
      %v2674 = vrot.slane %v2660, %v2673
      %v2675 = vcombine.high %v2667, %v2667
      %2676 = vrot.lane.b32.xlu0 %v2667, 17
      %v2677 = vpop.permute.xlu0 %2676
      %2678 = vrot.lane.b32.xlu0 %v2675, 17
      %v2679 = vpop.permute.xlu0 %2678
      %2680 = vrot.lane.b32.xlu0 %v2674, 17
      %v2681 = vpop.permute.xlu0 %2680
      %v2682 = vsel %vm540, %v2677, %v2679
      %v2683 = vsel %vm540, %v2679, %v2681
      %v2686 = vmul.f32 %v2657, %v2682
      %v2687 = vmul.f32 %v2657, %v2683
      %v2688 = vsel %vm529, %v2686, 0.0
      %v2689 = vsel %vm530, %v2687, 0.0
      %v2690 = vadd.f32 %v2652, %v2688
      %v2691 = vadd.f32 %v2653, %v2689
      %v2692 = vld [vmem:[#allocation3] sm:$0x3f]
      %2693 = vset.pattern.permute.xlu0 17
      %2694 = vperm.xlu0 %2693, %v1806
      %v2695 = vpop.permute.xlu0 %2694
      %v2698 = vcombine.high %v2692, %v2692
      %v2700 = vunpack.c.l.s4 1983009808
      %v2701 = vunpack.c.0.s8 %v2700
      %v2702 = vlaneseq
      %v2703 = vshrl.u32 %v2702, 7
      %v2704 = vsub.s32 %v2701, %v2703
      %v2705 = vrot.slane %v2692, %v2704
      %v2707 = vunpack.c.l.s4 1983009808
      %v2708 = vunpack.c.0.s8 %v2707
      %v2709 = vlaneseq
      %v2710 = vshrl.u32 %v2709, 7
      %v2711 = vsub.s32 %v2708, %v2710
      %v2712 = vrot.slane %v2698, %v2711
      %v2713 = vcombine.high %v2705, %v2705
      %2714 = vrot.lane.b32.xlu0 %v2705, 16
      %v2715 = vpop.permute.xlu0 %2714
      %2716 = vrot.lane.b32.xlu0 %v2713, 16
      %v2717 = vpop.permute.xlu0 %2716
      %2718 = vrot.lane.b32.xlu0 %v2712, 16
      %v2719 = vpop.permute.xlu0 %2718
      %v2720 = vsel %vm427, %v2715, %v2717
      %v2721 = vsel %vm427, %v2717, %v2719
      %v2724 = vmul.f32 %v2695, %v2720
      %v2725 = vmul.f32 %v2695, %v2721
      %v2726 = vsel %vm561, %v2724, 0.0
      %v2727 = vsel %vm562, %v2725, 0.0
      %v2728 = vadd.f32 %v2690, %v2726
      %v2729 = vadd.f32 %v2691, %v2727
      %v2730 = vld [vmem:[#allocation3] sm:$0x3f]
      %2731 = vset.pattern.permute.xlu0 18
      %2732 = vperm.xlu0 %2731, %v1806
      %v2733 = vpop.permute.xlu0 %2732
      %v2736 = vcombine.high %v2730, %v2730
      %v2738 = vunpack.c.l.s4 1983009808
      %v2739 = vunpack.c.0.s8 %v2738
      %v2740 = vlaneseq
      %v2741 = vshrl.u32 %v2740, 7
      %v2742 = vsub.s32 %v2739, %v2741
      %v2743 = vrot.slane %v2730, %v2742
      %v2745 = vunpack.c.l.s4 1983009808
      %v2746 = vunpack.c.0.s8 %v2745
      %v2747 = vlaneseq
      %v2748 = vshrl.u32 %v2747, 7
      %v2749 = vsub.s32 %v2746, %v2748
      %v2750 = vrot.slane %v2736, %v2749
      %v2751 = vcombine.high %v2743, %v2743
      %2752 = vrot.lane.b32.xlu0 %v2743, 15
      %v2753 = vpop.permute.xlu0 %2752
      %2754 = vrot.lane.b32.xlu0 %v2751, 15
      %v2755 = vpop.permute.xlu0 %2754
      %2756 = vrot.lane.b32.xlu0 %v2750, 15
      %v2757 = vpop.permute.xlu0 %2756
      %v2758 = vsel %vm765, %v2753, %v2755
      %v2759 = vsel %vm765, %v2755, %v2757
      %v2762 = vmul.f32 %v2733, %v2758
      %v2763 = vmul.f32 %v2733, %v2759
      %v2764 = vsel %vm754, %v2762, 0.0
      %v2765 = vsel %vm755, %v2763, 0.0
      %v2766 = vadd.f32 %v2728, %v2764
      %v2767 = vadd.f32 %v2729, %v2765
      %v2768 = vld [vmem:[#allocation3] sm:$0x3f]
      %2769 = vset.pattern.permute.xlu0 19
      %2770 = vperm.xlu0 %2769, %v1806
      %v2771 = vpop.permute.xlu0 %2770
      %v2774 = vcombine.high %v2768, %v2768
      %v2776 = vunpack.c.l.s4 1983009808
      %v2777 = vunpack.c.0.s8 %v2776
      %v2778 = vlaneseq
      %v2779 = vshrl.u32 %v2778, 7
      %v2780 = vsub.s32 %v2777, %v2779
      %v2781 = vrot.slane %v2768, %v2780
      %v2783 = vunpack.c.l.s4 1983009808
      %v2784 = vunpack.c.0.s8 %v2783
      %v2785 = vlaneseq
      %v2786 = vshrl.u32 %v2785, 7
      %v2787 = vsub.s32 %v2784, %v2786
      %v2788 = vrot.slane %v2774, %v2787
      %v2789 = vcombine.high %v2781, %v2781
      %2790 = vrot.lane.b32.xlu0 %v2781, 14
      %v2791 = vpop.permute.xlu0 %2790
      %2792 = vrot.lane.b32.xlu0 %v2789, 14
      %v2793 = vpop.permute.xlu0 %2792
      %2794 = vrot.lane.b32.xlu0 %v2788, 14
      %v2795 = vpop.permute.xlu0 %2794
      %vm2796 = vcmask 113664
      %v2797 = vsel %vm2796, %v2791, %v2793
      %v2798 = vsel %vm2796, %v2793, %v2795
      %v2801 = vmul.f32 %v2771, %v2797
      %v2802 = vmul.f32 %v2771, %v2798
      %vm2803 = vmand %vm513, %vm2110
      %vm2804 = vmand %vm2803, %vm2112
      %v2805 = vsel %vm2804, 1, 0
      %v2806 = vlaneseq
      %v2807 = vshrl.u32 %v2806, 7
      %v2808 = vsub.s32 0, %v2807
      %v2809 = vrot.slane %v2805, %v2808
      %v2810 = vlaneseq
      %v2811 = vshrl.u32 %v2810, 7
      %v2812 = vsub.s32 1, %v2811
      %v2813 = vrot.slane %v2805, %v2812
      %vm2814 = vcmp.eq.s32.totalorder %v2809, 1
      %vm2815 = vcmp.eq.s32.totalorder %v2813, 1
      %v2816 = vsel %vm2814, %v2801, 0.0
      %v2817 = vsel %vm2815, %v2802, 0.0
      %v2818 = vadd.f32 %v2766, %v2816
      %v2819 = vadd.f32 %v2767, %v2817
      %v2820 = vld [vmem:[#allocation3] sm:$0x3f]
      %2821 = vset.pattern.permute.xlu0 20
      %2822 = vperm.xlu0 %2821, %v1806
      %v2823 = vpop.permute.xlu0 %2822
      %v2826 = vcombine.high %v2820, %v2820
      %v2828 = vunpack.c.l.s4 1983009808
      %v2829 = vunpack.c.0.s8 %v2828
      %v2830 = vlaneseq
      %v2831 = vshrl.u32 %v2830, 7
      %v2832 = vsub.s32 %v2829, %v2831
      %v2833 = vrot.slane %v2820, %v2832
      %v2835 = vunpack.c.l.s4 1983009808
      %v2836 = vunpack.c.0.s8 %v2835
      %v2837 = vlaneseq
      %v2838 = vshrl.u32 %v2837, 7
      %v2839 = vsub.s32 %v2836, %v2838
      %v2840 = vrot.slane %v2826, %v2839
      %v2841 = vcombine.high %v2833, %v2833
      %2842 = vrot.lane.b32.xlu0 %v2833, 13
      %v2843 = vpop.permute.xlu0 %2842
      %2844 = vrot.lane.b32.xlu0 %v2841, 13
      %v2845 = vpop.permute.xlu0 %2844
      %2846 = vrot.lane.b32.xlu0 %v2840, 13
      %v2847 = vpop.permute.xlu0 %2846
      %vm2848 = vcmask 105472
      %v2849 = vsel %vm2848, %v2843, %v2845
      %v2850 = vsel %vm2848, %v2845, %v2847
      %v2853 = vmul.f32 %v2823, %v2849
      %v2854 = vmul.f32 %v2823, %v2850
      %vm2855 = vmand %vm513, %vm2164
      %vm2856 = vmand %vm2855, %vm2166
      %v2857 = vsel %vm2856, 1, 0
      %v2858 = vlaneseq
      %v2859 = vshrl.u32 %v2858, 7
      %v2860 = vsub.s32 0, %v2859
      %v2861 = vrot.slane %v2857, %v2860
      %v2862 = vlaneseq
      %v2863 = vshrl.u32 %v2862, 7
      %v2864 = vsub.s32 1, %v2863
      %v2865 = vrot.slane %v2857, %v2864
      %vm2866 = vcmp.eq.s32.totalorder %v2861, 1
      %vm2867 = vcmp.eq.s32.totalorder %v2865, 1
      %v2868 = vsel %vm2866, %v2853, 0.0
      %v2869 = vsel %vm2867, %v2854, 0.0
      %v2870 = vadd.f32 %v2818, %v2868
      %v2871 = vadd.f32 %v2819, %v2869
      %v2872 = vld [vmem:[#allocation3] sm:$0x3f]
      %2873 = vset.pattern.permute.xlu0 21
      %2874 = vperm.xlu0 %2873, %v1806
      %v2875 = vpop.permute.xlu0 %2874
      %v2878 = vcombine.high %v2872, %v2872
      %v2880 = vunpack.c.l.s4 1983009808
      %v2881 = vunpack.c.0.s8 %v2880
      %v2882 = vlaneseq
      %v2883 = vshrl.u32 %v2882, 7
      %v2884 = vsub.s32 %v2881, %v2883
      %v2885 = vrot.slane %v2872, %v2884
      %v2887 = vunpack.c.l.s4 1983009808
      %v2888 = vunpack.c.0.s8 %v2887
      %v2889 = vlaneseq
      %v2890 = vshrl.u32 %v2889, 7
      %v2891 = vsub.s32 %v2888, %v2890
      %v2892 = vrot.slane %v2878, %v2891
      %v2893 = vcombine.high %v2885, %v2885
      %2894 = vrot.lane.b32.xlu0 %v2885, 3
      %v2895 = vpop.permute.xlu0 %2894
      %2896 = vrot.lane.b32.xlu0 %v2893, 3
      %v2897 = vpop.permute.xlu0 %2896
      %2898 = vrot.lane.b32.xlu0 %v2892, 3
      %v2899 = vpop.permute.xlu0 %2898
      %vm2900 = vcmask 23552
      %v2901 = vsel %vm2900, %v2895, %v2897
      %v2902 = vsel %vm2900, %v2897, %v2899
      %v2905 = vmul.f32 %v2875, %v2901
      %v2906 = vmul.f32 %v2875, %v2902
      %vm2907 = vmand %vm858, %vm1846
      %vm2908 = vmand %vm2907, %vm1848
      %v2909 = vsel %vm2908, 1, 0
      %v2910 = vlaneseq
      %v2911 = vshrl.u32 %v2910, 7
      %v2912 = vsub.s32 0, %v2911
      %v2913 = vrot.slane %v2909, %v2912
      %v2914 = vlaneseq
      %v2915 = vshrl.u32 %v2914, 7
      %v2916 = vsub.s32 1, %v2915
      %v2917 = vrot.slane %v2909, %v2916
      %vm2918 = vcmp.eq.s32.totalorder %v2913, 1
      %vm2919 = vcmp.eq.s32.totalorder %v2917, 1
      %v2920 = vsel %vm2918, %v2905, 0.0
      %v2921 = vsel %vm2919, %v2906, 0.0
      %v2922 = vadd.f32 %v2870, %v2920
      %v2923 = vadd.f32 %v2871, %v2921
      %v2924 = vld [vmem:[#allocation3] sm:$0x3f]
      %2925 = vset.pattern.permute.xlu0 22
      %2926 = vperm.xlu0 %2925, %v1806
      %v2927 = vpop.permute.xlu0 %2926
      %v2930 = vcombine.high %v2924, %v2924
      %v2932 = vunpack.c.l.s4 1983009808
      %v2933 = vunpack.c.0.s8 %v2932
      %v2934 = vlaneseq
      %v2935 = vshrl.u32 %v2934, 7
      %v2936 = vsub.s32 %v2933, %v2935
      %v2937 = vrot.slane %v2924, %v2936
      %v2939 = vunpack.c.l.s4 1983009808
      %v2940 = vunpack.c.0.s8 %v2939
      %v2941 = vlaneseq
      %v2942 = vshrl.u32 %v2941, 7
      %v2943 = vsub.s32 %v2940, %v2942
      %v2944 = vrot.slane %v2930, %v2943
      %v2945 = vcombine.high %v2937, %v2937
      %2946 = vrot.lane.b32.xlu0 %v2937, 2
      %v2947 = vpop.permute.xlu0 %2946
      %2948 = vrot.lane.b32.xlu0 %v2945, 2
      %v2949 = vpop.permute.xlu0 %2948
      %2950 = vrot.lane.b32.xlu0 %v2944, 2
      %v2951 = vpop.permute.xlu0 %2950
      %vm2952 = vcmask 15360
      %v2953 = vsel %vm2952, %v2947, %v2949
      %v2954 = vsel %vm2952, %v2949, %v2951
      %v2957 = vmul.f32 %v2927, %v2953
      %v2958 = vmul.f32 %v2927, %v2954
      %vm2959 = vmand %vm858, %vm1900
      %vm2960 = vmand %vm2959, %vm1902
      %v2961 = vsel %vm2960, 1, 0
      %v2962 = vlaneseq
      %v2963 = vshrl.u32 %v2962, 7
      %v2964 = vsub.s32 0, %v2963
      %v2965 = vrot.slane %v2961, %v2964
      %v2966 = vlaneseq
      %v2967 = vshrl.u32 %v2966, 7
      %v2968 = vsub.s32 1, %v2967
      %v2969 = vrot.slane %v2961, %v2968
      %vm2970 = vcmp.eq.s32.totalorder %v2965, 1
      %vm2971 = vcmp.eq.s32.totalorder %v2969, 1
      %v2972 = vsel %vm2970, %v2957, 0.0
      %v2973 = vsel %vm2971, %v2958, 0.0
      %v2974 = vadd.f32 %v2922, %v2972
      %v2975 = vadd.f32 %v2923, %v2973
      %v2976 = vld [vmem:[#allocation3] sm:$0x3f]
      %2977 = vset.pattern.permute.xlu0 23
      %2978 = vperm.xlu0 %2977, %v1806
      %v2979 = vpop.permute.xlu0 %2978
      %v2982 = vcombine.high %v2976, %v2976
      %v2984 = vunpack.c.l.s4 1983009808
      %v2985 = vunpack.c.0.s8 %v2984
      %v2986 = vlaneseq
      %v2987 = vshrl.u32 %v2986, 7
      %v2988 = vsub.s32 %v2985, %v2987
      %v2989 = vrot.slane %v2976, %v2988
      %v2991 = vunpack.c.l.s4 1983009808
      %v2992 = vunpack.c.0.s8 %v2991
      %v2993 = vlaneseq
      %v2994 = vshrl.u32 %v2993, 7
      %v2995 = vsub.s32 %v2992, %v2994
      %v2996 = vrot.slane %v2982, %v2995
      %v2997 = vcombine.high %v2989, %v2989
      %2998 = vrot.lane.b32.xlu0 %v2989, 1
      %v2999 = vpop.permute.xlu0 %2998
      %3000 = vrot.lane.b32.xlu0 %v2997, 1
      %v3001 = vpop.permute.xlu0 %3000
      %3002 = vrot.lane.b32.xlu0 %v2996, 1
      %v3003 = vpop.permute.xlu0 %3002
      %v3004 = vsel %vm883, %v2999, %v3001
      %v3005 = vsel %vm883, %v3001, %v3003
      %v3008 = vmul.f32 %v2979, %v3004
      %v3009 = vmul.f32 %v2979, %v3005
      %v3010 = vsel %vm872, %v3008, 0.0
      %v3011 = vsel %vm873, %v3009, 0.0
      %v3012 = vadd.f32 %v2974, %v3010
      %v3013 = vadd.f32 %v2975, %v3011
      %v3014 = vld [vmem:[#allocation3 + $0x2] sm:$0xf]
      %3015 = vset.pattern.permute.xlu0 24
      %3016 = vperm.xlu0 %3015, %v1806
      %v3017 = vpop.permute.xlu0 %3016
      %v3021 = vunpack.c.l.s4 1983009808
      %v3022 = vunpack.c.0.s8 %v3021
      %v3023 = vlaneseq
      %v3024 = vshrl.u32 %v3023, 7
      %v3025 = vsub.s32 %v3022, %v3024
      %v3026 = vrot.slane %v3014, %v3025
      %v3027 = vcombine.high %v3026, %v3026
      %v3030 = vmul.f32 %v3017, %v3026
      %v3031 = vmul.f32 %v3017, %v3027
      %v3032 = vsel %vm986, %v3030, 0.0
      %v3033 = vsel %vm987, %v3031, 0.0
      %v3034 = vadd.f32 %v3012, %v3032
      %v3035 = vadd.f32 %v3013, %v3033
      %v3036 = vld [vmem:[#allocation3 + $0x2] sm:$0x3f]
      %3037 = vset.pattern.permute.xlu0 25
      %3038 = vperm.xlu0 %3037, %v1806
      %v3039 = vpop.permute.xlu0 %3038
      %v3042 = vcombine.high %v3036, %v3036
      %v3044 = vunpack.c.l.s4 1983009808
      %v3045 = vunpack.c.0.s8 %v3044
      %v3046 = vlaneseq
      %v3047 = vshrl.u32 %v3046, 7
      %v3048 = vsub.s32 %v3045, %v3047
      %v3049 = vrot.slane %v3036, %v3048
      %v3051 = vunpack.c.l.s4 1983009808
      %v3052 = vunpack.c.0.s8 %v3051
      %v3053 = vlaneseq
      %v3054 = vshrl.u32 %v3053, 7
      %v3055 = vsub.s32 %v3052, %v3054
      %v3056 = vrot.slane %v3042, %v3055
      %v3057 = vcombine.high %v3049, %v3049
      %3058 = vrot.lane.b32.xlu0 %v3049, 127
      %v3059 = vpop.permute.xlu0 %3058
      %3060 = vrot.lane.b32.xlu0 %v3057, 127
      %v3061 = vpop.permute.xlu0 %3060
      %3062 = vrot.lane.b32.xlu0 %v3056, 127
      %v3063 = vpop.permute.xlu0 %3062
      %v3064 = vsel %vm1101, %v3059, %v3061
      %v3065 = vsel %vm1101, %v3061, %v3063
      %v3068 = vmul.f32 %v3039, %v3064
      %v3069 = vmul.f32 %v3039, %v3065
      %v3070 = vsel %vm1090, %v3068, 0.0
      %v3071 = vsel %vm1091, %v3069, 0.0
      %v3072 = vadd.f32 %v3034, %v3070
      %v3073 = vadd.f32 %v3035, %v3071
      %v3074 = vld [vmem:[#allocation3 + $0x2] sm:$0x3f]
      %3075 = vset.pattern.permute.xlu0 26
      %3076 = vperm.xlu0 %3075, %v1806
      %v3077 = vpop.permute.xlu0 %3076
      %v3080 = vcombine.high %v3074, %v3074
      %v3082 = vunpack.c.l.s4 1983009808
      %v3083 = vunpack.c.0.s8 %v3082
      %v3084 = vlaneseq
      %v3085 = vshrl.u32 %v3084, 7
      %v3086 = vsub.s32 %v3083, %v3085
      %v3087 = vrot.slane %v3074, %v3086
      %v3089 = vunpack.c.l.s4 1983009808
      %v3090 = vunpack.c.0.s8 %v3089
      %v3091 = vlaneseq
      %v3092 = vshrl.u32 %v3091, 7
      %v3093 = vsub.s32 %v3090, %v3092
      %v3094 = vrot.slane %v3080, %v3093
      %v3095 = vcombine.high %v3087, %v3087
      %3096 = vrot.lane.b32.xlu0 %v3087, 126
      %v3097 = vpop.permute.xlu0 %3096
      %3098 = vrot.lane.b32.xlu0 %v3095, 126
      %v3099 = vpop.permute.xlu0 %3098
      %3100 = vrot.lane.b32.xlu0 %v3094, 126
      %v3101 = vpop.permute.xlu0 %3100
      %vm3102 = vcmask 1031168
      %v3103 = vsel %vm3102, %v3097, %v3099
      %v3104 = vsel %vm3102, %v3099, %v3101
      %v3107 = vmul.f32 %v3077, %v3103
      %v3108 = vmul.f32 %v3077, %v3104
      %vm3109 = vmand %vm858, %vm2110
      %vm3110 = vmand %vm3109, %vm2112
      %v3111 = vsel %vm3110, 1, 0
      %v3112 = vlaneseq
      %v3113 = vshrl.u32 %v3112, 7
      %v3114 = vsub.s32 0, %v3113
      %v3115 = vrot.slane %v3111, %v3114
      %v3116 = vlaneseq
      %v3117 = vshrl.u32 %v3116, 7
      %v3118 = vsub.s32 1, %v3117
      %v3119 = vrot.slane %v3111, %v3118
      %vm3120 = vcmp.eq.s32.totalorder %v3115, 1
      %vm3121 = vcmp.eq.s32.totalorder %v3119, 1
      %v3122 = vsel %vm3120, %v3107, 0.0
      %v3123 = vsel %vm3121, %v3108, 0.0
      %v3124 = vadd.f32 %v3072, %v3122
      %v3125 = vadd.f32 %v3073, %v3123
      %v3126 = vld [vmem:[#allocation3 + $0x2] sm:$0x3f]
      %3127 = vset.pattern.permute.xlu0 27
      %3128 = vperm.xlu0 %3127, %v1806
      %v3129 = vpop.permute.xlu0 %3128
      %v3132 = vcombine.high %v3126, %v3126
      %v3134 = vunpack.c.l.s4 1983009808
      %v3135 = vunpack.c.0.s8 %v3134
      %v3136 = vlaneseq
      %v3137 = vshrl.u32 %v3136, 7
      %v3138 = vsub.s32 %v3135, %v3137
      %v3139 = vrot.slane %v3126, %v3138
      %v3141 = vunpack.c.l.s4 1983009808
      %v3142 = vunpack.c.0.s8 %v3141
      %v3143 = vlaneseq
      %v3144 = vshrl.u32 %v3143, 7
      %v3145 = vsub.s32 %v3142, %v3144
      %v3146 = vrot.slane %v3132, %v3145
      %v3147 = vcombine.high %v3139, %v3139
      %3148 = vrot.lane.b32.xlu0 %v3139, 125
      %v3149 = vpop.permute.xlu0 %3148
      %3150 = vrot.lane.b32.xlu0 %v3147, 125
      %v3151 = vpop.permute.xlu0 %3150
      %3152 = vrot.lane.b32.xlu0 %v3146, 125
      %v3153 = vpop.permute.xlu0 %3152
      %vm3154 = vcmask 1022976
      %v3155 = vsel %vm3154, %v3149, %v3151
      %v3156 = vsel %vm3154, %v3151, %v3153
      %v3159 = vmul.f32 %v3129, %v3155
      %v3160 = vmul.f32 %v3129, %v3156
      %vm3161 = vmand %vm858, %vm2164
      %vm3162 = vmand %vm3161, %vm2166
      %v3163 = vsel %vm3162, 1, 0
      %v3164 = vlaneseq
      %v3165 = vshrl.u32 %v3164, 7
      %v3166 = vsub.s32 0, %v3165
      %v3167 = vrot.slane %v3163, %v3166
      %v3168 = vlaneseq
      %v3169 = vshrl.u32 %v3168, 7
      %v3170 = vsub.s32 1, %v3169
      %v3171 = vrot.slane %v3163, %v3170
      %vm3172 = vcmp.eq.s32.totalorder %v3167, 1
      %vm3173 = vcmp.eq.s32.totalorder %v3171, 1
      %v3174 = vsel %vm3172, %v3159, 0.0
      %v3175 = vsel %vm3173, %v3160, 0.0
      %v3176 = vadd.f32 %v3124, %v3174
      %v3177 = vadd.f32 %v3125, %v3175
      %v3178 = vld [vmem:[#allocation3 + $0x2] sm:$0x3f]
      %3179 = vset.pattern.permute.xlu0 28
      %3180 = vperm.xlu0 %3179, %v1806
      %v3181 = vpop.permute.xlu0 %3180
      %v3184 = vcombine.high %v3178, %v3178
      %v3186 = vunpack.c.l.s4 1983009808
      %v3187 = vunpack.c.0.s8 %v3186
      %v3188 = vlaneseq
      %v3189 = vshrl.u32 %v3188, 7
      %v3190 = vsub.s32 %v3187, %v3189
      %v3191 = vrot.slane %v3178, %v3190
      %v3193 = vunpack.c.l.s4 1983009808
      %v3194 = vunpack.c.0.s8 %v3193
      %v3195 = vlaneseq
      %v3196 = vshrl.u32 %v3195, 7
      %v3197 = vsub.s32 %v3194, %v3196
      %v3198 = vrot.slane %v3184, %v3197
      %v3199 = vcombine.high %v3191, %v3191
      %3200 = vrot.lane.b32.xlu0 %v3191, 115
      %v3201 = vpop.permute.xlu0 %3200
      %3202 = vrot.lane.b32.xlu0 %v3199, 115
      %v3203 = vpop.permute.xlu0 %3202
      %3204 = vrot.lane.b32.xlu0 %v3198, 115
      %v3205 = vpop.permute.xlu0 %3204
      %vm3206 = vcmask 941056
      %v3207 = vsel %vm3206, %v3201, %v3203
      %v3208 = vsel %vm3206, %v3203, %v3205
      %v3211 = vmul.f32 %v3181, %v3207
      %v3212 = vmul.f32 %v3181, %v3208
      %vm3213 = vmand %vm1194, %vm1846
      %vm3214 = vmand %vm3213, %vm1848
      %v3215 = vsel %vm3214, 1, 0
      %v3216 = vlaneseq
      %v3217 = vshrl.u32 %v3216, 7
      %v3218 = vsub.s32 0, %v3217
      %v3219 = vrot.slane %v3215, %v3218
      %v3220 = vlaneseq
      %v3221 = vshrl.u32 %v3220, 7
      %v3222 = vsub.s32 1, %v3221
      %v3223 = vrot.slane %v3215, %v3222
      %vm3224 = vcmp.eq.s32.totalorder %v3219, 1
      %vm3225 = vcmp.eq.s32.totalorder %v3223, 1
      %v3226 = vsel %vm3224, %v3211, 0.0
      %v3227 = vsel %vm3225, %v3212, 0.0
      %v3228 = vadd.f32 %v3176, %v3226
      %v3229 = vadd.f32 %v3177, %v3227
      %v3230 = vld [vmem:[#allocation3 + $0x2] sm:$0x3f]
      %3231 = vset.pattern.permute.xlu0 29
      %3232 = vperm.xlu0 %3231, %v1806
      %v3233 = vpop.permute.xlu0 %3232
      %v3236 = vcombine.high %v3230, %v3230
      %v3238 = vunpack.c.l.s4 1983009808
      %v3239 = vunpack.c.0.s8 %v3238
      %v3240 = vlaneseq
      %v3241 = vshrl.u32 %v3240, 7
      %v3242 = vsub.s32 %v3239, %v3241
      %v3243 = vrot.slane %v3230, %v3242
      %v3245 = vunpack.c.l.s4 1983009808
      %v3246 = vunpack.c.0.s8 %v3245
      %v3247 = vlaneseq
      %v3248 = vshrl.u32 %v3247, 7
      %v3249 = vsub.s32 %v3246, %v3248
      %v3250 = vrot.slane %v3236, %v3249
      %v3251 = vcombine.high %v3243, %v3243
      %3252 = vrot.lane.b32.xlu0 %v3243, 114
      %v3253 = vpop.permute.xlu0 %3252
      %3254 = vrot.lane.b32.xlu0 %v3251, 114
      %v3255 = vpop.permute.xlu0 %3254
      %3256 = vrot.lane.b32.xlu0 %v3250, 114
      %v3257 = vpop.permute.xlu0 %3256
      %vm3258 = vcmask 932864
      %v3259 = vsel %vm3258, %v3253, %v3255
      %v3260 = vsel %vm3258, %v3255, %v3257
      %v3263 = vmul.f32 %v3233, %v3259
      %v3264 = vmul.f32 %v3233, %v3260
      %vm3265 = vmand %vm1194, %vm1900
      %vm3266 = vmand %vm3265, %vm1902
      %v3267 = vsel %vm3266, 1, 0
      %v3268 = vlaneseq
      %v3269 = vshrl.u32 %v3268, 7
      %v3270 = vsub.s32 0, %v3269
      %v3271 = vrot.slane %v3267, %v3270
      %v3272 = vlaneseq
      %v3273 = vshrl.u32 %v3272, 7
      %v3274 = vsub.s32 1, %v3273
      %v3275 = vrot.slane %v3267, %v3274
      %vm3276 = vcmp.eq.s32.totalorder %v3271, 1
      %vm3277 = vcmp.eq.s32.totalorder %v3275, 1
      %v3278 = vsel %vm3276, %v3263, 0.0
      %v3279 = vsel %vm3277, %v3264, 0.0
      %v3280 = vadd.f32 %v3228, %v3278
      %v3281 = vadd.f32 %v3229, %v3279
      %v3282 = vld [vmem:[#allocation3 + $0x2] sm:$0x3f]
      %3283 = vset.pattern.permute.xlu0 30
      %3284 = vperm.xlu0 %3283, %v1806
      %v3285 = vpop.permute.xlu0 %3284
      %v3288 = vcombine.high %v3282, %v3282
      %v3290 = vunpack.c.l.s4 1983009808
      %v3291 = vunpack.c.0.s8 %v3290
      %v3292 = vlaneseq
      %v3293 = vshrl.u32 %v3292, 7
      %v3294 = vsub.s32 %v3291, %v3293
      %v3295 = vrot.slane %v3282, %v3294
      %v3297 = vunpack.c.l.s4 1983009808
      %v3298 = vunpack.c.0.s8 %v3297
      %v3299 = vlaneseq
      %v3300 = vshrl.u32 %v3299, 7
      %v3301 = vsub.s32 %v3298, %v3300
      %v3302 = vrot.slane %v3288, %v3301
      %v3303 = vcombine.high %v3295, %v3295
      %3304 = vrot.lane.b32.xlu0 %v3295, 113
      %v3305 = vpop.permute.xlu0 %3304
      %3306 = vrot.lane.b32.xlu0 %v3303, 113
      %v3307 = vpop.permute.xlu0 %3306
      %3308 = vrot.lane.b32.xlu0 %v3302, 113
      %v3309 = vpop.permute.xlu0 %3308
      %v3310 = vsel %vm1219, %v3305, %v3307
      %v3311 = vsel %vm1219, %v3307, %v3309
      %v3314 = vmul.f32 %v3285, %v3310
      %v3315 = vmul.f32 %v3285, %v3311
      %v3316 = vsel %vm1208, %v3314, 0.0
      %v3317 = vsel %vm1209, %v3315, 0.0
      %v3318 = vadd.f32 %v3280, %v3316
      %v3319 = vadd.f32 %v3281, %v3317
      %v3320 = vld [vmem:[#allocation3 + $0x2] sm:$0x3f]
      %3321 = vset.pattern.permute.xlu0 31
      %3322 = vperm.xlu0 %3321, %v1806
      %v3323 = vpop.permute.xlu0 %3322
      %v3326 = vcombine.high %v3320, %v3320
      %v3328 = vunpack.c.l.s4 1983009808
      %v3329 = vunpack.c.0.s8 %v3328
      %v3330 = vlaneseq
      %v3331 = vshrl.u32 %v3330, 7
      %v3332 = vsub.s32 %v3329, %v3331
      %v3333 = vrot.slane %v3320, %v3332
      %v3335 = vunpack.c.l.s4 1983009808
      %v3336 = vunpack.c.0.s8 %v3335
      %v3337 = vlaneseq
      %v3338 = vshrl.u32 %v3337, 7
      %v3339 = vsub.s32 %v3336, %v3338
      %v3340 = vrot.slane %v3326, %v3339
      %v3341 = vcombine.high %v3333, %v3333
      %3342 = vrot.lane.b32.xlu0 %v3333, 112
      %v3343 = vpop.permute.xlu0 %3342
      %3344 = vrot.lane.b32.xlu0 %v3341, 112
      %v3345 = vpop.permute.xlu0 %3344
      %3346 = vrot.lane.b32.xlu0 %v3340, 112
      %v3347 = vpop.permute.xlu0 %3346
      %v3348 = vsel %vm1334, %v3343, %v3345
      %v3349 = vsel %vm1334, %v3345, %v3347
      %v3352 = vmul.f32 %v3323, %v3348
      %v3353 = vmul.f32 %v3323, %v3349
      %v3354 = vsel %vm1323, %v3352, 0.0
      %v3355 = vsel %vm1324, %v3353, 0.0
      %v3356 = vadd.f32 %v3318, %v3354
      %v3357 = vadd.f32 %v3319, %v3355
      %v3358 = vld [vmem:[#allocation3 + $0x2] sm:$0x3f]
      %3359 = vset.pattern.permute.xlu0 32
      %3360 = vperm.xlu0 %3359, %v1806
      %v3361 = vpop.permute.xlu0 %3360
      %v3364 = vcombine.high %v3358, %v3358
      %v3366 = vunpack.c.l.s4 1983009808
      %v3367 = vunpack.c.0.s8 %v3366
      %v3368 = vlaneseq
      %v3369 = vshrl.u32 %v3368, 7
      %v3370 = vsub.s32 %v3367, %v3369
      %v3371 = vrot.slane %v3358, %v3370
      %v3373 = vunpack.c.l.s4 1983009808
      %v3374 = vunpack.c.0.s8 %v3373
      %v3375 = vlaneseq
      %v3376 = vshrl.u32 %v3375, 7
      %v3377 = vsub.s32 %v3374, %v3376
      %v3378 = vrot.slane %v3364, %v3377
      %v3379 = vcombine.high %v3371, %v3371
      %3380 = vrot.lane.b32.xlu0 %v3371, 111
      %v3381 = vpop.permute.xlu0 %3380
      %3382 = vrot.lane.b32.xlu0 %v3379, 111
      %v3383 = vpop.permute.xlu0 %3382
      %3384 = vrot.lane.b32.xlu0 %v3378, 111
      %v3385 = vpop.permute.xlu0 %3384
      %v3386 = vsel %vm1449, %v3381, %v3383
      %v3387 = vsel %vm1449, %v3383, %v3385
      %v3390 = vmul.f32 %v3361, %v3386
      %v3391 = vmul.f32 %v3361, %v3387
      %v3392 = vsel %vm1438, %v3390, 0.0
      %v3393 = vsel %vm1439, %v3391, 0.0
      %v3394 = vadd.f32 %v3356, %v3392
      %v3395 = vadd.f32 %v3357, %v3393
      %v3396 = vld [vmem:[#allocation3 + $0x2] sm:$0x3f]
      %3397 = vset.pattern.permute.xlu0 33
      %3398 = vperm.xlu0 %3397, %v1806
      %v3399 = vpop.permute.xlu0 %3398
      %v3402 = vcombine.high %v3396, %v3396
      %v3404 = vunpack.c.l.s4 1983009808
      %v3405 = vunpack.c.0.s8 %v3404
      %v3406 = vlaneseq
      %v3407 = vshrl.u32 %v3406, 7
      %v3408 = vsub.s32 %v3405, %v3407
      %v3409 = vrot.slane %v3396, %v3408
      %v3411 = vunpack.c.l.s4 1983009808
      %v3412 = vunpack.c.0.s8 %v3411
      %v3413 = vlaneseq
      %v3414 = vshrl.u32 %v3413, 7
      %v3415 = vsub.s32 %v3412, %v3414
      %v3416 = vrot.slane %v3402, %v3415
      %v3417 = vcombine.high %v3409, %v3409
      %3418 = vrot.lane.b32.xlu0 %v3409, 110
      %v3419 = vpop.permute.xlu0 %3418
      %3420 = vrot.lane.b32.xlu0 %v3417, 110
      %v3421 = vpop.permute.xlu0 %3420
      %3422 = vrot.lane.b32.xlu0 %v3416, 110
      %v3423 = vpop.permute.xlu0 %3422
      %vm3424 = vcmask 900096
      %v3425 = vsel %vm3424, %v3419, %v3421
      %v3426 = vsel %vm3424, %v3421, %v3423
      %v3429 = vmul.f32 %v3399, %v3425
      %v3430 = vmul.f32 %v3399, %v3426
      %vm3431 = vmand %vm1194, %vm2110
      %vm3432 = vmand %vm3431, %vm2112
      %v3433 = vsel %vm3432, 1, 0
      %v3434 = vlaneseq
      %v3435 = vshrl.u32 %v3434, 7
      %v3436 = vsub.s32 0, %v3435
      %v3437 = vrot.slane %v3433, %v3436
      %v3438 = vlaneseq
      %v3439 = vshrl.u32 %v3438, 7
      %v3440 = vsub.s32 1, %v3439
      %v3441 = vrot.slane %v3433, %v3440
      %vm3442 = vcmp.eq.s32.totalorder %v3437, 1
      %vm3443 = vcmp.eq.s32.totalorder %v3441, 1
      %v3444 = vsel %vm3442, %v3429, 0.0
      %v3445 = vsel %vm3443, %v3430, 0.0
      %v3446 = vadd.f32 %v3394, %v3444
      %v3447 = vadd.f32 %v3395, %v3445
      %v3448 = vld [vmem:[#allocation3 + $0x2] sm:$0x3f]
      %3449 = vset.pattern.permute.xlu0 34
      %3450 = vperm.xlu0 %3449, %v1806
      %v3451 = vpop.permute.xlu0 %3450
      %v3454 = vcombine.high %v3448, %v3448
      %v3456 = vunpack.c.l.s4 1983009808
      %v3457 = vunpack.c.0.s8 %v3456
      %v3458 = vlaneseq
      %v3459 = vshrl.u32 %v3458, 7
      %v3460 = vsub.s32 %v3457, %v3459
      %v3461 = vrot.slane %v3448, %v3460
      %v3463 = vunpack.c.l.s4 1983009808
      %v3464 = vunpack.c.0.s8 %v3463
      %v3465 = vlaneseq
      %v3466 = vshrl.u32 %v3465, 7
      %v3467 = vsub.s32 %v3464, %v3466
      %v3468 = vrot.slane %v3454, %v3467
      %v3469 = vcombine.high %v3461, %v3461
      %3470 = vrot.lane.b32.xlu0 %v3461, 109
      %v3471 = vpop.permute.xlu0 %3470
      %3472 = vrot.lane.b32.xlu0 %v3469, 109
      %v3473 = vpop.permute.xlu0 %3472
      %3474 = vrot.lane.b32.xlu0 %v3468, 109
      %v3475 = vpop.permute.xlu0 %3474
      %vm3476 = vcmask 891904
      %v3477 = vsel %vm3476, %v3471, %v3473
      %v3478 = vsel %vm3476, %v3473, %v3475
      %v3481 = vmul.f32 %v3451, %v3477
      %v3482 = vmul.f32 %v3451, %v3478
      %vm3483 = vmand %vm1194, %vm2164
      %vm3484 = vmand %vm3483, %vm2166
      %v3485 = vsel %vm3484, 1, 0
      %v3486 = vlaneseq
      %v3487 = vshrl.u32 %v3486, 7
      %v3488 = vsub.s32 0, %v3487
      %v3489 = vrot.slane %v3485, %v3488
      %v3490 = vlaneseq
      %v3491 = vshrl.u32 %v3490, 7
      %v3492 = vsub.s32 1, %v3491
      %v3493 = vrot.slane %v3485, %v3492
      %vm3494 = vcmp.eq.s32.totalorder %v3489, 1
      %vm3495 = vcmp.eq.s32.totalorder %v3493, 1
      %v3496 = vsel %vm3494, %v3481, 0.0
      %v3497 = vsel %vm3495, %v3482, 0.0
      %v3498 = vadd.f32 %v3446, %v3496
      %v3499 = vadd.f32 %v3447, %v3497
      %v3500 = vld [vmem:[#allocation3 + $0x2] sm:$0x3f]
      %3501 = vset.pattern.permute.xlu0 35
      %3502 = vperm.xlu0 %3501, %v1806
      %v3503 = vpop.permute.xlu0 %3502
      %v3506 = vcombine.high %v3500, %v3500
      %v3508 = vunpack.c.l.s4 1983009808
      %v3509 = vunpack.c.0.s8 %v3508
      %v3510 = vlaneseq
      %v3511 = vshrl.u32 %v3510, 7
      %v3512 = vsub.s32 %v3509, %v3511
      %v3513 = vrot.slane %v3500, %v3512
      %v3515 = vunpack.c.l.s4 1983009808
      %v3516 = vunpack.c.0.s8 %v3515
      %v3517 = vlaneseq
      %v3518 = vshrl.u32 %v3517, 7
      %v3519 = vsub.s32 %v3516, %v3518
      %v3520 = vrot.slane %v3506, %v3519
      %v3521 = vcombine.high %v3513, %v3513
      %3522 = vrot.lane.b32.xlu0 %v3513, 99
      %v3523 = vpop.permute.xlu0 %3522
      %3524 = vrot.lane.b32.xlu0 %v3521, 99
      %v3525 = vpop.permute.xlu0 %3524
      %3526 = vrot.lane.b32.xlu0 %v3520, 99
      %v3527 = vpop.permute.xlu0 %3526
      %vm3528 = vcmask 809984
      %v3529 = vsel %vm3528, %v3523, %v3525
      %v3530 = vsel %vm3528, %v3525, %v3527
      %v3533 = vmul.f32 %v3503, %v3529
      %v3534 = vmul.f32 %v3503, %v3530
      %vm3535 = vcmp.ge.s32.totalorder %v418, 4294967294
      %vm3536 = vcmp.lt.s32.totalorder %v418, 14
      %vm3537 = vmand %vm3535, %vm3536
      %vm3538 = vmand %vm3537, %vm1846
      %vm3539 = vmand %vm3538, %vm1848
      %v3540 = vsel %vm3539, 1, 0
      %v3541 = vlaneseq
      %v3542 = vshrl.u32 %v3541, 7
      %v3543 = vsub.s32 0, %v3542
      %v3544 = vrot.slane %v3540, %v3543
      %v3545 = vlaneseq
      %v3546 = vshrl.u32 %v3545, 7
      %v3547 = vsub.s32 1, %v3546
      %v3548 = vrot.slane %v3540, %v3547
      %vm3549 = vcmp.eq.s32.totalorder %v3544, 1
      %vm3550 = vcmp.eq.s32.totalorder %v3548, 1
      %v3551 = vsel %vm3549, %v3533, 0.0
      %v3552 = vsel %vm3550, %v3534, 0.0
      %v3553 = vadd.f32 %v3498, %v3551
      %v3554 = vadd.f32 %v3499, %v3552
      %v3555 = vld [vmem:[#allocation3 + $0x2] sm:$0x3f]
      %3556 = vset.pattern.permute.xlu0 36
      %3557 = vperm.xlu0 %3556, %v1806
      %v3558 = vpop.permute.xlu0 %3557
      %v3561 = vcombine.high %v3555, %v3555
      %v3563 = vunpack.c.l.s4 1983009808
      %v3564 = vunpack.c.0.s8 %v3563
      %v3565 = vlaneseq
      %v3566 = vshrl.u32 %v3565, 7
      %v3567 = vsub.s32 %v3564, %v3566
      %v3568 = vrot.slane %v3555, %v3567
      %v3570 = vunpack.c.l.s4 1983009808
      %v3571 = vunpack.c.0.s8 %v3570
      %v3572 = vlaneseq
      %v3573 = vshrl.u32 %v3572, 7
      %v3574 = vsub.s32 %v3571, %v3573
      %v3575 = vrot.slane %v3561, %v3574
      %v3576 = vcombine.high %v3568, %v3568
      %3577 = vrot.lane.b32.xlu0 %v3568, 98
      %v3578 = vpop.permute.xlu0 %3577
      %3579 = vrot.lane.b32.xlu0 %v3576, 98
      %v3580 = vpop.permute.xlu0 %3579
      %3581 = vrot.lane.b32.xlu0 %v3575, 98
      %v3582 = vpop.permute.xlu0 %3581
      %vm3583 = vcmask 801792
      %v3584 = vsel %vm3583, %v3578, %v3580
      %v3585 = vsel %vm3583, %v3580, %v3582
      %v3588 = vmul.f32 %v3558, %v3584
      %v3589 = vmul.f32 %v3558, %v3585
      %vm3590 = vmand %vm3537, %vm1900
      %vm3591 = vmand %vm3590, %vm1902
      %v3592 = vsel %vm3591, 1, 0
      %v3593 = vlaneseq
      %v3594 = vshrl.u32 %v3593, 7
      %v3595 = vsub.s32 0, %v3594
      %v3596 = vrot.slane %v3592, %v3595
      %v3597 = vlaneseq
      %v3598 = vshrl.u32 %v3597, 7
      %v3599 = vsub.s32 1, %v3598
      %v3600 = vrot.slane %v3592, %v3599
      %vm3601 = vcmp.eq.s32.totalorder %v3596, 1
      %vm3602 = vcmp.eq.s32.totalorder %v3600, 1
      %v3603 = vsel %vm3601, %v3588, 0.0
      %v3604 = vsel %vm3602, %v3589, 0.0
      %v3605 = vadd.f32 %v3553, %v3603
      %v3606 = vadd.f32 %v3554, %v3604
      %v3607 = vld [vmem:[#allocation3 + $0x2] sm:$0x3f]
      %3608 = vset.pattern.permute.xlu0 37
      %3609 = vperm.xlu0 %3608, %v1806
      %v3610 = vpop.permute.xlu0 %3609
      %v3613 = vcombine.high %v3607, %v3607
      %v3615 = vunpack.c.l.s4 1983009808
      %v3616 = vunpack.c.0.s8 %v3615
      %v3617 = vlaneseq
      %v3618 = vshrl.u32 %v3617, 7
      %v3619 = vsub.s32 %v3616, %v3618
      %v3620 = vrot.slane %v3607, %v3619
      %v3622 = vunpack.c.l.s4 1983009808
      %v3623 = vunpack.c.0.s8 %v3622
      %v3624 = vlaneseq
      %v3625 = vshrl.u32 %v3624, 7
      %v3626 = vsub.s32 %v3623, %v3625
      %v3627 = vrot.slane %v3613, %v3626
      %v3628 = vcombine.high %v3620, %v3620
      %3629 = vrot.lane.b32.xlu0 %v3620, 97
      %v3630 = vpop.permute.xlu0 %3629
      %3631 = vrot.lane.b32.xlu0 %v3628, 97
      %v3632 = vpop.permute.xlu0 %3631
      %3633 = vrot.lane.b32.xlu0 %v3627, 97
      %v3634 = vpop.permute.xlu0 %3633
      %vm3635 = vcmask 793600
      %v3636 = vsel %vm3635, %v3630, %v3632
      %v3637 = vsel %vm3635, %v3632, %v3634
      %v3640 = vmul.f32 %v3610, %v3636
      %v3641 = vmul.f32 %v3610, %v3637
      %vm3642 = vmand %vm3537, %vm514
      %vm3643 = vmand %vm3642, %vm516
      %v3644 = vsel %vm3643, 1, 0
      %v3645 = vlaneseq
      %v3646 = vshrl.u32 %v3645, 7
      %v3647 = vsub.s32 0, %v3646
      %v3648 = vrot.slane %v3644, %v3647
      %v3649 = vlaneseq
      %v3650 = vshrl.u32 %v3649, 7
      %v3651 = vsub.s32 1, %v3650
      %v3652 = vrot.slane %v3644, %v3651
      %vm3653 = vcmp.eq.s32.totalorder %v3648, 1
      %vm3654 = vcmp.eq.s32.totalorder %v3652, 1
      %v3655 = vsel %vm3653, %v3640, 0.0
      %v3656 = vsel %vm3654, %v3641, 0.0
      %v3657 = vadd.f32 %v3605, %v3655
      %v3658 = vadd.f32 %v3606, %v3656
      %v3659 = vld [vmem:[#allocation3 + $0x2] sm:$0x3f]
      %3660 = vset.pattern.permute.xlu0 38
      %3661 = vperm.xlu0 %3660, %v1806
      %v3662 = vpop.permute.xlu0 %3661
      %v3665 = vcombine.high %v3659, %v3659
      %v3667 = vunpack.c.l.s4 1983009808
      %v3668 = vunpack.c.0.s8 %v3667
      %v3669 = vlaneseq
      %v3670 = vshrl.u32 %v3669, 7
      %v3671 = vsub.s32 %v3668, %v3670
      %v3672 = vrot.slane %v3659, %v3671
      %v3674 = vunpack.c.l.s4 1983009808
      %v3675 = vunpack.c.0.s8 %v3674
      %v3676 = vlaneseq
      %v3677 = vshrl.u32 %v3676, 7
      %v3678 = vsub.s32 %v3675, %v3677
      %v3679 = vrot.slane %v3665, %v3678
      %v3680 = vcombine.high %v3672, %v3672
      %3681 = vrot.lane.b32.xlu0 %v3672, 96
      %v3682 = vpop.permute.xlu0 %3681
      %3683 = vrot.lane.b32.xlu0 %v3680, 96
      %v3684 = vpop.permute.xlu0 %3683
      %3685 = vrot.lane.b32.xlu0 %v3679, 96
      %v3686 = vpop.permute.xlu0 %3685
      %vm3687 = vcmask 785408
      %v3688 = vsel %vm3687, %v3682, %v3684
      %v3689 = vsel %vm3687, %v3684, %v3686
      %v3692 = vmul.f32 %v3662, %v3688
      %v3693 = vmul.f32 %v3662, %v3689
      %vm3694 = vmand %vm3537, %vm548
      %vm3695 = vmand %vm3694, %vm550
      %v3696 = vsel %vm3695, 1, 0
      %v3697 = vlaneseq
      %v3698 = vshrl.u32 %v3697, 7
      %v3699 = vsub.s32 0, %v3698
      %v3700 = vrot.slane %v3696, %v3699
      %v3701 = vlaneseq
      %v3702 = vshrl.u32 %v3701, 7
      %v3703 = vsub.s32 1, %v3702
      %v3704 = vrot.slane %v3696, %v3703
      %vm3705 = vcmp.eq.s32.totalorder %v3700, 1
      %vm3706 = vcmp.eq.s32.totalorder %v3704, 1
      %v3707 = vsel %vm3705, %v3692, 0.0
      %v3708 = vsel %vm3706, %v3693, 0.0
      %v3709 = vadd.f32 %v3657, %v3707
      %v3710 = vadd.f32 %v3658, %v3708
      %v3711 = vld [vmem:[#allocation3 + $0x2] sm:$0x3f]
      %3712 = vset.pattern.permute.xlu0 39
      %3713 = vperm.xlu0 %3712, %v1806
      %v3714 = vpop.permute.xlu0 %3713
      %v3717 = vcombine.high %v3711, %v3711
      %v3719 = vunpack.c.l.s4 1983009808
      %v3720 = vunpack.c.0.s8 %v3719
      %v3721 = vlaneseq
      %v3722 = vshrl.u32 %v3721, 7
      %v3723 = vsub.s32 %v3720, %v3722
      %v3724 = vrot.slane %v3711, %v3723
      %v3726 = vunpack.c.l.s4 1983009808
      %v3727 = vunpack.c.0.s8 %v3726
      %v3728 = vlaneseq
      %v3729 = vshrl.u32 %v3728, 7
      %v3730 = vsub.s32 %v3727, %v3729
      %v3731 = vrot.slane %v3717, %v3730
      %v3732 = vcombine.high %v3724, %v3724
      %3733 = vrot.lane.b32.xlu0 %v3724, 95
      %v3734 = vpop.permute.xlu0 %3733
      %3735 = vrot.lane.b32.xlu0 %v3732, 95
      %v3736 = vpop.permute.xlu0 %3735
      %3737 = vrot.lane.b32.xlu0 %v3731, 95
      %v3738 = vpop.permute.xlu0 %3737
      %vm3739 = vcmask 777216
      %v3740 = vsel %vm3739, %v3734, %v3736
      %v3741 = vsel %vm3739, %v3736, %v3738
      %v3744 = vmul.f32 %v3714, %v3740
      %v3745 = vmul.f32 %v3714, %v3741
      %vm3746 = vmand %vm3537, %vm739
      %vm3747 = vmand %vm3746, %vm741
      %v3748 = vsel %vm3747, 1, 0
      %v3749 = vlaneseq
      %v3750 = vshrl.u32 %v3749, 7
      %v3751 = vsub.s32 0, %v3750
      %v3752 = vrot.slane %v3748, %v3751
      %v3753 = vlaneseq
      %v3754 = vshrl.u32 %v3753, 7
      %v3755 = vsub.s32 1, %v3754
      %v3756 = vrot.slane %v3748, %v3755
      %vm3757 = vcmp.eq.s32.totalorder %v3752, 1
      %vm3758 = vcmp.eq.s32.totalorder %v3756, 1
      %v3759 = vsel %vm3757, %v3744, 0.0
      %v3760 = vsel %vm3758, %v3745, 0.0
      %v3761 = vadd.f32 %v3709, %v3759
      %v3762 = vadd.f32 %v3710, %v3760
      %v3763 = vld [vmem:[#allocation3 + $0x2] sm:$0x3f]
      %3764 = vset.pattern.permute.xlu0 40
      %3765 = vperm.xlu0 %3764, %v1806
      %v3766 = vpop.permute.xlu0 %3765
      %v3769 = vcombine.high %v3763, %v3763
      %v3771 = vunpack.c.l.s4 1983009808
      %v3772 = vunpack.c.0.s8 %v3771
      %v3773 = vlaneseq
      %v3774 = vshrl.u32 %v3773, 7
      %v3775 = vsub.s32 %v3772, %v3774
      %v3776 = vrot.slane %v3763, %v3775
      %v3778 = vunpack.c.l.s4 1983009808
      %v3779 = vunpack.c.0.s8 %v3778
      %v3780 = vlaneseq
      %v3781 = vshrl.u32 %v3780, 7
      %v3782 = vsub.s32 %v3779, %v3781
      %v3783 = vrot.slane %v3769, %v3782
      %v3784 = vcombine.high %v3776, %v3776
      %3785 = vrot.lane.b32.xlu0 %v3776, 94
      %v3786 = vpop.permute.xlu0 %3785
      %3787 = vrot.lane.b32.xlu0 %v3784, 94
      %v3788 = vpop.permute.xlu0 %3787
      %3789 = vrot.lane.b32.xlu0 %v3783, 94
      %v3790 = vpop.permute.xlu0 %3789
      %vm3791 = vcmask 769024
      %v3792 = vsel %vm3791, %v3786, %v3788
      %v3793 = vsel %vm3791, %v3788, %v3790
      %v3796 = vmul.f32 %v3766, %v3792
      %v3797 = vmul.f32 %v3766, %v3793
      %vm3798 = vmand %vm3537, %vm2110
      %vm3799 = vmand %vm3798, %vm2112
      %v3800 = vsel %vm3799, 1, 0
      %v3801 = vlaneseq
      %v3802 = vshrl.u32 %v3801, 7
      %v3803 = vsub.s32 0, %v3802
      %v3804 = vrot.slane %v3800, %v3803
      %v3805 = vlaneseq
      %v3806 = vshrl.u32 %v3805, 7
      %v3807 = vsub.s32 1, %v3806
      %v3808 = vrot.slane %v3800, %v3807
      %vm3809 = vcmp.eq.s32.totalorder %v3804, 1
      %vm3810 = vcmp.eq.s32.totalorder %v3808, 1
      %v3811 = vsel %vm3809, %v3796, 0.0
      %v3812 = vsel %vm3810, %v3797, 0.0
      %v3813 = vadd.f32 %v3761, %v3811
      %v3814 = vadd.f32 %v3762, %v3812
      %v3815 = vld [vmem:[#allocation3 + $0x2] sm:$0x3f]
      %3816 = vset.pattern.permute.xlu0 41
      %3817 = vperm.xlu0 %3816, %v1806
      %v3818 = vpop.permute.xlu0 %3817
      %v3821 = vcombine.high %v3815, %v3815
      %v3823 = vunpack.c.l.s4 1983009808
      %v3824 = vunpack.c.0.s8 %v3823
      %v3825 = vlaneseq
      %v3826 = vshrl.u32 %v3825, 7
      %v3827 = vsub.s32 %v3824, %v3826
      %v3828 = vrot.slane %v3815, %v3827
      %v3830 = vunpack.c.l.s4 1983009808
      %v3831 = vunpack.c.0.s8 %v3830
      %v3832 = vlaneseq
      %v3833 = vshrl.u32 %v3832, 7
      %v3834 = vsub.s32 %v3831, %v3833
      %v3835 = vrot.slane %v3821, %v3834
      %v3836 = vcombine.high %v3828, %v3828
      %3837 = vrot.lane.b32.xlu0 %v3828, 93
      %v3838 = vpop.permute.xlu0 %3837
      %3839 = vrot.lane.b32.xlu0 %v3836, 93
      %v3840 = vpop.permute.xlu0 %3839
      %3841 = vrot.lane.b32.xlu0 %v3835, 93
      %v3842 = vpop.permute.xlu0 %3841
      %vm3843 = vcmask 760832
      %v3844 = vsel %vm3843, %v3838, %v3840
      %v3845 = vsel %vm3843, %v3840, %v3842
      %v3848 = vmul.f32 %v3818, %v3844
      %v3849 = vmul.f32 %v3818, %v3845
      %vm3850 = vmand %vm3537, %vm2164
      %vm3851 = vmand %vm3850, %vm2166
      %v3852 = vsel %vm3851, 1, 0
      %v3853 = vlaneseq
      %v3854 = vshrl.u32 %v3853, 7
      %v3855 = vsub.s32 0, %v3854
      %v3856 = vrot.slane %v3852, %v3855
      %v3857 = vlaneseq
      %v3858 = vshrl.u32 %v3857, 7
      %v3859 = vsub.s32 1, %v3858
      %v3860 = vrot.slane %v3852, %v3859
      %vm3861 = vcmp.eq.s32.totalorder %v3856, 1
      %vm3862 = vcmp.eq.s32.totalorder %v3860, 1
      %v3863 = vsel %vm3861, %v3848, 0.0
      %v3864 = vsel %vm3862, %v3849, 0.0
      %v3865 = vadd.f32 %v3813, %v3863
      %v3866 = vadd.f32 %v3814, %v3864
      %v3867 = vld [vmem:[#allocation3 + $0x2] sm:$0x3f]
      %3868 = vset.pattern.permute.xlu0 42
      %3869 = vperm.xlu0 %3868, %v1806
      %v3870 = vpop.permute.xlu0 %3869
      %v3873 = vcombine.high %v3867, %v3867
      %v3875 = vunpack.c.l.s4 1983009808
      %v3876 = vunpack.c.0.s8 %v3875
      %v3877 = vlaneseq
      %v3878 = vshrl.u32 %v3877, 7
      %v3879 = vsub.s32 %v3876, %v3878
      %v3880 = vrot.slane %v3867, %v3879
      %v3882 = vunpack.c.l.s4 1983009808
      %v3883 = vunpack.c.0.s8 %v3882
      %v3884 = vlaneseq
      %v3885 = vshrl.u32 %v3884, 7
      %v3886 = vsub.s32 %v3883, %v3885
      %v3887 = vrot.slane %v3873, %v3886
      %v3888 = vcombine.high %v3880, %v3880
      %3889 = vrot.lane.b32.xlu0 %v3880, 83
      %v3890 = vpop.permute.xlu0 %3889
      %3891 = vrot.lane.b32.xlu0 %v3888, 83
      %v3892 = vpop.permute.xlu0 %3891
      %3893 = vrot.lane.b32.xlu0 %v3887, 83
      %v3894 = vpop.permute.xlu0 %3893
      %vm3895 = vcmask 678912
      %v3896 = vsel %vm3895, %v3890, %v3892
      %v3897 = vsel %vm3895, %v3892, %v3894
      %v3900 = vmul.f32 %v3870, %v3896
      %v3901 = vmul.f32 %v3870, %v3897
      %vm3902 = vcmp.ge.s32.totalorder %v418, 4294967293
      %vm3903 = vcmp.lt.s32.totalorder %v418, 13
      %vm3904 = vmand %vm3902, %vm3903
      %vm3905 = vmand %vm3904, %vm1846
      %vm3906 = vmand %vm3905, %vm1848
      %v3907 = vsel %vm3906, 1, 0
      %v3908 = vlaneseq
      %v3909 = vshrl.u32 %v3908, 7
      %v3910 = vsub.s32 0, %v3909
      %v3911 = vrot.slane %v3907, %v3910
      %v3912 = vlaneseq
      %v3913 = vshrl.u32 %v3912, 7
      %v3914 = vsub.s32 1, %v3913
      %v3915 = vrot.slane %v3907, %v3914
      %vm3916 = vcmp.eq.s32.totalorder %v3911, 1
      %vm3917 = vcmp.eq.s32.totalorder %v3915, 1
      %v3918 = vsel %vm3916, %v3900, 0.0
      %v3919 = vsel %vm3917, %v3901, 0.0
      %v3920 = vadd.f32 %v3865, %v3918
      %v3921 = vadd.f32 %v3866, %v3919
      %v3922 = vld [vmem:[#allocation3 + $0x2] sm:$0x3f]
      %3923 = vset.pattern.permute.xlu0 43
      %3924 = vperm.xlu0 %3923, %v1806
      %v3925 = vpop.permute.xlu0 %3924
      %v3928 = vcombine.high %v3922, %v3922
      %v3930 = vunpack.c.l.s4 1983009808
      %v3931 = vunpack.c.0.s8 %v3930
      %v3932 = vlaneseq
      %v3933 = vshrl.u32 %v3932, 7
      %v3934 = vsub.s32 %v3931, %v3933
      %v3935 = vrot.slane %v3922, %v3934
      %v3937 = vunpack.c.l.s4 1983009808
      %v3938 = vunpack.c.0.s8 %v3937
      %v3939 = vlaneseq
      %v3940 = vshrl.u32 %v3939, 7
      %v3941 = vsub.s32 %v3938, %v3940
      %v3942 = vrot.slane %v3928, %v3941
      %v3943 = vcombine.high %v3935, %v3935
      %3944 = vrot.lane.b32.xlu0 %v3935, 82
      %v3945 = vpop.permute.xlu0 %3944
      %3946 = vrot.lane.b32.xlu0 %v3943, 82
      %v3947 = vpop.permute.xlu0 %3946
      %3948 = vrot.lane.b32.xlu0 %v3942, 82
      %v3949 = vpop.permute.xlu0 %3948
      %vm3950 = vcmask 670720
      %v3951 = vsel %vm3950, %v3945, %v3947
      %v3952 = vsel %vm3950, %v3947, %v3949
      %v3955 = vmul.f32 %v3925, %v3951
      %v3956 = vmul.f32 %v3925, %v3952
      %vm3957 = vmand %vm3904, %vm1900
      %vm3958 = vmand %vm3957, %vm1902
      %v3959 = vsel %vm3958, 1, 0
      %v3960 = vlaneseq
      %v3961 = vshrl.u32 %v3960, 7
      %v3962 = vsub.s32 0, %v3961
      %v3963 = vrot.slane %v3959, %v3962
      %v3964 = vlaneseq
      %v3965 = vshrl.u32 %v3964, 7
      %v3966 = vsub.s32 1, %v3965
      %v3967 = vrot.slane %v3959, %v3966
      %vm3968 = vcmp.eq.s32.totalorder %v3963, 1
      %vm3969 = vcmp.eq.s32.totalorder %v3967, 1
      %v3970 = vsel %vm3968, %v3955, 0.0
      %v3971 = vsel %vm3969, %v3956, 0.0
      %v3972 = vadd.f32 %v3920, %v3970
      %v3973 = vadd.f32 %v3921, %v3971
      %v3974 = vld [vmem:[#allocation3 + $0x2] sm:$0x3f]
      %3975 = vset.pattern.permute.xlu0 44
      %3976 = vperm.xlu0 %3975, %v1806
      %v3977 = vpop.permute.xlu0 %3976
      %v3980 = vcombine.high %v3974, %v3974
      %v3982 = vunpack.c.l.s4 1983009808
      %v3983 = vunpack.c.0.s8 %v3982
      %v3984 = vlaneseq
      %v3985 = vshrl.u32 %v3984, 7
      %v3986 = vsub.s32 %v3983, %v3985
      %v3987 = vrot.slane %v3974, %v3986
      %v3989 = vunpack.c.l.s4 1983009808
      %v3990 = vunpack.c.0.s8 %v3989
      %v3991 = vlaneseq
      %v3992 = vshrl.u32 %v3991, 7
      %v3993 = vsub.s32 %v3990, %v3992
      %v3994 = vrot.slane %v3980, %v3993
      %v3995 = vcombine.high %v3987, %v3987
      %3996 = vrot.lane.b32.xlu0 %v3987, 81
      %v3997 = vpop.permute.xlu0 %3996
      %3998 = vrot.lane.b32.xlu0 %v3995, 81
      %v3999 = vpop.permute.xlu0 %3998
      %4000 = vrot.lane.b32.xlu0 %v3994, 81
      %v4001 = vpop.permute.xlu0 %4000
      %vm4002 = vcmask 662528
      %v4003 = vsel %vm4002, %v3997, %v3999
      %v4004 = vsel %vm4002, %v3999, %v4001
      %v4007 = vmul.f32 %v3977, %v4003
      %v4008 = vmul.f32 %v3977, %v4004
      %vm4009 = vmand %vm3904, %vm514
      %vm4010 = vmand %vm4009, %vm516
      %v4011 = vsel %vm4010, 1, 0
      %v4012 = vlaneseq
      %v4013 = vshrl.u32 %v4012, 7
      %v4014 = vsub.s32 0, %v4013
      %v4015 = vrot.slane %v4011, %v4014
      %v4016 = vlaneseq
      %v4017 = vshrl.u32 %v4016, 7
      %v4018 = vsub.s32 1, %v4017
      %v4019 = vrot.slane %v4011, %v4018
      %vm4020 = vcmp.eq.s32.totalorder %v4015, 1
      %vm4021 = vcmp.eq.s32.totalorder %v4019, 1
      %v4022 = vsel %vm4020, %v4007, 0.0
      %v4023 = vsel %vm4021, %v4008, 0.0
      %v4024 = vadd.f32 %v3972, %v4022
      %v4025 = vadd.f32 %v3973, %v4023
      %v4026 = vld [vmem:[#allocation3 + $0x2] sm:$0x3f]
      %4027 = vset.pattern.permute.xlu0 45
      %4028 = vperm.xlu0 %4027, %v1806
      %v4029 = vpop.permute.xlu0 %4028
      %v4032 = vcombine.high %v4026, %v4026
      %v4034 = vunpack.c.l.s4 1983009808
      %v4035 = vunpack.c.0.s8 %v4034
      %v4036 = vlaneseq
      %v4037 = vshrl.u32 %v4036, 7
      %v4038 = vsub.s32 %v4035, %v4037
      %v4039 = vrot.slane %v4026, %v4038
      %v4041 = vunpack.c.l.s4 1983009808
      %v4042 = vunpack.c.0.s8 %v4041
      %v4043 = vlaneseq
      %v4044 = vshrl.u32 %v4043, 7
      %v4045 = vsub.s32 %v4042, %v4044
      %v4046 = vrot.slane %v4032, %v4045
      %v4047 = vcombine.high %v4039, %v4039
      %4048 = vrot.lane.b32.xlu0 %v4039, 80
      %v4049 = vpop.permute.xlu0 %4048
      %4050 = vrot.lane.b32.xlu0 %v4047, 80
      %v4051 = vpop.permute.xlu0 %4050
      %4052 = vrot.lane.b32.xlu0 %v4046, 80
      %v4053 = vpop.permute.xlu0 %4052
      %vm4054 = vcmask 654336
      %v4055 = vsel %vm4054, %v4049, %v4051
      %v4056 = vsel %vm4054, %v4051, %v4053
      %v4059 = vmul.f32 %v4029, %v4055
      %v4060 = vmul.f32 %v4029, %v4056
      %vm4061 = vmand %vm3904, %vm548
      %vm4062 = vmand %vm4061, %vm550
      %v4063 = vsel %vm4062, 1, 0
      %v4064 = vlaneseq
      %v4065 = vshrl.u32 %v4064, 7
      %v4066 = vsub.s32 0, %v4065
      %v4067 = vrot.slane %v4063, %v4066
      %v4068 = vlaneseq
      %v4069 = vshrl.u32 %v4068, 7
      %v4070 = vsub.s32 1, %v4069
      %v4071 = vrot.slane %v4063, %v4070
      %vm4072 = vcmp.eq.s32.totalorder %v4067, 1
      %vm4073 = vcmp.eq.s32.totalorder %v4071, 1
      %v4074 = vsel %vm4072, %v4059, 0.0
      %v4075 = vsel %vm4073, %v4060, 0.0
      %v4076 = vadd.f32 %v4024, %v4074
      %v4077 = vadd.f32 %v4025, %v4075
      %v4078 = vld [vmem:[#allocation3 + $0x2] sm:$0x3f]
      %4079 = vset.pattern.permute.xlu0 46
      %4080 = vperm.xlu0 %4079, %v1806
      %v4081 = vpop.permute.xlu0 %4080
      %v4084 = vcombine.high %v4078, %v4078
      %v4086 = vunpack.c.l.s4 1983009808
      %v4087 = vunpack.c.0.s8 %v4086
      %v4088 = vlaneseq
      %v4089 = vshrl.u32 %v4088, 7
      %v4090 = vsub.s32 %v4087, %v4089
      %v4091 = vrot.slane %v4078, %v4090
      %v4093 = vunpack.c.l.s4 1983009808
      %v4094 = vunpack.c.0.s8 %v4093
      %v4095 = vlaneseq
      %v4096 = vshrl.u32 %v4095, 7
      %v4097 = vsub.s32 %v4094, %v4096
      %v4098 = vrot.slane %v4084, %v4097
      %v4099 = vcombine.high %v4091, %v4091
      %4100 = vrot.lane.b32.xlu0 %v4091, 79
      %v4101 = vpop.permute.xlu0 %4100
      %4102 = vrot.lane.b32.xlu0 %v4099, 79
      %v4103 = vpop.permute.xlu0 %4102
      %4104 = vrot.lane.b32.xlu0 %v4098, 79
      %v4105 = vpop.permute.xlu0 %4104
      %vm4106 = vcmask 646144
      %v4107 = vsel %vm4106, %v4101, %v4103
      %v4108 = vsel %vm4106, %v4103, %v4105
      %v4111 = vmul.f32 %v4081, %v4107
      %v4112 = vmul.f32 %v4081, %v4108
      %vm4113 = vmand %vm3904, %vm739
      %vm4114 = vmand %vm4113, %vm741
      %v4115 = vsel %vm4114, 1, 0
      %v4116 = vlaneseq
      %v4117 = vshrl.u32 %v4116, 7
      %v4118 = vsub.s32 0, %v4117
      %v4119 = vrot.slane %v4115, %v4118
      %v4120 = vlaneseq
      %v4121 = vshrl.u32 %v4120, 7
      %v4122 = vsub.s32 1, %v4121
      %v4123 = vrot.slane %v4115, %v4122
      %vm4124 = vcmp.eq.s32.totalorder %v4119, 1
      %vm4125 = vcmp.eq.s32.totalorder %v4123, 1
      %v4126 = vsel %vm4124, %v4111, 0.0
      %v4127 = vsel %vm4125, %v4112, 0.0
      %v4128 = vadd.f32 %v4076, %v4126
      %v4129 = vadd.f32 %v4077, %v4127
      %v4130 = vld [vmem:[#allocation3 + $0x2] sm:$0x3f]
      %4131 = vset.pattern.permute.xlu0 47
      %4132 = vperm.xlu0 %4131, %v1806
      %v4133 = vpop.permute.xlu0 %4132
      %v4136 = vcombine.high %v4130, %v4130
      %v4138 = vunpack.c.l.s4 1983009808
      %v4139 = vunpack.c.0.s8 %v4138
      %v4140 = vlaneseq
      %v4141 = vshrl.u32 %v4140, 7
      %v4142 = vsub.s32 %v4139, %v4141
      %v4143 = vrot.slane %v4130, %v4142
      %v4145 = vunpack.c.l.s4 1983009808
      %v4146 = vunpack.c.0.s8 %v4145
      %v4147 = vlaneseq
      %v4148 = vshrl.u32 %v4147, 7
      %v4149 = vsub.s32 %v4146, %v4148
      %v4150 = vrot.slane %v4136, %v4149
      %v4151 = vcombine.high %v4143, %v4143
      %4152 = vrot.lane.b32.xlu0 %v4143, 78
      %v4153 = vpop.permute.xlu0 %4152
      %4154 = vrot.lane.b32.xlu0 %v4151, 78
      %v4155 = vpop.permute.xlu0 %4154
      %4156 = vrot.lane.b32.xlu0 %v4150, 78
      %v4157 = vpop.permute.xlu0 %4156
      %vm4158 = vcmask 637952
      %v4159 = vsel %vm4158, %v4153, %v4155
      %v4160 = vsel %vm4158, %v4155, %v4157
      %v4163 = vmul.f32 %v4133, %v4159
      %v4164 = vmul.f32 %v4133, %v4160
      %vm4165 = vmand %vm3904, %vm2110
      %vm4166 = vmand %vm4165, %vm2112
      %v4167 = vsel %vm4166, 1, 0
      %v4168 = vlaneseq
      %v4169 = vshrl.u32 %v4168, 7
      %v4170 = vsub.s32 0, %v4169
      %v4171 = vrot.slane %v4167, %v4170
      %v4172 = vlaneseq
      %v4173 = vshrl.u32 %v4172, 7
      %v4174 = vsub.s32 1, %v4173
      %v4175 = vrot.slane %v4167, %v4174
      %vm4176 = vcmp.eq.s32.totalorder %v4171, 1
      %vm4177 = vcmp.eq.s32.totalorder %v4175, 1
      %v4178 = vsel %vm4176, %v4163, 0.0
      %v4179 = vsel %vm4177, %v4164, 0.0
      %v4180 = vadd.f32 %v4128, %v4178
      %v4181 = vadd.f32 %v4129, %v4179
      %v4182 = vld [vmem:[#allocation3 + $0x2] sm:$0x3f]
      %4183 = vset.pattern.permute.xlu0 48
      %4184 = vperm.xlu0 %4183, %v1806
      %v4185 = vpop.permute.xlu0 %4184
      %v4188 = vcombine.high %v4182, %v4182
      %v4190 = vunpack.c.l.s4 1983009808
      %v4191 = vunpack.c.0.s8 %v4190
      %v4192 = vlaneseq
      %v4193 = vshrl.u32 %v4192, 7
      %v4194 = vsub.s32 %v4191, %v4193
      %v4195 = vrot.slane %v4182, %v4194
      %v4197 = vunpack.c.l.s4 1983009808
      %v4198 = vunpack.c.0.s8 %v4197
      %v4199 = vlaneseq
      %v4200 = vshrl.u32 %v4199, 7
      %v4201 = vsub.s32 %v4198, %v4200
      %v4202 = vrot.slane %v4188, %v4201
      %v4203 = vcombine.high %v4195, %v4195
      %4204 = vrot.lane.b32.xlu0 %v4195, 77
      %v4205 = vpop.permute.xlu0 %4204
      %4206 = vrot.lane.b32.xlu0 %v4203, 77
      %v4207 = vpop.permute.xlu0 %4206
      %4208 = vrot.lane.b32.xlu0 %v4202, 77
      %v4209 = vpop.permute.xlu0 %4208
      %vm4210 = vcmask 629760
      %v4211 = vsel %vm4210, %v4205, %v4207
      %v4212 = vsel %vm4210, %v4207, %v4209
      %v4215 = vmul.f32 %v4185, %v4211
      %v4216 = vmul.f32 %v4185, %v4212
      %vm4217 = vmand %vm3904, %vm2164
      %vm4218 = vmand %vm4217, %vm2166
      %v4219 = vsel %vm4218, 1, 0
      %v4220 = vlaneseq
      %v4221 = vshrl.u32 %v4220, 7
      %v4222 = vsub.s32 0, %v4221
      %v4223 = vrot.slane %v4219, %v4222
      %v4224 = vlaneseq
      %v4225 = vshrl.u32 %v4224, 7
      %v4226 = vsub.s32 1, %v4225
      %v4227 = vrot.slane %v4219, %v4226
      %vm4228 = vcmp.eq.s32.totalorder %v4223, 1
      %vm4229 = vcmp.eq.s32.totalorder %v4227, 1
      %v4230 = vsel %vm4228, %v4215, 0.0
      %v4231 = vsel %vm4229, %v4216, 0.0
      %v4232 = vadd.f32 %v4180, %v4230
      %v4233 = vadd.f32 %v4181, %v4231
      %v4236 = vrot.slane %v4232, 1
      %v4237 = vrot.slane %v4233, 1
      %v4240 = vadd.f32 %v4232, %v4236
      %v4241 = vadd.f32 %v4233, %v4237
      %v4242 = vsub.f32 0.0, %v4240
      %v4243 = vsub.f32 0.0, %v4241
      %v4244 = vmul.f32 %v4242, 1.442695
      %v4245 = vpow.pop %v4244
      %v4246 = vmul.f32 %v4243, 1.442695
      %v4247 = vpow.pop %v4246
      %v4248 = vadd.f32 %v4245, 1.0
      %v4249 = vadd.f32 %v4247, 1.0
      %v4250 = vrcp.pop %v4248
      %v4251 = vmul.f32 1.0, %v4250
      %v4252 = vrcp.pop %v4249
      %v4253 = vmul.f32 1.0, %v4252
      %v4254 = vlaneseq
      %v4255 = vshrl.u32 %v4254, 7
      %v4256 = vsub.s32 0, %v4255
      %v4257 = vrot.slane %v4251, %v4256
      %v4258 = vlaneseq
      %v4259 = vshrl.u32 %v4258, 7
      %v4260 = vsub.s32 0, %v4259
      %v4261 = vrot.slane %v4253, %v4260
      %v4262 = vmul.f32 %v1727, %v4257
      %v4263 = vmul.f32 %v1728, %v4261
      %v4264 = vmul.f32 %v1729, %v4257
      %v4265 = vmul.f32 %v1730, %v4261
      %v4266 = vadd.f32 %v4262, %v414
      %v4267 = vadd.f32 %v4263, %v415
      %v4268 = vadd.f32 %v4264, %v416
      %v4269 = vadd.f32 %v4265, %v417
      %v4270 = vmax.f32 %v4266, 0.0
      %v4271 = vmax.f32 %v4267, 0.0
      %v4272 = vmax.f32 %v4268, 0.0
      %v4273 = vmax.f32 %v4269, 0.0
      %4274 = vst [vmem:[%s413] sm:$0xff] %v4270
      %4275 = vst [vmem:[%s413 + $0x8] sm:$0xff] %v4271
      %4276 = vst [vmem:[%s413 + $0x10] sm:$0xff] %v4272
      %4277 = vst [vmem:[%s413 + $0x18] sm:$0xff] %v4273
      %p4278 = scmp.lt.s32.totalorder %s23, 1
      %s4279 = scalar_select %p4278, %s23, 1
      %s4280 = smul.addr %s4279, 4
      %s4281 = smul.addr %s4280, 8
      %s4282 = scalar_lea.vmem %s12, %s4281
      // Predicated region
      $region69: #{bottleneck_forward.1} parent=67 // pred_check
        %p4283 = pneg %p298
      $region70: #{bottleneck_forward.1} parent=67 // pred_check_branch
        %4285 = sbr.rel (%p4283) target = $region72
      $region71: #{bottleneck_forward.1} parent=67 // pred_region
        _
      $region72: #{bottleneck_forward.1} parent=67 // pred_fallthru
        _
    $region68: #{bottleneck_forward.1} parent=5 // pred_fallthru
      _
    %p4286 = scmp.le.s32.totalorder 2, %s18
    // Predicated region
    $region73: #{bottleneck_forward.1} parent=5 // pred_check
      %p4287 = pneg %p4286
    $region74: #{bottleneck_forward.1} parent=5 // pred_check_branch
      %4289 = sbr.rel (%p4287) target = $region76
    $region75: #{bottleneck_forward.1} parent=5 // pred_region
      %s4290 = ssub.s32 %s18, 2
      // Predicated region
      $region77: #{bottleneck_forward.1} parent=75 // pred_check
        %p4291 = pneg %p304
      $region78: #{bottleneck_forward.1} parent=75 // pred_check_branch
        %4293 = sbr.rel (%p4291) target = $region80
      $region79: #{bottleneck_forward.1} parent=75 // pred_region
        %p4294 = scmp.lt.s32.totalorder %s24, 1
        %s4295 = scalar_select %p4294, %s24, 1
        %s4296 = smul.addr %s4295, 4
        %s4297 = smul.addr %s4296, 8
        %s4298 = scalar_lea.vmem %s12, %s4297
      $region80: #{bottleneck_forward.1} parent=75 // pred_fallthru
        _
    $region76: #{bottleneck_forward.1} parent=5 // pred_fallthru
      _
  $region6: #{bottleneck_forward.1} parent=0 // loop_footer
    %s22 = sadd.s32 1, %s18
  $region7: #{bottleneck_forward.1} parent=0 // loop_footer_branch
    %17 = sbr.rel target = $region3
  $region8: #{bottleneck_forward.1} parent=0 // loop_exit
    _

</llo_original>
